<compile_context>
chip_gen: v5e
topology: v5e:2x2
jax: 0.10.0
libtpu: 0.0.40
codegen_flags: <defaults>
</compile_context>

<pallas_src>
import functools

import numpy as np

import jax
import jax.numpy as jnp
from jax.experimental import pallas as pl
from jax.experimental.pallas import tpu as pltpu

LEAKY_SLOPE = 0.1


# ----------------------------------------------------------------------------
# Fused kernel: whole NetD forward in one grid step.
# ----------------------------------------------------------------------------
def _netd_kernel(x_ref, z_ref, rs1_ref, m1_ref, rs2_ref, m2_ref,
                 zw_ref, zb_ref, fb_ref, cw_ref, cb_ref,
                 fwx_hbm, fwz_hbm,
                 out_ref, feat_ref,
                 xd_ref, fwx_vmem, fwz_vmem, dma_sem,
                 *, batch, cin, ndf, size, slope):
    f32, bf16 = jnp.float32, jnp.bfloat16
    B, C, OC, S = batch, cin, ndf, size
    H1, H2 = S // 2, S // 4                     # 16, 8

    # Kick off the 2 MiB feature-weight DMA immediately; it is only consumed
    # after the conv + z-branch work, so the transfer hides under compute.
    cp_wx = pltpu.make_async_copy(fwx_hbm, fwx_vmem, dma_sem.at[0])
    cp_wz = pltpu.make_async_copy(fwz_hbm, fwz_vmem, dma_sem.at[1])
    cp_wx.start()
    cp_wz.start()

    # ---- stage the image into the (n*S + h, c*S + w) canvas ----------------
    # (in-kernel replacement for im2col: all patch gathering + zero padding is
    # folded into the constant rs1/m1/rs2/m2 matrices built at init)
    for n in range(B):
        for c in range(C):
            xd_ref[n * S:(n + 1) * S, c * S:(c + 1) * S] = (
                x_ref[n * C + c].astype(bf16))
    xd = xd_ref[...]

    # ---- conv1 (k4,s2,p1, bias=False) + LeakyReLU ---------------------------
    # rows of the result = (n*16 + oh), lanes = (oc*16 + ow)  -> 128 lanes.
    acc1 = jnp.zeros((B * H1, OC * H1), f32)
    for kh in range(4):
        rows = jnp.dot(rs1_ref[kh], xd, preferred_element_type=f32).astype(bf16)
        acc1 = acc1 + jnp.dot(rows, m1_ref[kh], preferred_element_type=f32)
    h1 = jnp.where(acc1 >= 0.0, acc1, slope * acc1).astype(bf16)

    # ---- conv2: operates directly on h1's (n*16+oh, oc*16+ow) tile ----------
    # rows of the result = (oh2*B + n), lanes = (oc2*8 + ow2).
    acc2 = jnp.zeros((H2 * B, OC * H2), f32)
    for kh in range(4):
        rows = jnp.dot(rs2_ref[kh], h1, preferred_element_type=f32).astype(bf16)
        acc2 = acc2 + jnp.dot(rows, m2_ref[kh], preferred_element_type=f32)
    h2 = jnp.where(acc2 >= 0.0, acc2, slope * acc2).astype(bf16)

    # ---- z branch: Linear(z_dim -> 512) + LeakyReLU (dropout = identity) ----
    zo = jnp.dot(z_ref[...].astype(bf16), zw_ref[...], preferred_element_type=f32)
    zo = zo + zb_ref[...]
    zo = jnp.where(zo >= 0.0, zo, slope * zo).astype(bf16)

    # Feature weights must be resident now (DMA overlapped the work above).
    cp_wx.wait()
    cp_wz.wait()

    # ---- feature Linear(1024 -> 1024): implicit concat([x_out, z_out]) ------
    feat = jnp.dot(zo, fwz_vmem[...], preferred_element_type=f32) + fb_ref[...]
    blk = OC * H2                               # 64 features per oh2 row-pair
    for oh in range(H2):                        # x_out is never materialized
        feat = feat + jnp.dot(h2[B * oh:B * (oh + 1), :],
                              fwx_vmem[blk * oh:blk * (oh + 1), :],
                              preferred_element_type=f32)
    feat = jnp.where(feat >= 0.0, feat, slope * feat)
    feat_ref[...] = feat

    # ---- classifier Linear(1024 -> 1): multiply + row-sum (VPU/XLU) ---------
    out_ref[...] = jnp.sum(feat * cw_ref[...], axis=1, keepdims=True) + cb_ref[...]


# ----------------------------------------------------------------------------
# Parameter init: draws raw float32 weights, then precomputes the constant
# row-select / banded-weight matrices and the pre-permuted linear weights.
# ----------------------------------------------------------------------------
def init_netd_params(key, *, input_size, z_dim, channel, ndf, batch):
    assert input_size % 16 == 0
    cndf, tisize = ndf * 2, 16
    while tisize != input_size:
        cndf //= 2
        tisize *= 2
    assert input_size == 32 and cndf == ndf, "example config: 32px, no pyramid layers"
    B, C, OC, S = batch, channel, cndf, input_size
    H1, H2 = S // 2, S // 4                       # 16, 8
    x_feat = OC * 8 * 8                           # 512

    keys = jax.random.split(key, 8)
    sd = 0.02
    conv1_w = jax.random.normal(keys[0], (OC, C, 4, 4), jnp.float32) * sd
    conv2_w = jax.random.normal(keys[1], (OC, OC, 4, 4), jnp.float32) * sd
    z_w = jax.random.normal(keys[2], (512, z_dim), jnp.float32) * sd   # torch (out,in)
    z_b = jax.random.normal(keys[3], (512,), jnp.float32) * sd
    f_w = jax.random.normal(keys[4], (1024, 512 + x_feat), jnp.float32) * sd
    f_b = jax.random.normal(keys[5], (1024,), jnp.float32) * sd
    c_w = jax.random.normal(keys[6], (1, 1024), jnp.float32) * sd
    c_b = jax.random.normal(keys[7], (1,), jnp.float32) * sd
    raw = dict(conv1_w=conv1_w, conv2_w=conv2_w, z_w=z_w, z_b=z_b,
               f_w=f_w, f_b=f_b, c_w=c_w, c_b=c_b)

    # Conv(k4,s2,p1) as  sum_kh RS_kh @ X @ M_kh.  Out-of-range taps (zero
    # padding) are simply dropped from the constants.
    w1 = np.asarray(conv1_w)
    w2 = np.asarray(conv2_w)

    rs1 = np.zeros((4, B * H1, B * S), np.float32)       # (4, 32, 64)
    m1 = np.zeros((4, C * S, OC * H1), np.float32)       # (4, 96, 128)
    for kh in range(4):
        for n in range(B):
            for oh in range(H1):
                r = 2 * oh + kh - 1
                if 0 <= r < S:
                    rs1[kh, n * H1 + oh, n * S + r] = 1.0
        for c in range(C):
            for kw in range(4):
                for ow in range(H1):
                    col = 2 * ow + kw - 1
                    if 0 <= col < S:
                        m1[kh, c * S + col, np.arange(OC) * H1 + ow] += w1[:, c, kh, kw]

    rs2 = np.zeros((4, H2 * B, B * H1), np.float32)      # (4, 16, 32)
    m2 = np.zeros((4, OC * H1, OC * H2), np.float32)     # (4, 128, 64)
    for kh in range(4):
        for n in range(B):
            for oh in range(H2):
                r = 2 * oh + kh - 1
                if 0 <= r < H1:
                    rs2[kh, oh * B + n, n * H1 + r] = 1.0
        for c in range(OC):
            for kw in range(4):
                for ow in range(H2):
                    col = 2 * ow + kw - 1
                    if 0 <= col < H1:
                        m2[kh, c * H1 + col, np.arange(OC) * H2 + ow] += w2[:, c, kh, kw]

    # Feature weight: split into x-part / z-part (torch cat order is
    # [x_out, z_out]); permute x-part rows from (oc, oh, ow) to (oh, oc, ow)
    # so they match the conv2 output tile's oh-major row pairing.
    f_wx = f_w[:, :x_feat].T                                            # (512, 1024)
    f_wx = f_wx.reshape(OC, H2, H2, 1024).transpose(1, 0, 2, 3).reshape(x_feat, 1024)
    f_wz = f_w[:, x_feat:].T                                            # (512, 1024)

    params = {
        "rs1": jnp.asarray(rs1, jnp.bfloat16),
        "m1": jnp.asarray(m1, jnp.bfloat16),
        "rs2": jnp.asarray(rs2, jnp.bfloat16),
        "m2": jnp.asarray(m2, jnp.bfloat16),
        "z_w": z_w.T.astype(jnp.bfloat16),        # (z_dim, 512)
        "z_b": z_b.reshape(1, 512),               # f32
        "f_wx": f_wx.astype(jnp.bfloat16),        # (512, 1024)
        "f_wz": f_wz.astype(jnp.bfloat16),        # (512, 1024)
        "f_b": f_b.reshape(1, 1024),              # f32
        "c_w": c_w,                               # (1, 1024) f32
        "c_b": c_b.reshape(1, 1),                 # f32
    }
    return params, raw


# ----------------------------------------------------------------------------
# Forward pass: one fused pallas_call.
# ----------------------------------------------------------------------------
def netd_forward(params, x, z, *, channel, ndf):
    B, C, S = x.shape[0], channel, x.shape[-1]
    zd = z.shape[-1]
    x2 = x.reshape(B * C, S, S)                   # layout-only, no compute

    kern = functools.partial(_netd_kernel, batch=B, cin=C, ndf=ndf, size=S,
                             slope=LEAKY_SLOPE)

    def fm2(i):
        return (0, 0)

    def fm3(i):
        return (0, 0, 0)

    out, feat = pl.pallas_call(
        kern,
        out_shape=(jax.ShapeDtypeStruct((B, 1), jnp.float32),
                   jax.ShapeDtypeStruct((B, 1024), jnp.float32)),
        grid=(1,),
        in_specs=[
            pl.BlockSpec((B * C, S, S), fm3),                 # image
            pl.BlockSpec((B, zd), fm2),                       # latent
            pl.BlockSpec(params["rs1"].shape, fm3),
            pl.BlockSpec(params["m1"].shape, fm3),
            pl.BlockSpec(params["rs2"].shape, fm3),
            pl.BlockSpec(params["m2"].shape, fm3),
            pl.BlockSpec(params["z_w"].shape, fm2),
            pl.BlockSpec(params["z_b"].shape, fm2),
            pl.BlockSpec(params["f_b"].shape, fm2),
            pl.BlockSpec(params["c_w"].shape, fm2),
            pl.BlockSpec(params["c_b"].shape, fm2),
            pl.BlockSpec(memory_space=pl.ANY),                # f_wx (manual DMA)
            pl.BlockSpec(memory_space=pl.ANY),                # f_wz (manual DMA)
        ],
        out_specs=(pl.BlockSpec((B, 1), fm2),
                   pl.BlockSpec((B, 1024), fm2)),
        scratch_shapes=[
            pltpu.VMEM((B * S, C * S), jnp.bfloat16),         # image canvas
            pltpu.VMEM(params["f_wx"].shape, jnp.bfloat16),   # prefetched f_wx
            pltpu.VMEM(params["f_wz"].shape, jnp.bfloat16),   # prefetched f_wz
            pltpu.SemaphoreType.DMA((2,)),
        ],
        compiler_params=pltpu.CompilerParams(
            dimension_semantics=("arbitrary",),
            vmem_limit_bytes=32 * 1024 * 1024),
        cost_estimate=pl.CostEstimate(flops=11_000_000, transcendentals=0,
                                      bytes_accessed=2_400_000),
    )(x2, z, params["rs1"], params["m1"], params["rs2"], params["m2"],
      params["z_w"], params["z_b"], params["f_b"], params["c_w"], params["c_b"],
      params["f_wx"], params["f_wz"])
    return out, feat


# ----------------------------------------------------------------------------
# Pure-JAX (f32) reference of the same forward, for a numerical sanity check.
# ----------------------------------------------------------------------------
def netd_reference(raw, x, z, slope=LEAKY_SLOPE):
    def lrelu(v):
        return jnp.where(v >= 0, v, slope * v)

    dn = ("NCHW", "OIHW", "NCHW")
    h = jax.lax.conv_general_dilated(x, raw["conv1_w"], (2, 2), ((1, 1), (1, 1)),
                                     dimension_numbers=dn)
    h = lrelu(h)
    h = jax.lax.conv_general_dilated(h, raw["conv2_w"], (2, 2), ((1, 1), (1, 1)),
                                     dimension_numbers=dn)
    h = lrelu(h)
    x_out = h.reshape(h.shape[0], -1)
    z_out = lrelu(z @ raw["z_w"].T + raw["z_b"])
    y = jnp.concatenate([x_out, z_out], axis=1)
    feat = lrelu(y @ raw["f_w"].T + raw["f_b"])
    out = feat @ raw["c_w"].T + raw["c_b"]
    return out, feat


if __name__ == "__main__":
    CONFIG = dict(input_size=32, z_dim=16, channel=3, ndf=8)
    batch = 2

    key = jax.random.PRNGKey(0)
    kp, kx, kz = jax.random.split(key, 3)
    params, raw = init_netd_params(kp, batch=batch, **CONFIG)

    x = jax.random.normal(
        kx, (batch, CONFIG["channel"], CONFIG["input_size"], CONFIG["input_size"]),
        jnp.float32)
    z = jax.random.normal(kz, (batch, CONFIG["z_dim"]), jnp.float32)

    fwd = jax.jit(functools.partial(netd_forward, channel=CONFIG["channel"],
                                    ndf=CONFIG["ndf"]))
    out, feature = fwd(params, x, z)
    jax.block_until_ready((out, feature))

    assert out.shape == (batch, 1), out.shape
    assert feature.shape == (batch, 1024), feature.shape

    # Numerical sanity check vs. the pure-JAX/XLA f32 reference (the kernel
    # uses bf16 MXU inputs, hence the loose tolerance).
    out_expect, feat_expect = netd_reference(raw, x, z)
    assert bool(jnp.allclose(out, out_expect, rtol=0.1, atol=0.01)), "classifier mismatch"
    assert bool(jnp.allclose(feature, feat_expect, rtol=0.1, atol=0.01)), "feature mismatch"

    print("KERNEL_OK")
</pallas_src>

<mosaic_0001>
module attributes {stable_mosaic.version = 11 : i64} {
  func.func @_netd_kernel(%arg0: i32, %arg1: memref<6x32x32xf32, #tpu.memory_space<vmem>>, %arg2: memref<2x16xf32, #tpu.memory_space<vmem>>, %arg3: memref<4x32x64xbf16, #tpu.memory_space<vmem>>, %arg4: memref<4x96x128xbf16, #tpu.memory_space<vmem>>, %arg5: memref<4x16x32xbf16, #tpu.memory_space<vmem>>, %arg6: memref<4x128x64xbf16, #tpu.memory_space<vmem>>, %arg7: memref<16x512xbf16, #tpu.memory_space<vmem>>, %arg8: memref<1x512xf32, #tpu.memory_space<vmem>>, %arg9: memref<1x1024xf32, #tpu.memory_space<vmem>>, %arg10: memref<1x1024xf32, #tpu.memory_space<vmem>>, %arg11: memref<1x1xf32, #tpu.memory_space<vmem>>, %arg12: memref<512x1024xbf16, #tpu.memory_space<any>>, %arg13: memref<512x1024xbf16, #tpu.memory_space<any>>, %arg14: memref<2x1xf32, #tpu.memory_space<vmem>>, %arg15: memref<2x1024xf32, #tpu.memory_space<vmem>>, %arg16: memref<64x96xbf16, #tpu.memory_space<vmem>>, %arg17: memref<512x1024xbf16, #tpu.memory_space<vmem>>, %arg18: memref<512x1024xbf16, #tpu.memory_space<vmem>>, %arg19: memref<2x!tpu.dma_semaphore, #tpu.memory_space<semaphore_mem>>) attributes {dimension_semantics = [#tpu.dimension_semantics<arbitrary>], iteration_bounds = array<i64: 1>, scalar_prefetch = 0 : i64, scratch_operands = 4 : i64, tpu.core_type = #tpu.core_type<tc>, window_params = [{pipeline_mode = #tpu.pipeline_mode<synchronous>, transform_indices = @transform_0, window_bounds = array<i64: 6, 32, 32>}, {pipeline_mode = #tpu.pipeline_mode<synchronous>, transform_indices = @transform_1, window_bounds = array<i64: 2, 16>}, {pipeline_mode = #tpu.pipeline_mode<synchronous>, transform_indices = @transform_2, window_bounds = array<i64: 4, 32, 64>}, {pipeline_mode = #tpu.pipeline_mode<synchronous>, transform_indices = @transform_3, window_bounds = array<i64: 4, 96, 128>}, {pipeline_mode = #tpu.pipeline_mode<synchronous>, transform_indices = @transform_4, window_bounds = array<i64: 4, 16, 32>}, {pipeline_mode = #tpu.pipeline_mode<synchronous>, transform_indices = @transform_5, window_bounds = array<i64: 4, 128, 64>}, {pipeline_mode = #tpu.pipeline_mode<synchronous>, transform_indices = @transform_6, window_bounds = array<i64: 16, 512>}, {pipeline_mode = #tpu.pipeline_mode<synchronous>, transform_indices = @transform_7, window_bounds = array<i64: 1, 512>}, {pipeline_mode = #tpu.pipeline_mode<synchronous>, transform_indices = @transform_8, window_bounds = array<i64: 1, 1024>}, {pipeline_mode = #tpu.pipeline_mode<synchronous>, transform_indices = @transform_9, window_bounds = array<i64: 1, 1024>}, {pipeline_mode = #tpu.pipeline_mode<synchronous>, transform_indices = @transform_10, window_bounds = array<i64: 1, 1>}, {}, {}, {pipeline_mode = #tpu.pipeline_mode<synchronous>, transform_indices = @transform_13, window_bounds = array<i64: 2, 1>}, {pipeline_mode = #tpu.pipeline_mode<synchronous>, transform_indices = @transform_14, window_bounds = array<i64: 2, 1024>}]} {
    %c0_i32 = arith.constant 0 : i32
    %0 = tpu.memref_slice %arg19[%c0_i32] : memref<2x!tpu.dma_semaphore, #tpu.memory_space<semaphore_mem>> -> memref<1x!tpu.dma_semaphore, #tpu.memory_space<semaphore_mem>>
    %1 = tpu.memref_squeeze %0 : memref<1x!tpu.dma_semaphore, #tpu.memory_space<semaphore_mem>> -> memref<!tpu.dma_semaphore, #tpu.memory_space<semaphore_mem>>
    tpu.enqueue_dma source(%arg12 : memref<512x1024xbf16, #tpu.memory_space<any>>) target(%arg17 : memref<512x1024xbf16, #tpu.memory_space<vmem>>) target_semaphore(%1 : memref<!tpu.dma_semaphore, #tpu.memory_space<semaphore_mem>>)
    %c1_i32 = arith.constant 1 : i32
    %2 = tpu.memref_slice %arg19[%c1_i32] : memref<2x!tpu.dma_semaphore, #tpu.memory_space<semaphore_mem>> -> memref<1x!tpu.dma_semaphore, #tpu.memory_space<semaphore_mem>>
    %3 = tpu.memref_squeeze %2 : memref<1x!tpu.dma_semaphore, #tpu.memory_space<semaphore_mem>> -> memref<!tpu.dma_semaphore, #tpu.memory_space<semaphore_mem>>
    tpu.enqueue_dma source(%arg13 : memref<512x1024xbf16, #tpu.memory_space<any>>) target(%arg18 : memref<512x1024xbf16, #tpu.memory_space<vmem>>) target_semaphore(%3 : memref<!tpu.dma_semaphore, #tpu.memory_space<semaphore_mem>>)
    %c0 = arith.constant 0 : index
    %c0_0 = arith.constant 0 : index
    %c0_1 = arith.constant 0 : index
    %4 = vector.load %arg1[%c0, %c0_0, %c0_1] : memref<6x32x32xf32, #tpu.memory_space<vmem>>, vector<1x32x32xf32>
    %5 = vector.shape_cast %4 : vector<1x32x32xf32> to vector<32x32xf32>
    %6 = arith.truncf %5 : vector<32x32xf32> to vector<32x32xbf16>
    %c0_2 = arith.constant 0 : index
    %c0_3 = arith.constant 0 : index
    %7 = vector.load %arg16[%c0_2, %c0_3] : memref<64x96xbf16, #tpu.memory_space<vmem>>, vector<32x32xbf16>
    tpu.vector_store %arg16[%c0_2, %c0_3], %6 {strides = array<i32>} : memref<64x96xbf16, #tpu.memory_space<vmem>>, vector<32x32xbf16>,
    %c1 = arith.constant 1 : index
    %c0_4 = arith.constant 0 : index
    %c0_5 = arith.constant 0 : index
    %8 = vector.load %arg1[%c1, %c0_4, %c0_5] : memref<6x32x32xf32, #tpu.memory_space<vmem>>, vector<1x32x32xf32>
    %9 = vector.shape_cast %8 : vector<1x32x32xf32> to vector<32x32xf32>
    %10 = arith.truncf %9 : vector<32x32xf32> to vector<32x32xbf16>
    %c0_6 = arith.constant 0 : index
    %c32 = arith.constant 32 : index
    %11 = vector.load %arg16[%c0_6, %c32] : memref<64x96xbf16, #tpu.memory_space<vmem>>, vector<32x32xbf16>
    tpu.vector_store %arg16[%c0_6, %c32], %10 {strides = array<i32>} : memref<64x96xbf16, #tpu.memory_space<vmem>>, vector<32x32xbf16>,
    %c2 = arith.constant 2 : index
    %c0_7 = arith.constant 0 : index
    %c0_8 = arith.constant 0 : index
    %12 = vector.load %arg1[%c2, %c0_7, %c0_8] : memref<6x32x32xf32, #tpu.memory_space<vmem>>, vector<1x32x32xf32>
    %13 = vector.shape_cast %12 : vector<1x32x32xf32> to vector<32x32xf32>
    %14 = arith.truncf %13 : vector<32x32xf32> to vector<32x32xbf16>
    %c0_9 = arith.constant 0 : index
    %c64 = arith.constant 64 : index
    %15 = vector.load %arg16[%c0_9, %c64] : memref<64x96xbf16, #tpu.memory_space<vmem>>, vector<32x32xbf16>
    tpu.vector_store %arg16[%c0_9, %c64], %14 {strides = array<i32>} : memref<64x96xbf16, #tpu.memory_space<vmem>>, vector<32x32xbf16>,
    %c3 = arith.constant 3 : index
    %c0_10 = arith.constant 0 : index
    %c0_11 = arith.constant 0 : index
    %16 = vector.load %arg1[%c3, %c0_10, %c0_11] : memref<6x32x32xf32, #tpu.memory_space<vmem>>, vector<1x32x32xf32>
    %17 = vector.shape_cast %16 : vector<1x32x32xf32> to vector<32x32xf32>
    %18 = arith.truncf %17 : vector<32x32xf32> to vector<32x32xbf16>
    %c32_12 = arith.constant 32 : index
    %c0_13 = arith.constant 0 : index
    %19 = vector.load %arg16[%c32_12, %c0_13] : memref<64x96xbf16, #tpu.memory_space<vmem>>, vector<32x32xbf16>
    tpu.vector_store %arg16[%c32_12, %c0_13], %18 {strides = array<i32>} : memref<64x96xbf16, #tpu.memory_space<vmem>>, vector<32x32xbf16>,
    %c4 = arith.constant 4 : index
    %c0_14 = arith.constant 0 : index
    %c0_15 = arith.constant 0 : index
    %20 = vector.load %arg1[%c4, %c0_14, %c0_15] : memref<6x32x32xf32, #tpu.memory_space<vmem>>, vector<1x32x32xf32>
    %21 = vector.shape_cast %20 : vector<1x32x32xf32> to vector<32x32xf32>
    %22 = arith.truncf %21 : vector<32x32xf32> to vector<32x32xbf16>
    %c32_16 = arith.constant 32 : index
    %c32_17 = arith.constant 32 : index
    %23 = vector.load %arg16[%c32_16, %c32_17] : memref<64x96xbf16, #tpu.memory_space<vmem>>, vector<32x32xbf16>
    tpu.vector_store %arg16[%c32_16, %c32_17], %22 {strides = array<i32>} : memref<64x96xbf16, #tpu.memory_space<vmem>>, vector<32x32xbf16>,
    %c5 = arith.constant 5 : index
    %c0_18 = arith.constant 0 : index
    %c0_19 = arith.constant 0 : index
    %24 = vector.load %arg1[%c5, %c0_18, %c0_19] : memref<6x32x32xf32, #tpu.memory_space<vmem>>, vector<1x32x32xf32>
    %25 = vector.shape_cast %24 : vector<1x32x32xf32> to vector<32x32xf32>
    %26 = arith.truncf %25 : vector<32x32xf32> to vector<32x32xbf16>
    %c32_20 = arith.constant 32 : index
    %c64_21 = arith.constant 64 : index
    %27 = vector.load %arg16[%c32_20, %c64_21] : memref<64x96xbf16, #tpu.memory_space<vmem>>, vector<32x32xbf16>
    tpu.vector_store %arg16[%c32_20, %c64_21], %26 {strides = array<i32>} : memref<64x96xbf16, #tpu.memory_space<vmem>>, vector<32x32xbf16>,
    %c0_22 = arith.constant 0 : index
    %c0_23 = arith.constant 0 : index
    %28 = vector.load %arg16[%c0_22, %c0_23] : memref<64x96xbf16, #tpu.memory_space<vmem>>, vector<64x96xbf16>
    %cst = arith.constant 0.000000e+00 : f32
    %29 = vector.broadcast %cst : f32 to vector<32x128xf32>
    %c0_24 = arith.constant 0 : index
    %c0_25 = arith.constant 0 : index
    %c0_26 = arith.constant 0 : index
    %30 = vector.load %arg3[%c0_24, %c0_25, %c0_26] : memref<4x32x64xbf16, #tpu.memory_space<vmem>>, vector<1x32x64xbf16>
    %31 = vector.shape_cast %30 : vector<1x32x64xbf16> to vector<32x64xbf16>
    %cst_27 = arith.constant dense<0.000000e+00> : vector<32x96xf32>
    %32 = tpu.matmul %31, %28, %cst_27 {dimension_numbers = #tpu.dot_dimension_numbers<[1], [0], [0], [1], [0, 0, 1, 1], [], []>} : vector<32x64xbf16>, vector<64x96xbf16>, vector<32x96xf32> -> vector<32x96xf32>
    %33 = arith.truncf %32 : vector<32x96xf32> to vector<32x96xbf16>
    %c0_28 = arith.constant 0 : index
    %c0_29 = arith.constant 0 : index
    %c0_30 = arith.constant 0 : index
    %34 = vector.load %arg4[%c0_28, %c0_29, %c0_30] : memref<4x96x128xbf16, #tpu.memory_space<vmem>>, vector<1x96x128xbf16>
    %35 = vector.shape_cast %34 : vector<1x96x128xbf16> to vector<96x128xbf16>
    %cst_31 = arith.constant dense<0.000000e+00> : vector<32x128xf32>
    %36 = tpu.matmul %33, %35, %cst_31 {dimension_numbers = #tpu.dot_dimension_numbers<[1], [0], [0], [1], [0, 0, 1, 1], [], []>} : vector<32x96xbf16>, vector<96x128xbf16>, vector<32x128xf32> -> vector<32x128xf32>
    %37 = arith.addf %29, %36 : vector<32x128xf32>
    %c1_32 = arith.constant 1 : index
    %c0_33 = arith.constant 0 : index
    %c0_34 = arith.constant 0 : index
    %38 = vector.load %arg3[%c1_32, %c0_33, %c0_34] : memref<4x32x64xbf16, #tpu.memory_space<vmem>>, vector<1x32x64xbf16>
    %39 = vector.shape_cast %38 : vector<1x32x64xbf16> to vector<32x64xbf16>
    %cst_35 = arith.constant dense<0.000000e+00> : vector<32x96xf32>
    %40 = tpu.matmul %39, %28, %cst_35 {dimension_numbers = #tpu.dot_dimension_numbers<[1], [0], [0], [1], [0, 0, 1, 1], [], []>} : vector<32x64xbf16>, vector<64x96xbf16>, vector<32x96xf32> -> vector<32x96xf32>
    %41 = arith.truncf %40 : vector<32x96xf32> to vector<32x96xbf16>
    %c1_36 = arith.constant 1 : index
    %c0_37 = arith.constant 0 : index
    %c0_38 = arith.constant 0 : index
    %42 = vector.load %arg4[%c1_36, %c0_37, %c0_38] : memref<4x96x128xbf16, #tpu.memory_space<vmem>>, vector<1x96x128xbf16>
    %43 = vector.shape_cast %42 : vector<1x96x128xbf16> to vector<96x128xbf16>
    %cst_39 = arith.constant dense<0.000000e+00> : vector<32x128xf32>
    %44 = tpu.matmul %41, %43, %cst_39 {dimension_numbers = #tpu.dot_dimension_numbers<[1], [0], [0], [1], [0, 0, 1, 1], [], []>} : vector<32x96xbf16>, vector<96x128xbf16>, vector<32x128xf32> -> vector<32x128xf32>
    %45 = arith.addf %37, %44 : vector<32x128xf32>
    %c2_40 = arith.constant 2 : index
    %c0_41 = arith.constant 0 : index
    %c0_42 = arith.constant 0 : index
    %46 = vector.load %arg3[%c2_40, %c0_41, %c0_42] : memref<4x32x64xbf16, #tpu.memory_space<vmem>>, vector<1x32x64xbf16>
    %47 = vector.shape_cast %46 : vector<1x32x64xbf16> to vector<32x64xbf16>
    %cst_43 = arith.constant dense<0.000000e+00> : vector<32x96xf32>
    %48 = tpu.matmul %47, %28, %cst_43 {dimension_numbers = #tpu.dot_dimension_numbers<[1], [0], [0], [1], [0, 0, 1, 1], [], []>} : vector<32x64xbf16>, vector<64x96xbf16>, vector<32x96xf32> -> vector<32x96xf32>
    %49 = arith.truncf %48 : vector<32x96xf32> to vector<32x96xbf16>
    %c2_44 = arith.constant 2 : index
    %c0_45 = arith.constant 0 : index
    %c0_46 = arith.constant 0 : index
    %50 = vector.load %arg4[%c2_44, %c0_45, %c0_46] : memref<4x96x128xbf16, #tpu.memory_space<vmem>>, vector<1x96x128xbf16>
    %51 = vector.shape_cast %50 : vector<1x96x128xbf16> to vector<96x128xbf16>
    %cst_47 = arith.constant dense<0.000000e+00> : vector<32x128xf32>
    %52 = tpu.matmul %49, %51, %cst_47 {dimension_numbers = #tpu.dot_dimension_numbers<[1], [0], [0], [1], [0, 0, 1, 1], [], []>} : vector<32x96xbf16>, vector<96x128xbf16>, vector<32x128xf32> -> vector<32x128xf32>
    %53 = arith.addf %45, %52 : vector<32x128xf32>
    %c3_48 = arith.constant 3 : index
    %c0_49 = arith.constant 0 : index
    %c0_50 = arith.constant 0 : index
    %54 = vector.load %arg3[%c3_48, %c0_49, %c0_50] : memref<4x32x64xbf16, #tpu.memory_space<vmem>>, vector<1x32x64xbf16>
    %55 = vector.shape_cast %54 : vector<1x32x64xbf16> to vector<32x64xbf16>
    %cst_51 = arith.constant dense<0.000000e+00> : vector<32x96xf32>
    %56 = tpu.matmul %55, %28, %cst_51 {dimension_numbers = #tpu.dot_dimension_numbers<[1], [0], [0], [1], [0, 0, 1, 1], [], []>} : vector<32x64xbf16>, vector<64x96xbf16>, vector<32x96xf32> -> vector<32x96xf32>
    %57 = arith.truncf %56 : vector<32x96xf32> to vector<32x96xbf16>
    %c3_52 = arith.constant 3 : index
    %c0_53 = arith.constant 0 : index
    %c0_54 = arith.constant 0 : index
    %58 = vector.load %arg4[%c3_52, %c0_53, %c0_54] : memref<4x96x128xbf16, #tpu.memory_space<vmem>>, vector<1x96x128xbf16>
    %59 = vector.shape_cast %58 : vector<1x96x128xbf16> to vector<96x128xbf16>
    %cst_55 = arith.constant dense<0.000000e+00> : vector<32x128xf32>
    %60 = tpu.matmul %57, %59, %cst_55 {dimension_numbers = #tpu.dot_dimension_numbers<[1], [0], [0], [1], [0, 0, 1, 1], [], []>} : vector<32x96xbf16>, vector<96x128xbf16>, vector<32x128xf32> -> vector<32x128xf32>
    %61 = arith.addf %53, %60 : vector<32x128xf32>
    %cst_56 = arith.constant 0.000000e+00 : f32
    %62 = vector.broadcast %cst_56 : f32 to vector<32x128xf32>
    %63 = arith.cmpf oge, %61, %62 : vector<32x128xf32>
    %cst_57 = arith.constant 1.000000e-01 : f32
    %64 = vector.broadcast %cst_57 : f32 to vector<32x128xf32>
    %65 = arith.mulf %64, %61 : vector<32x128xf32>
    %66 = arith.select %63, %61, %65 : vector<32x128xi1>, vector<32x128xf32>
    %67 = arith.truncf %66 : vector<32x128xf32> to vector<32x128xbf16>
    %cst_58 = arith.constant 0.000000e+00 : f32
    %68 = vector.broadcast %cst_58 : f32 to vector<16x64xf32>
    %c0_59 = arith.constant 0 : index
    %c0_60 = arith.constant 0 : index
    %c0_61 = arith.constant 0 : index
    %69 = vector.load %arg5[%c0_59, %c0_60, %c0_61] : memref<4x16x32xbf16, #tpu.memory_space<vmem>>, vector<1x16x32xbf16>
    %70 = vector.shape_cast %69 : vector<1x16x32xbf16> to vector<16x32xbf16>
    %cst_62 = arith.constant dense<0.000000e+00> : vector<16x128xf32>
    %71 = tpu.matmul %70, %67, %cst_62 {dimension_numbers = #tpu.dot_dimension_numbers<[1], [0], [0], [1], [0, 0, 1, 1], [], []>} : vector<16x32xbf16>, vector<32x128xbf16>, vector<16x128xf32> -> vector<16x128xf32>
    %72 = arith.truncf %71 : vector<16x128xf32> to vector<16x128xbf16>
    %c0_63 = arith.constant 0 : index
    %c0_64 = arith.constant 0 : index
    %c0_65 = arith.constant 0 : index
    %73 = vector.load %arg6[%c0_63, %c0_64, %c0_65] : memref<4x128x64xbf16, #tpu.memory_space<vmem>>, vector<1x128x64xbf16>
    %74 = vector.shape_cast %73 : vector<1x128x64xbf16> to vector<128x64xbf16>
    %cst_66 = arith.constant dense<0.000000e+00> : vector<16x64xf32>
    %75 = tpu.matmul %72, %74, %cst_66 {dimension_numbers = #tpu.dot_dimension_numbers<[1], [0], [0], [1], [0, 0, 1, 1], [], []>} : vector<16x128xbf16>, vector<128x64xbf16>, vector<16x64xf32> -> vector<16x64xf32>
    %76 = arith.addf %68, %75 : vector<16x64xf32>
    %c1_67 = arith.constant 1 : index
    %c0_68 = arith.constant 0 : index
    %c0_69 = arith.constant 0 : index
    %77 = vector.load %arg5[%c1_67, %c0_68, %c0_69] : memref<4x16x32xbf16, #tpu.memory_space<vmem>>, vector<1x16x32xbf16>
    %78 = vector.shape_cast %77 : vector<1x16x32xbf16> to vector<16x32xbf16>
    %cst_70 = arith.constant dense<0.000000e+00> : vector<16x128xf32>
    %79 = tpu.matmul %78, %67, %cst_70 {dimension_numbers = #tpu.dot_dimension_numbers<[1], [0], [0], [1], [0, 0, 1, 1], [], []>} : vector<16x32xbf16>, vector<32x128xbf16>, vector<16x128xf32> -> vector<16x128xf32>
    %80 = arith.truncf %79 : vector<16x128xf32> to vector<16x128xbf16>
    %c1_71 = arith.constant 1 : index
    %c0_72 = arith.constant 0 : index
    %c0_73 = arith.constant 0 : index
    %81 = vector.load %arg6[%c1_71, %c0_72, %c0_73] : memref<4x128x64xbf16, #tpu.memory_space<vmem>>, vector<1x128x64xbf16>
    %82 = vector.shape_cast %81 : vector<1x128x64xbf16> to vector<128x64xbf16>
    %cst_74 = arith.constant dense<0.000000e+00> : vector<16x64xf32>
    %83 = tpu.matmul %80, %82, %cst_74 {dimension_numbers = #tpu.dot_dimension_numbers<[1], [0], [0], [1], [0, 0, 1, 1], [], []>} : vector<16x128xbf16>, vector<128x64xbf16>, vector<16x64xf32> -> vector<16x64xf32>
    %84 = arith.addf %76, %83 : vector<16x64xf32>
    %c2_75 = arith.constant 2 : index
    %c0_76 = arith.constant 0 : index
    %c0_77 = arith.constant 0 : index
    %85 = vector.load %arg5[%c2_75, %c0_76, %c0_77] : memref<4x16x32xbf16, #tpu.memory_space<vmem>>, vector<1x16x32xbf16>
    %86 = vector.shape_cast %85 : vector<1x16x32xbf16> to vector<16x32xbf16>
    %cst_78 = arith.constant dense<0.000000e+00> : vector<16x128xf32>
    %87 = tpu.matmul %86, %67, %cst_78 {dimension_numbers = #tpu.dot_dimension_numbers<[1], [0], [0], [1], [0, 0, 1, 1], [], []>} : vector<16x32xbf16>, vector<32x128xbf16>, vector<16x128xf32> -> vector<16x128xf32>
    %88 = arith.truncf %87 : vector<16x128xf32> to vector<16x128xbf16>
    %c2_79 = arith.constant 2 : index
    %c0_80 = arith.constant 0 : index
    %c0_81 = arith.constant 0 : index
    %89 = vector.load %arg6[%c2_79, %c0_80, %c0_81] : memref<4x128x64xbf16, #tpu.memory_space<vmem>>, vector<1x128x64xbf16>
    %90 = vector.shape_cast %89 : vector<1x128x64xbf16> to vector<128x64xbf16>
    %cst_82 = arith.constant dense<0.000000e+00> : vector<16x64xf32>
    %91 = tpu.matmul %88, %90, %cst_82 {dimension_numbers = #tpu.dot_dimension_numbers<[1], [0], [0], [1], [0, 0, 1, 1], [], []>} : vector<16x128xbf16>, vector<128x64xbf16>, vector<16x64xf32> -> vector<16x64xf32>
    %92 = arith.addf %84, %91 : vector<16x64xf32>
    %c3_83 = arith.constant 3 : index
    %c0_84 = arith.constant 0 : index
    %c0_85 = arith.constant 0 : index
    %93 = vector.load %arg5[%c3_83, %c0_84, %c0_85] : memref<4x16x32xbf16, #tpu.memory_space<vmem>>, vector<1x16x32xbf16>
    %94 = vector.shape_cast %93 : vector<1x16x32xbf16> to vector<16x32xbf16>
    %cst_86 = arith.constant dense<0.000000e+00> : vector<16x128xf32>
    %95 = tpu.matmul %94, %67, %cst_86 {dimension_numbers = #tpu.dot_dimension_numbers<[1], [0], [0], [1], [0, 0, 1, 1], [], []>} : vector<16x32xbf16>, vector<32x128xbf16>, vector<16x128xf32> -> vector<16x128xf32>
    %96 = arith.truncf %95 : vector<16x128xf32> to vector<16x128xbf16>
    %c3_87 = arith.constant 3 : index
    %c0_88 = arith.constant 0 : index
    %c0_89 = arith.constant 0 : index
    %97 = vector.load %arg6[%c3_87, %c0_88, %c0_89] : memref<4x128x64xbf16, #tpu.memory_space<vmem>>, vector<1x128x64xbf16>
    %98 = vector.shape_cast %97 : vector<1x128x64xbf16> to vector<128x64xbf16>
    %cst_90 = arith.constant dense<0.000000e+00> : vector<16x64xf32>
    %99 = tpu.matmul %96, %98, %cst_90 {dimension_numbers = #tpu.dot_dimension_numbers<[1], [0], [0], [1], [0, 0, 1, 1], [], []>} : vector<16x128xbf16>, vector<128x64xbf16>, vector<16x64xf32> -> vector<16x64xf32>
    %100 = arith.addf %92, %99 : vector<16x64xf32>
    %cst_91 = arith.constant 0.000000e+00 : f32
    %101 = vector.broadcast %cst_91 : f32 to vector<16x64xf32>
    %102 = arith.cmpf oge, %100, %101 : vector<16x64xf32>
    %cst_92 = arith.constant 1.000000e-01 : f32
    %103 = vector.broadcast %cst_92 : f32 to vector<16x64xf32>
    %104 = arith.mulf %103, %100 : vector<16x64xf32>
    %105 = arith.select %102, %100, %104 : vector<16x64xi1>, vector<16x64xf32>
    %106 = arith.truncf %105 : vector<16x64xf32> to vector<16x64xbf16>
    %c0_93 = arith.constant 0 : index
    %c0_94 = arith.constant 0 : index
    %107 = vector.load %arg2[%c0_93, %c0_94] : memref<2x16xf32, #tpu.memory_space<vmem>>, vector<2x16xf32>
    %108 = arith.truncf %107 : vector<2x16xf32> to vector<2x16xbf16>
    %c0_95 = arith.constant 0 : index
    %c0_96 = arith.constant 0 : index
    %109 = vector.load %arg7[%c0_95, %c0_96] : memref<16x512xbf16, #tpu.memory_space<vmem>>, vector<16x512xbf16>
    %cst_97 = arith.constant dense<0.000000e+00> : vector<2x512xf32>
    %110 = tpu.matmul %108, %109, %cst_97 {dimension_numbers = #tpu.dot_dimension_numbers<[1], [0], [0], [1], [0, 0, 1, 1], [], []>} : vector<2x16xbf16>, vector<16x512xbf16>, vector<2x512xf32> -> vector<2x512xf32>
    %c0_98 = arith.constant 0 : index
    %c0_99 = arith.constant 0 : index
    %111 = vector.load %arg8[%c0_98, %c0_99] : memref<1x512xf32, #tpu.memory_space<vmem>>, vector<1x512xf32>
    %112 = vector.broadcast %111 : vector<1x512xf32> to vector<2x512xf32>
    %113 = arith.addf %110, %112 : vector<2x512xf32>
    %cst_100 = arith.constant 0.000000e+00 : f32
    %114 = vector.broadcast %cst_100 : f32 to vector<2x512xf32>
    %115 = arith.cmpf oge, %113, %114 : vector<2x512xf32>
    %cst_101 = arith.constant 1.000000e-01 : f32
    %116 = vector.broadcast %cst_101 : f32 to vector<2x512xf32>
    %117 = arith.mulf %116, %113 : vector<2x512xf32>
    %118 = arith.select %115, %113, %117 : vector<2x512xi1>, vector<2x512xf32>
    %119 = arith.truncf %118 : vector<2x512xf32> to vector<2x512xbf16>
    %c0_i32_102 = arith.constant 0 : i32
    %120 = tpu.memref_slice %arg19[%c0_i32_102] : memref<2x!tpu.dma_semaphore, #tpu.memory_space<semaphore_mem>> -> memref<1x!tpu.dma_semaphore, #tpu.memory_space<semaphore_mem>>
    %121 = tpu.memref_squeeze %120 : memref<1x!tpu.dma_semaphore, #tpu.memory_space<semaphore_mem>> -> memref<!tpu.dma_semaphore, #tpu.memory_space<semaphore_mem>>
    tpu.wait_dma2 semaphore(%121 : memref<!tpu.dma_semaphore, #tpu.memory_space<semaphore_mem>>) src(%arg12 : memref<512x1024xbf16, #tpu.memory_space<any>>) dst(%arg17 : memref<512x1024xbf16, #tpu.memory_space<vmem>>)
    %c1_i32_103 = arith.constant 1 : i32
    %122 = tpu.memref_slice %arg19[%c1_i32_103] : memref<2x!tpu.dma_semaphore, #tpu.memory_space<semaphore_mem>> -> memref<1x!tpu.dma_semaphore, #tpu.memory_space<semaphore_mem>>
    %123 = tpu.memref_squeeze %122 : memref<1x!tpu.dma_semaphore, #tpu.memory_space<semaphore_mem>> -> memref<!tpu.dma_semaphore, #tpu.memory_space<semaphore_mem>>
    tpu.wait_dma2 semaphore(%123 : memref<!tpu.dma_semaphore, #tpu.memory_space<semaphore_mem>>) src(%arg13 : memref<512x1024xbf16, #tpu.memory_space<any>>) dst(%arg18 : memref<512x1024xbf16, #tpu.memory_space<vmem>>)
    %c0_104 = arith.constant 0 : index
    %c0_105 = arith.constant 0 : index
    %124 = vector.load %arg18[%c0_104, %c0_105] : memref<512x1024xbf16, #tpu.memory_space<vmem>>, vector<512x1024xbf16>
    %cst_106 = arith.constant dense<0.000000e+00> : vector<2x1024xf32>
    %125 = tpu.matmul %119, %124, %cst_106 {dimension_numbers = #tpu.dot_dimension_numbers<[1], [0], [0], [1], [0, 0, 1, 1], [], []>} : vector<2x512xbf16>, vector<512x1024xbf16>, vector<2x1024xf32> -> vector<2x1024xf32>
    %c0_107 = arith.constant 0 : index
    %c0_108 = arith.constant 0 : index
    %126 = vector.load %arg9[%c0_107, %c0_108] : memref<1x1024xf32, #tpu.memory_space<vmem>>, vector<1x1024xf32>
    %127 = vector.broadcast %126 : vector<1x1024xf32> to vector<2x1024xf32>
    %128 = arith.addf %125, %127 : vector<2x1024xf32>
    %129 = vector.extract_strided_slice %106 {offsets = [0, 0], sizes = [2, 64], strides = [1, 1]} : vector<16x64xbf16> to vector<2x64xbf16>
    %c0_109 = arith.constant 0 : index
    %c0_110 = arith.constant 0 : index
    %130 = vector.load %arg17[%c0_109, %c0_110] : memref<512x1024xbf16, #tpu.memory_space<vmem>>, vector<64x1024xbf16>
    %cst_111 = arith.constant dense<0.000000e+00> : vector<2x1024xf32>
    %131 = tpu.matmul %129, %130, %cst_111 {dimension_numbers = #tpu.dot_dimension_numbers<[1], [0], [0], [1], [0, 0, 1, 1], [], []>} : vector<2x64xbf16>, vector<64x1024xbf16>, vector<2x1024xf32> -> vector<2x1024xf32>
    %132 = arith.addf %128, %131 : vector<2x1024xf32>
    %133 = vector.extract_strided_slice %106 {offsets = [2, 0], sizes = [2, 64], strides = [1, 1]} : vector<16x64xbf16> to vector<2x64xbf16>
    %c64_112 = arith.constant 64 : index
    %c0_113 = arith.constant 0 : index
    %134 = vector.load %arg17[%c64_112, %c0_113] : memref<512x1024xbf16, #tpu.memory_space<vmem>>, vector<64x1024xbf16>
    %cst_114 = arith.constant dense<0.000000e+00> : vector<2x1024xf32>
    %135 = tpu.matmul %133, %134, %cst_114 {dimension_numbers = #tpu.dot_dimension_numbers<[1], [0], [0], [1], [0, 0, 1, 1], [], []>} : vector<2x64xbf16>, vector<64x1024xbf16>, vector<2x1024xf32> -> vector<2x1024xf32>
    %136 = arith.addf %132, %135 : vector<2x1024xf32>
    %137 = vector.extract_strided_slice %106 {offsets = [4, 0], sizes = [2, 64], strides = [1, 1]} : vector<16x64xbf16> to vector<2x64xbf16>
    %c128 = arith.constant 128 : index
    %c0_115 = arith.constant 0 : index
    %138 = vector.load %arg17[%c128, %c0_115] : memref<512x1024xbf16, #tpu.memory_space<vmem>>, vector<64x1024xbf16>
    %cst_116 = arith.constant dense<0.000000e+00> : vector<2x1024xf32>
    %139 = tpu.matmul %137, %138, %cst_116 {dimension_numbers = #tpu.dot_dimension_numbers<[1], [0], [0], [1], [0, 0, 1, 1], [], []>} : vector<2x64xbf16>, vector<64x1024xbf16>, vector<2x1024xf32> -> vector<2x1024xf32>
    %140 = arith.addf %136, %139 : vector<2x1024xf32>
    %141 = vector.extract_strided_slice %106 {offsets = [6, 0], sizes = [2, 64], strides = [1, 1]} : vector<16x64xbf16> to vector<2x64xbf16>
    %c192 = arith.constant 192 : index
    %c0_117 = arith.constant 0 : index
    %142 = vector.load %arg17[%c192, %c0_117] : memref<512x1024xbf16, #tpu.memory_space<vmem>>, vector<64x1024xbf16>
    %cst_118 = arith.constant dense<0.000000e+00> : vector<2x1024xf32>
    %143 = tpu.matmul %141, %142, %cst_118 {dimension_numbers = #tpu.dot_dimension_numbers<[1], [0], [0], [1], [0, 0, 1, 1], [], []>} : vector<2x64xbf16>, vector<64x1024xbf16>, vector<2x1024xf32> -> vector<2x1024xf32>
    %144 = arith.addf %140, %143 : vector<2x1024xf32>
    %145 = vector.extract_strided_slice %106 {offsets = [8, 0], sizes = [2, 64], strides = [1, 1]} : vector<16x64xbf16> to vector<2x64xbf16>
    %c256 = arith.constant 256 : index
    %c0_119 = arith.constant 0 : index
    %146 = vector.load %arg17[%c256, %c0_119] : memref<512x1024xbf16, #tpu.memory_space<vmem>>, vector<64x1024xbf16>
    %cst_120 = arith.constant dense<0.000000e+00> : vector<2x1024xf32>
    %147 = tpu.matmul %145, %146, %cst_120 {dimension_numbers = #tpu.dot_dimension_numbers<[1], [0], [0], [1], [0, 0, 1, 1], [], []>} : vector<2x64xbf16>, vector<64x1024xbf16>, vector<2x1024xf32> -> vector<2x1024xf32>
    %148 = arith.addf %144, %147 : vector<2x1024xf32>
    %149 = vector.extract_strided_slice %106 {offsets = [10, 0], sizes = [2, 64], strides = [1, 1]} : vector<16x64xbf16> to vector<2x64xbf16>
    %c320 = arith.constant 320 : index
    %c0_121 = arith.constant 0 : index
    %150 = vector.load %arg17[%c320, %c0_121] : memref<512x1024xbf16, #tpu.memory_space<vmem>>, vector<64x1024xbf16>
    %cst_122 = arith.constant dense<0.000000e+00> : vector<2x1024xf32>
    %151 = tpu.matmul %149, %150, %cst_122 {dimension_numbers = #tpu.dot_dimension_numbers<[1], [0], [0], [1], [0, 0, 1, 1], [], []>} : vector<2x64xbf16>, vector<64x1024xbf16>, vector<2x1024xf32> -> vector<2x1024xf32>
    %152 = arith.addf %148, %151 : vector<2x1024xf32>
    %153 = vector.extract_strided_slice %106 {offsets = [12, 0], sizes = [2, 64], strides = [1, 1]} : vector<16x64xbf16> to vector<2x64xbf16>
    %c384 = arith.constant 384 : index
    %c0_123 = arith.constant 0 : index
    %154 = vector.load %arg17[%c384, %c0_123] : memref<512x1024xbf16, #tpu.memory_space<vmem>>, vector<64x1024xbf16>
    %cst_124 = arith.constant dense<0.000000e+00> : vector<2x1024xf32>
    %155 = tpu.matmul %153, %154, %cst_124 {dimension_numbers = #tpu.dot_dimension_numbers<[1], [0], [0], [1], [0, 0, 1, 1], [], []>} : vector<2x64xbf16>, vector<64x1024xbf16>, vector<2x1024xf32> -> vector<2x1024xf32>
    %156 = arith.addf %152, %155 : vector<2x1024xf32>
    %157 = vector.extract_strided_slice %106 {offsets = [14, 0], sizes = [2, 64], strides = [1, 1]} : vector<16x64xbf16> to vector<2x64xbf16>
    %c448 = arith.constant 448 : index
    %c0_125 = arith.constant 0 : index
    %158 = vector.load %arg17[%c448, %c0_125] : memref<512x1024xbf16, #tpu.memory_space<vmem>>, vector<64x1024xbf16>
    %cst_126 = arith.constant dense<0.000000e+00> : vector<2x1024xf32>
    %159 = tpu.matmul %157, %158, %cst_126 {dimension_numbers = #tpu.dot_dimension_numbers<[1], [0], [0], [1], [0, 0, 1, 1], [], []>} : vector<2x64xbf16>, vector<64x1024xbf16>, vector<2x1024xf32> -> vector<2x1024xf32>
    %160 = arith.addf %156, %159 : vector<2x1024xf32>
    %cst_127 = arith.constant 0.000000e+00 : f32
    %161 = vector.broadcast %cst_127 : f32 to vector<2x1024xf32>
    %162 = arith.cmpf oge, %160, %161 : vector<2x1024xf32>
    %cst_128 = arith.constant 1.000000e-01 : f32
    %163 = vector.broadcast %cst_128 : f32 to vector<2x1024xf32>
    %164 = arith.mulf %163, %160 : vector<2x1024xf32>
    %165 = arith.select %162, %160, %164 : vector<2x1024xi1>, vector<2x1024xf32>
    %c0_129 = arith.constant 0 : index
    %c0_130 = arith.constant 0 : index
    %166 = vector.load %arg15[%c0_129, %c0_130] : memref<2x1024xf32, #tpu.memory_space<vmem>>, vector<2x1024xf32>
    tpu.vector_store %arg15[%c0_129, %c0_130], %165 {strides = array<i32>} : memref<2x1024xf32, #tpu.memory_space<vmem>>, vector<2x1024xf32>,
    %c0_131 = arith.constant 0 : index
    %c0_132 = arith.constant 0 : index
    %167 = vector.load %arg10[%c0_131, %c0_132] : memref<1x1024xf32, #tpu.memory_space<vmem>>, vector<1x1024xf32>
    %168 = vector.broadcast %167 : vector<1x1024xf32> to vector<2x1024xf32>
    %169 = arith.mulf %165, %168 : vector<2x1024xf32>
    %cst_133 = arith.constant dense<0.000000e+00> : vector<2xf32>
    %170 = vector.multi_reduction <add>, %169, %cst_133 [1] : vector<2x1024xf32> to vector<2xf32>
    %171 = vector.shape_cast %170 : vector<2xf32> to vector<2x1xf32>
    %c0_134 = arith.constant 0 : index
    %c0_135 = arith.constant 0 : index
    %172 = vector.load %arg11[%c0_134, %c0_135] : memref<1x1xf32, #tpu.memory_space<vmem>>, vector<1x1xf32>
    %173 = vector.broadcast %172 : vector<1x1xf32> to vector<2x1xf32>
    %174 = arith.addf %171, %173 : vector<2x1xf32>
    %c0_136 = arith.constant 0 : index
    %c0_137 = arith.constant 0 : index
    %175 = vector.load %arg14[%c0_136, %c0_137] : memref<2x1xf32, #tpu.memory_space<vmem>>, vector<2x1xf32>
    tpu.vector_store %arg14[%c0_136, %c0_137], %174 {strides = array<i32>} : memref<2x1xf32, #tpu.memory_space<vmem>>, vector<2x1xf32>,
    return
  }
  func.func @transform_0(%arg0: i32) -> (i32, i32, i32) {
    %c0_i32 = arith.constant 0 : i32
    %c0_i32_0 = arith.constant 0 : i32
    %c0_i32_1 = arith.constant 0 : i32
    %c0_i32_2 = arith.constant 0 : i32
    return %c0_i32, %c0_i32_0, %c0_i32_1 : i32, i32, i32
  }
  func.func @transform_1(%arg0: i32) -> (i32, i32) {
    %c0_i32 = arith.constant 0 : i32
    %c0_i32_0 = arith.constant 0 : i32
    %c0_i32_1 = arith.constant 0 : i32
    return %c0_i32, %c0_i32_0 : i32, i32
  }
  func.func @transform_2(%arg0: i32) -> (i32, i32, i32) {
    %c0_i32 = arith.constant 0 : i32
    %c0_i32_0 = arith.constant 0 : i32
    %c0_i32_1 = arith.constant 0 : i32
    %c0_i32_2 = arith.constant 0 : i32
    return %c0_i32, %c0_i32_0, %c0_i32_1 : i32, i32, i32
  }
  func.func @transform_3(%arg0: i32) -> (i32, i32, i32) {
    %c0_i32 = arith.constant 0 : i32
    %c0_i32_0 = arith.constant 0 : i32
    %c0_i32_1 = arith.constant 0 : i32
    %c0_i32_2 = arith.constant 0 : i32
    return %c0_i32, %c0_i32_0, %c0_i32_1 : i32, i32, i32
  }
  func.func @transform_4(%arg0: i32) -> (i32, i32, i32) {
    %c0_i32 = arith.constant 0 : i32
    %c0_i32_0 = arith.constant 0 : i32
    %c0_i32_1 = arith.constant 0 : i32
    %c0_i32_2 = arith.constant 0 : i32
    return %c0_i32, %c0_i32_0, %c0_i32_1 : i32, i32, i32
  }
  func.func @transform_5(%arg0: i32) -> (i32, i32, i32) {
    %c0_i32 = arith.constant 0 : i32
    %c0_i32_0 = arith.constant 0 : i32
    %c0_i32_1 = arith.constant 0 : i32
    %c0_i32_2 = arith.constant 0 : i32
    return %c0_i32, %c0_i32_0, %c0_i32_1 : i32, i32, i32
  }
  func.func @transform_6(%arg0: i32) -> (i32, i32) {
    %c0_i32 = arith.constant 0 : i32
    %c0_i32_0 = arith.constant 0 : i32
    %c0_i32_1 = arith.constant 0 : i32
    return %c0_i32, %c0_i32_0 : i32, i32
  }
  func.func @transform_7(%arg0: i32) -> (i32, i32) {
    %c0_i32 = arith.constant 0 : i32
    %c0_i32_0 = arith.constant 0 : i32
    %c0_i32_1 = arith.constant 0 : i32
    return %c0_i32, %c0_i32_0 : i32, i32
  }
  func.func @transform_8(%arg0: i32) -> (i32, i32) {
    %c0_i32 = arith.constant 0 : i32
    %c0_i32_0 = arith.constant 0 : i32
    %c0_i32_1 = arith.constant 0 : i32
    return %c0_i32, %c0_i32_0 : i32, i32
  }
  func.func @transform_9(%arg0: i32) -> (i32, i32) {
    %c0_i32 = arith.constant 0 : i32
    %c0_i32_0 = arith.constant 0 : i32
    %c0_i32_1 = arith.constant 0 : i32
    return %c0_i32, %c0_i32_0 : i32, i32
  }
  func.func @transform_10(%arg0: i32) -> (i32, i32) {
    %c0_i32 = arith.constant 0 : i32
    %c0_i32_0 = arith.constant 0 : i32
    %c0_i32_1 = arith.constant 0 : i32
    return %c0_i32, %c0_i32_0 : i32, i32
  }
  func.func @transform_13(%arg0: i32) -> (i32, i32) {
    %c0_i32 = arith.constant 0 : i32
    %c0_i32_0 = arith.constant 0 : i32
    %c0_i32_1 = arith.constant 0 : i32
    return %c0_i32, %c0_i32_0 : i32, i32
  }
  func.func @transform_14(%arg0: i32) -> (i32, i32) {
    %c0_i32 = arith.constant 0 : i32
    %c0_i32_0 = arith.constant 0 : i32
    %c0_i32_1 = arith.constant 0 : i32
    return %c0_i32, %c0_i32_0 : i32, i32
  }
}

</mosaic_0001>

<llo_original>
// kernel: netd_forward.1
$region0: #{netd_forward.1}
  #allocation0 [shape = 'u32[]', space=smem, size = 0x4, offset = 0x4, fixed_abs, tag = 'smem constant byte address 0x4 - core index']
  #allocation1 [shape = 'u32[72,128]{1,0:T(1,128)}', space=vmem, size = 0x9000, scoped, tag = 'internal scratch']
  #allocation2 [shape = 'bf16[64,96]{1,0:T(8,128)(2,1)}', space=vmem, size = 0x4000, scoped, tag = 'scratch operand']
  #allocation3 [shape = 'bf16[512,1024]{1,0:T(8,128)(2,1)}', space=vmem, size = 0x100000, scoped, tag = 'scratch operand']
  #allocation4 [shape = 'bf16[512,1024]{1,0:T(8,128)(2,1)}', space=vmem, size = 0x100000, scoped, tag = 'scratch operand']
  #allocation5 [shape = 's32[2]{0}', space=sflag, size = 0x8, scoped, tag = 'scratch operand']
  #allocation6 [shape = 'f32[1,1]{1,0:T(1,128)S(1)}', space=vmem, size = 0x200, scoped, tag = 'scoped memory for netd_forward.1']
  #allocation17 [shape = 's32[]', space=sflag, size = 0x4, offset = 0, fixed_abs, tag = 'sflag constant byte address 0x0 - dummy sync flag']
  #allocation18 [shape = 's32[]', space=sflag, size = 0x4, offset = 0, fixed_abs, tag = 'sflag constant byte address 0x0 - dummy sync flag']
  #allocation19 [shape = 'u32[]', space=smem, size = 0x4, offset = 0x44, fixed_abs, tag = 'smem constant byte address 0x44 - assertion arg 0']
  #allocation20 [shape = 'u32[]', space=smem, size = 0x4, offset = 0x48, fixed_abs, tag = 'smem constant byte address 0x48 - assertion arg 1']
  #allocation21 [shape = 's32[]', space=sflag, size = 0x4, offset = 0, fixed_abs, tag = 'sflag constant byte address 0x0 - dummy sync flag']
  #allocation22 [shape = 's32[]', space=sflag, size = 0x4, offset = 0, fixed_abs, tag = 'sflag constant byte address 0x0 - dummy sync flag']
  %s0 = inlined_call_operand.vmem [shape: f32[6,32,32], index: 0, kind: input, shape index: {}]
  %s1 = inlined_call_operand.vmem [shape: f32[2,16], index: 1, kind: input, shape index: {}]
  %s2 = inlined_call_operand.hbm [shape: bf16[4,32,64], index: 2, kind: input, shape index: {}]
  %s3 = inlined_call_operand.vmem [shape: bf16[4,96,128], index: 3, kind: input, shape index: {}]
  %s4 = inlined_call_operand.hbm [shape: bf16[4,16,32], index: 4, kind: input, shape index: {}]
  %s5 = inlined_call_operand.vmem [shape: bf16[4,128,64], index: 5, kind: input, shape index: {}]
  %s6 = inlined_call_operand.hbm [shape: bf16[16,512], index: 6, kind: input, shape index: {}]
  %s7 = inlined_call_operand.vmem [shape: f32[1,512], index: 7, kind: input, shape index: {}]
  %s8 = inlined_call_operand.hbm [shape: f32[1,1024], index: 8, kind: input, shape index: {}]
  %s9 = inlined_call_operand.hbm [shape: f32[1,1024], index: 9, kind: input, shape index: {}]
  %s10 = inlined_call_operand.<no memory space> [shape: f32[1,1], index: 10, kind: input, shape index: {}]
  %s11 = inlined_call_operand.hbm [shape: bf16[512,1024], index: 11, kind: input, shape index: {}]
  %s12 = inlined_call_operand.hbm [shape: bf16[512,1024], index: 12, kind: input, shape index: {}]
  %s13 = inlined_call_operand.vmem [shape: f32[2,1], index: 13, kind: output, shape index: {0}]
  %s14 = inlined_call_operand.hbm [shape: f32[2,1024], index: 14, kind: output, shape index: {1}]
  %15 = xla_tuple %s13, %s14
  %s16 = sld [smem:[#allocation0]]
  $region90: #{netd_forward.1} parent=0
    _
  %s18 = ssub.s32 1, %s16
  %s19 = scalar_select 0, %s18, %s16
  %v20 = vstv %s10
  %21 = vst [vmem:[#allocation6] sm:$0x1] %v20
  $region1: #{netd_forward.1} parent=0
    #allocation7 [shape = 'u8[32768]{0}', space=vmem, size = 0x8000, scoped, tag = 'input window, operand 2, single buffered']
    #allocation8 [shape = 's32[1]{0}', space=sflag, size = 0x4, scoped, tag = 'scoped memory for netd_forward.1']
    #allocation9 [shape = 's32[1]{0}', space=sflag, size = 0x4, scoped, tag = 'scoped memory for netd_forward.1']
    #allocation10 [shape = 'u8[16384]{0}', space=vmem, size = 0x4000, scoped, tag = 'input window, operand 4, single buffered']
    #allocation11 [shape = 's32[1]{0}', space=sflag, size = 0x4, scoped, tag = 'scoped memory for netd_forward.1']
    #allocation12 [shape = 'u8[16384]{0}', space=vmem, size = 0x4000, scoped, tag = 'input window, operand 6, single buffered']
    #allocation13 [shape = 'u8[4096]{0}', space=vmem, size = 0x1000, scoped, tag = 'input window, operand 8, single buffered']
    #allocation14 [shape = 's32[1]{0}', space=sflag, size = 0x4, scoped, tag = 'scoped memory for netd_forward.1']
    #allocation15 [shape = 'u8[4096]{0}', space=vmem, size = 0x1000, scoped, tag = 'input window, operand 9, single buffered']
    #allocation16 [shape = 'u8[8192]{0}', space=vmem, size = 0x2000, scoped, tag = 'output window, operand 1, single buffered']
    %22 = vsyncpa [#allocation8], 0
    %23 = vsyncpa [#allocation11], 0
    %24 = vsyncpa [#allocation14], 0
    %25 = vsyncpa [#allocation9], 0
    // Predicated region
    $region2: #{netd_forward.1} parent=1 // pred_check
      _
    $region3: #{netd_forward.1} parent=1 // pred_check_branch
      %27 = sbr.rel (0) target = $region5
    $region4: #{netd_forward.1} parent=1 // pred_region
      _
    $region5: #{netd_forward.1} parent=1 // pred_fallthru
      _
    // Predicated region
    $region6: #{netd_forward.1} parent=1 // pred_check
      _
    $region7: #{netd_forward.1} parent=1 // pred_check_branch
      %29 = sbr.rel (0) target = $region9
    $region8: #{netd_forward.1} parent=1 // pred_region
      _
    $region9: #{netd_forward.1} parent=1 // pred_fallthru
      _
    // Predicated region
    $region10: #{netd_forward.1} parent=1 // pred_check
      _
    $region11: #{netd_forward.1} parent=1 // pred_check_branch
      %31 = sbr.rel (0) target = $region13
    $region12: #{netd_forward.1} parent=1 // pred_region
      %33 = vsyncadd [#allocation8], 0
      %s34 = sshll.u32 %s2, 4
      %s35 = int_to_ptr.hbm [resolvable:$true] %s34
      %s36 = sshll.u32 [#allocation7], 4
      %s37 = int_to_ptr.vmem [resolvable:$true] %s36
      %42 = dma.hbm_to_vmem [thread:$0]  %s35, 1024, %s37, [#allocation8], 64, 64, 4
    $region13: #{netd_forward.1} parent=1 // pred_fallthru
      _
    // Predicated region
    $region14: #{netd_forward.1} parent=1 // pred_check
      _
    $region15: #{netd_forward.1} parent=1 // pred_check_branch
      %44 = sbr.rel (0) target = $region17
    $region16: #{netd_forward.1} parent=1 // pred_region
      _
    $region17: #{netd_forward.1} parent=1 // pred_fallthru
      _
    // Predicated region
    $region18: #{netd_forward.1} parent=1 // pred_check
      _
    $region19: #{netd_forward.1} parent=1 // pred_check_branch
      %46 = sbr.rel (0) target = $region21
    $region20: #{netd_forward.1} parent=1 // pred_region
      %48 = vsyncadd [#allocation11], 0
      %s49 = sshll.u32 %s4, 4
      %s50 = int_to_ptr.hbm [resolvable:$true] %s49
      %s51 = sshll.u32 [#allocation10], 4
      %s52 = int_to_ptr.vmem [resolvable:$true] %s51
      %57 = dma.hbm_to_vmem [thread:$0]  %s50, 512, %s52, [#allocation11], 64, 64, 4
    $region21: #{netd_forward.1} parent=1 // pred_fallthru
      _
    // Predicated region
    $region22: #{netd_forward.1} parent=1 // pred_check
      _
    $region23: #{netd_forward.1} parent=1 // pred_check_branch
      %59 = sbr.rel (0) target = $region25
    $region24: #{netd_forward.1} parent=1 // pred_region
      _
    $region25: #{netd_forward.1} parent=1 // pred_fallthru
      _
    // Predicated region
    $region26: #{netd_forward.1} parent=1 // pred_check
      _
    $region27: #{netd_forward.1} parent=1 // pred_check_branch
      %61 = sbr.rel (0) target = $region29
    $region28: #{netd_forward.1} parent=1 // pred_region
      %63 = vsyncadd [#allocation11], 0
      %s64 = sshll.u32 %s6, 4
      %s65 = int_to_ptr.hbm [resolvable:$true] %s64
      %s66 = sshll.u32 [#allocation12], 4
      %s67 = int_to_ptr.vmem [resolvable:$true] %s66
      %72 = dma.hbm_to_vmem [thread:$0]  %s65, 512, %s67, [#allocation11], 256, 256, 16
    $region29: #{netd_forward.1} parent=1 // pred_fallthru
      _
    // Predicated region
    $region30: #{netd_forward.1} parent=1 // pred_check
      _
    $region31: #{netd_forward.1} parent=1 // pred_check_branch
      %74 = sbr.rel (0) target = $region33
    $region32: #{netd_forward.1} parent=1 // pred_region
      _
    $region33: #{netd_forward.1} parent=1 // pred_fallthru
      _
    // Predicated region
    $region34: #{netd_forward.1} parent=1 // pred_check
      _
    $region35: #{netd_forward.1} parent=1 // pred_check_branch
      %76 = sbr.rel (0) target = $region37
    $region36: #{netd_forward.1} parent=1 // pred_region
      %78 = vsyncadd [#allocation14], 0
      %s80 = sshll.u32 %s8, 4
      %s81 = int_to_ptr.hbm [resolvable:$true] %s80
      %s82 = sshll.u32 [#allocation13], 4
      %s83 = int_to_ptr.vmem [resolvable:$true] %s82
      %85 = dma.hbm_to_vmem [thread:$0]  %s81, 128, %s83, [#allocation14]
    $region37: #{netd_forward.1} parent=1 // pred_fallthru
      _
    // Predicated region
    $region38: #{netd_forward.1} parent=1 // pred_check
      _
    $region39: #{netd_forward.1} parent=1 // pred_check_branch
      %87 = sbr.rel (0) target = $region41
    $region40: #{netd_forward.1} parent=1 // pred_region
      %89 = vsyncadd [#allocation14], 0
      %s91 = sshll.u32 %s9, 4
      %s92 = int_to_ptr.hbm [resolvable:$true] %s91
      %s93 = sshll.u32 [#allocation15], 4
      %s94 = int_to_ptr.vmem [resolvable:$true] %s93
      %96 = dma.hbm_to_vmem [thread:$0]  %s92, 128, %s94, [#allocation14]
    $region41: #{netd_forward.1} parent=1 // pred_fallthru
      _
    // Predicated region
    $region42: #{netd_forward.1} parent=1 // pred_check
      _
    $region43: #{netd_forward.1} parent=1 // pred_check_branch
      %98 = sbr.rel (0) target = $region45
    $region44: #{netd_forward.1} parent=1 // pred_region
      _
    $region45: #{netd_forward.1} parent=1 // pred_fallthru
      _
    // Predicated region
    $region46: #{netd_forward.1} parent=1 // pred_check
      _
    $region47: #{netd_forward.1} parent=1 // pred_check_branch
      %100 = sbr.rel (0) target = $region49
    $region48: #{netd_forward.1} parent=1 // pred_region
      %102 = dma.done [#allocation8], 1024
    $region49: #{netd_forward.1} parent=1 // pred_fallthru
      _
    // Predicated region
    $region50: #{netd_forward.1} parent=1 // pred_check
      _
    $region51: #{netd_forward.1} parent=1 // pred_check_branch
      %104 = sbr.rel (0) target = $region53
    $region52: #{netd_forward.1} parent=1 // pred_region
      %106 = dma.done [#allocation11], 512
    $region53: #{netd_forward.1} parent=1 // pred_fallthru
      _
    // Predicated region
    $region54: #{netd_forward.1} parent=1 // pred_check
      _
    $region55: #{netd_forward.1} parent=1 // pred_check_branch
      %108 = sbr.rel (0) target = $region57
    $region56: #{netd_forward.1} parent=1 // pred_region
      %110 = dma.done [#allocation11], 512
    $region57: #{netd_forward.1} parent=1 // pred_fallthru
      _
    // Predicated region
    $region58: #{netd_forward.1} parent=1 // pred_check
      _
    $region59: #{netd_forward.1} parent=1 // pred_check_branch
      %112 = sbr.rel (0) target = $region61
    $region60: #{netd_forward.1} parent=1 // pred_region
      %114 = dma.done [#allocation14], 128
    $region61: #{netd_forward.1} parent=1 // pred_fallthru
      _
    // Predicated region
    $region62: #{netd_forward.1} parent=1 // pred_check
      _
    $region63: #{netd_forward.1} parent=1 // pred_check_branch
      %116 = sbr.rel (0) target = $region65
    $region64: #{netd_forward.1} parent=1 // pred_region
      %118 = dma.done [#allocation14], 128
    $region65: #{netd_forward.1} parent=1 // pred_fallthru
      _
    // Predicated region
    $region66: #{netd_forward.1} parent=1 // pred_check
      _
    $region67: #{netd_forward.1} parent=1 // pred_check_branch
      %121 = sbr.rel target = $region69
    $region68: #{netd_forward.1} parent=1 // pred_region
      %122 = sst [smem:[#allocation19]] [#allocation18]
      %123 = sst [smem:[#allocation20]] [#allocation17]
    $region69: #{netd_forward.1} parent=1 // pred_fallthru
      _
    %125 = shalt.err (0)
    %s127 = sshll.u32 %s11, 4
    %s128 = int_to_ptr.hbm [resolvable:$true] %s127
    %s129 = sshll.u32 [#allocation3], 4
    %s130 = int_to_ptr.vmem [resolvable:$true] %s129
    %132 = dma.hbm_to_vmem [thread:$0]  %s128, 32768, %s130, [#allocation5]
    %s133 = scalar_lea.sflag [#allocation5], 1
    // Predicated region
    $region70: #{netd_forward.1} parent=1 // pred_check
      _
    $region71: #{netd_forward.1} parent=1 // pred_check_branch
      %135 = sbr.rel target = $region73
    $region72: #{netd_forward.1} parent=1 // pred_region
      %136 = sst [smem:[#allocation19]] [#allocation22]
      %137 = sst [smem:[#allocation20]] [#allocation21]
    $region73: #{netd_forward.1} parent=1 // pred_fallthru
      _
    %139 = shalt.err (0)
    %s141 = sshll.u32 %s12, 4
    %s142 = int_to_ptr.hbm [resolvable:$true] %s141
    %s143 = sshll.u32 [#allocation4], 4
    %s144 = int_to_ptr.vmem [resolvable:$true] %s143
    %146 = dma.hbm_to_vmem [thread:$0]  %s142, 32768, %s144, %s133
    %v147 = vld [vmem:[%s0] sm:$0xff]
    %v148 = vld [vmem:[%s0 + $0x8] sm:$0xff]
    %v149 = vld [vmem:[%s0 + $0x10] sm:$0xff]
    %v150 = vld [vmem:[%s0 + $0x18] sm:$0xff]
    %v151 = vpack.c.bf16 %v147, %v147
    %v152 = vpack.c.bf16 %v148, %v148
    %v153 = vpack.c.bf16 %v149, %v149
    %v154 = vpack.c.bf16 %v150, %v150
    %vm155 = vcmask 257024
    %156 = vst.msk [vmem:[#allocation2] sm:$0xf] %vm155, %v151
    %157 = vst.msk [vmem:[#allocation2 + $0x4] sm:$0xf] %vm155, %v152
    %158 = vst.msk [vmem:[#allocation2 + $0x8] sm:$0xf] %vm155, %v153
    %159 = vst.msk [vmem:[#allocation2 + $0xc] sm:$0xf] %vm155, %v154
    %s160 = scalar_lea.vmem %s0, 32
    %v161 = vld [vmem:[%s160] sm:$0xff]
    %v162 = vld [vmem:[%s160 + $0x8] sm:$0xff]
    %v163 = vld [vmem:[%s160 + $0x10] sm:$0xff]
    %v164 = vld [vmem:[%s160 + $0x18] sm:$0xff]
    %v165 = vpack.c.bf16 %v161, %v161
    %v166 = vpack.c.bf16 %v162, %v162
    %v167 = vpack.c.bf16 %v163, %v163
    %v168 = vpack.c.bf16 %v164, %v164
    %173 = vrot.lane.b32.xlu0 %v165, 32
    %v174 = vpop.permute.xlu0 %173
    %175 = vrot.lane.b32.xlu0 %v166, 32
    %v176 = vpop.permute.xlu0 %175
    %177 = vrot.lane.b32.xlu0 %v167, 32
    %v178 = vpop.permute.xlu0 %177
    %179 = vrot.lane.b32.xlu0 %v168, 32
    %v180 = vpop.permute.xlu0 %179
    %vm185 = vcmask 519424
    %186 = vst.msk [vmem:[#allocation2] sm:$0xf] %vm185, %v174
    %187 = vst.msk [vmem:[#allocation2 + $0x4] sm:$0xf] %vm185, %v176
    %188 = vst.msk [vmem:[#allocation2 + $0x8] sm:$0xf] %vm185, %v178
    %189 = vst.msk [vmem:[#allocation2 + $0xc] sm:$0xf] %vm185, %v180
    %s190 = scalar_lea.vmem %s0, 64
    %v191 = vld [vmem:[%s190] sm:$0xff]
    %v192 = vld [vmem:[%s190 + $0x8] sm:$0xff]
    %v193 = vld [vmem:[%s190 + $0x10] sm:$0xff]
    %v194 = vld [vmem:[%s190 + $0x18] sm:$0xff]
    %v195 = vpack.c.bf16 %v191, %v191
    %v196 = vpack.c.bf16 %v192, %v192
    %v197 = vpack.c.bf16 %v193, %v193
    %v198 = vpack.c.bf16 %v194, %v194
    %203 = vrot.lane.b32.xlu0 %v195, 64
    %v204 = vpop.permute.xlu0 %203
    %205 = vrot.lane.b32.xlu0 %v196, 64
    %v206 = vpop.permute.xlu0 %205
    %207 = vrot.lane.b32.xlu0 %v197, 64
    %v208 = vpop.permute.xlu0 %207
    %209 = vrot.lane.b32.xlu0 %v198, 64
    %v210 = vpop.permute.xlu0 %209
    %vm215 = vcmask 781824
    %216 = vst.msk [vmem:[#allocation2] sm:$0xf] %vm215, %v204
    %217 = vst.msk [vmem:[#allocation2 + $0x4] sm:$0xf] %vm215, %v206
    %218 = vst.msk [vmem:[#allocation2 + $0x8] sm:$0xf] %vm215, %v208
    %219 = vst.msk [vmem:[#allocation2 + $0xc] sm:$0xf] %vm215, %v210
    %s220 = scalar_lea.vmem %s0, 96
    %v221 = vld [vmem:[%s220] sm:$0xff]
    %v222 = vld [vmem:[%s220 + $0x8] sm:$0xff]
    %v223 = vld [vmem:[%s220 + $0x10] sm:$0xff]
    %v224 = vld [vmem:[%s220 + $0x18] sm:$0xff]
    %v225 = vpack.c.bf16 %v221, %v221
    %v226 = vpack.c.bf16 %v222, %v222
    %v227 = vpack.c.bf16 %v223, %v223
    %v228 = vpack.c.bf16 %v224, %v224
    %229 = vst.msk [vmem:[#allocation2 + $0x10] sm:$0xf] %vm155, %v225
    %230 = vst.msk [vmem:[#allocation2 + $0x14] sm:$0xf] %vm155, %v226
    %231 = vst.msk [vmem:[#allocation2 + $0x18] sm:$0xf] %vm155, %v227
    %232 = vst.msk [vmem:[#allocation2 + $0x1c] sm:$0xf] %vm155, %v228
    %s233 = scalar_lea.vmem %s0, 128
    %v234 = vld [vmem:[%s233] sm:$0xff]
    %v235 = vld [vmem:[%s233 + $0x8] sm:$0xff]
    %v236 = vld [vmem:[%s233 + $0x10] sm:$0xff]
    %v237 = vld [vmem:[%s233 + $0x18] sm:$0xff]
    %v238 = vpack.c.bf16 %v234, %v234
    %v239 = vpack.c.bf16 %v235, %v235
    %v240 = vpack.c.bf16 %v236, %v236
    %v241 = vpack.c.bf16 %v237, %v237
    %246 = vrot.lane.b32.xlu0 %v238, 32
    %v247 = vpop.permute.xlu0 %246
    %248 = vrot.lane.b32.xlu0 %v239, 32
    %v249 = vpop.permute.xlu0 %248
    %250 = vrot.lane.b32.xlu0 %v240, 32
    %v251 = vpop.permute.xlu0 %250
    %252 = vrot.lane.b32.xlu0 %v241, 32
    %v253 = vpop.permute.xlu0 %252
    %258 = vst.msk [vmem:[#allocation2 + $0x10] sm:$0xf] %vm185, %v247
    %259 = vst.msk [vmem:[#allocation2 + $0x14] sm:$0xf] %vm185, %v249
    %260 = vst.msk [vmem:[#allocation2 + $0x18] sm:$0xf] %vm185, %v251
    %261 = vst.msk [vmem:[#allocation2 + $0x1c] sm:$0xf] %vm185, %v253
    %s262 = scalar_lea.vmem %s0, 160
    %v263 = vld [vmem:[%s262] sm:$0xff]
    %v264 = vld [vmem:[%s262 + $0x8] sm:$0xff]
    %v265 = vld [vmem:[%s262 + $0x10] sm:$0xff]
    %v266 = vld [vmem:[%s262 + $0x18] sm:$0xff]
    %v267 = vpack.c.bf16 %v263, %v263
    %v268 = vpack.c.bf16 %v264, %v264
    %v269 = vpack.c.bf16 %v265, %v265
    %v270 = vpack.c.bf16 %v266, %v266
    %275 = vrot.lane.b32.xlu0 %v267, 64
    %v276 = vpop.permute.xlu0 %275
    %277 = vrot.lane.b32.xlu0 %v268, 64
    %v278 = vpop.permute.xlu0 %277
    %279 = vrot.lane.b32.xlu0 %v269, 64
    %v280 = vpop.permute.xlu0 %279
    %281 = vrot.lane.b32.xlu0 %v270, 64
    %v282 = vpop.permute.xlu0 %281
    %287 = vst.msk [vmem:[#allocation2 + $0x10] sm:$0xf] %vm215, %v276
    %288 = vst.msk [vmem:[#allocation2 + $0x14] sm:$0xf] %vm215, %v278
    %289 = vst.msk [vmem:[#allocation2 + $0x18] sm:$0xf] %vm215, %v280
    %290 = vst.msk [vmem:[#allocation2 + $0x1c] sm:$0xf] %vm215, %v282
    %v291 = vld [vmem:[#allocation2] sm:$0xf]
    %v292 = vld [vmem:[#allocation2 + $0x4] sm:$0xf]
    %v293 = vld [vmem:[#allocation2 + $0x8] sm:$0xf]
    %v294 = vld [vmem:[#allocation2 + $0xc] sm:$0xf]
    %v295 = vld [vmem:[#allocation2 + $0x10] sm:$0xf]
    %v296 = vld [vmem:[#allocation2 + $0x14] sm:$0xf]
    %v297 = vld [vmem:[#allocation2 + $0x18] sm:$0xf]
    %v298 = vld [vmem:[#allocation2 + $0x1c] sm:$0xf]
    %v299 = vld [vmem:[#allocation7] sm:$0xf]
    %v300 = vld [vmem:[#allocation7 + $0x4] sm:$0xf]
    %v301 = vld [vmem:[#allocation7 + $0x8] sm:$0xf]
    %v302 = vld [vmem:[#allocation7 + $0xc] sm:$0xf]
    %v307 = vunpack.c.l.b16 %v299
    %v308 = vunpack.c.l.b16 %v300
    %v309 = vunpack.c.l.b16 %v301
    %v310 = vunpack.c.l.b16 %v302
    %v311 = vpack.c.b16 %v308, %v307
    %v312 = vpack.c.b16 %v310, %v309
    %v321 = vunpack.c.l.b16 %v291
    %v322 = vunpack.c.l.b16 %v292
    %v323 = vunpack.c.l.b16 %v293
    %v324 = vunpack.c.l.b16 %v294
    %v325 = vunpack.c.l.b16 %v295
    %v326 = vunpack.c.l.b16 %v296
    %v327 = vunpack.c.l.b16 %v297
    %v328 = vunpack.c.l.b16 %v298
    %v329 = vpack.c.b16 %v322, %v321
    %v330 = vpack.c.b16 %v324, %v323
    %v331 = vpack.c.b16 %v326, %v325
    %v332 = vpack.c.b16 %v328, %v327
    %vm337 = vcmask 523264
    %v339 = vsel %vm337, %v311, 0
    %v342 = vsel %vm337, %v312, 0
    %344 = vmatpush.bf16.msra.mxu0 0
    %345 = vmatpush.bf16.msra.mxu0 0
    %346 = vmatpush.bf16.msra.mxu0 0
    %347 = vmatpush.bf16.msra.mxu0 0
    %348 = vmatpush.bf16.msra.mxu0 %v332
    %349 = vmatpush.bf16.msra.mxu0 %v331
    %350 = vmatpush.bf16.msra.mxu0 %v330
    %351 = vmatpush.bf16.msra.mxu0 %v329
    %352 = vmatmul.bf16.gmra.mxu0 %v339
    %v353 = vpop.f32.mrf.mxu0
    %v354 = vadd.f32 0.0, %v353
    %v355 = vpop.f32.mrf.mxu0
    %v356 = vadd.f32 0.0, %v355
    %357 = vmatmul.bf16.gmra.mxu0 %v342
    %v358 = vpop.f32.mrf.mxu0
    %v359 = vadd.f32 0.0, %v358
    %v360 = vpop.f32.mrf.mxu0
    %v361 = vadd.f32 0.0, %v360
    %362 = vdwg.mxu0
    %v363 = vpack.c.bf16 %v356, %v354
    %v364 = vpack.c.bf16 %v361, %v359
    %v365 = vld [vmem:[%s3] sm:$0xf]
    %v366 = vld [vmem:[%s3 + $0x4] sm:$0xf]
    %v367 = vld [vmem:[%s3 + $0x8] sm:$0xf]
    %v368 = vld [vmem:[%s3 + $0xc] sm:$0xf]
    %v369 = vld [vmem:[%s3 + $0x10] sm:$0xf]
    %v370 = vld [vmem:[%s3 + $0x14] sm:$0xf]
    %v371 = vld [vmem:[%s3 + $0x18] sm:$0xf]
    %v372 = vld [vmem:[%s3 + $0x1c] sm:$0xf]
    %v373 = vld [vmem:[%s3 + $0x20] sm:$0xf]
    %v374 = vld [vmem:[%s3 + $0x24] sm:$0xf]
    %v375 = vld [vmem:[%s3 + $0x28] sm:$0xf]
    %v376 = vld [vmem:[%s3 + $0x2c] sm:$0xf]
    %s377 = scalar_lea.vmem [#allocation7], 16
    %v378 = vld [vmem:[%s377] sm:$0xf]
    %v379 = vld [vmem:[%s377 + $0x4] sm:$0xf]
    %v380 = vld [vmem:[%s377 + $0x8] sm:$0xf]
    %v381 = vld [vmem:[%s377 + $0xc] sm:$0xf]
    %v386 = vunpack.c.l.b16 %v378
    %v387 = vunpack.c.l.b16 %v379
    %v388 = vunpack.c.l.b16 %v380
    %v389 = vunpack.c.l.b16 %v381
    %v390 = vpack.c.b16 %v387, %v386
    %v391 = vpack.c.b16 %v389, %v388
    %v393 = vsel %vm337, %v390, 0
    %v396 = vsel %vm337, %v391, 0
    %398 = vmatpush.bf16.msra.mxu0 0
    %399 = vmatpush.bf16.msra.mxu0 0
    %400 = vmatpush.bf16.msra.mxu0 0
    %401 = vmatpush.bf16.msra.mxu0 0
    %402 = vmatpush.bf16.msra.mxu0 %v332
    %403 = vmatpush.bf16.msra.mxu0 %v331
    %404 = vmatpush.bf16.msra.mxu0 %v330
    %405 = vmatpush.bf16.msra.mxu0 %v329
    %406 = vmatmul.bf16.gmra.mxu0 %v393
    %v407 = vpop.f32.mrf.mxu0
    %v408 = vadd.f32 0.0, %v407
    %v409 = vpop.f32.mrf.mxu0
    %v410 = vadd.f32 0.0, %v409
    %411 = vmatmul.bf16.gmra.mxu0 %v396
    %v412 = vpop.f32.mrf.mxu0
    %v413 = vadd.f32 0.0, %v412
    %v414 = vpop.f32.mrf.mxu0
    %v415 = vadd.f32 0.0, %v414
    %416 = vdwg.mxu0
    %v417 = vpack.c.bf16 %v410, %v408
    %v418 = vpack.c.bf16 %v415, %v413
    %s419 = scalar_lea.vmem %s3, 48
    %v420 = vld [vmem:[%s419] sm:$0xf]
    %v421 = vld [vmem:[%s419 + $0x4] sm:$0xf]
    %v422 = vld [vmem:[%s419 + $0x8] sm:$0xf]
    %v423 = vld [vmem:[%s419 + $0xc] sm:$0xf]
    %v424 = vld [vmem:[%s419 + $0x10] sm:$0xf]
    %v425 = vld [vmem:[%s419 + $0x14] sm:$0xf]
    %v426 = vld [vmem:[%s419 + $0x18] sm:$0xf]
    %v427 = vld [vmem:[%s419 + $0x1c] sm:$0xf]
    %v428 = vld [vmem:[%s419 + $0x20] sm:$0xf]
    %v429 = vld [vmem:[%s419 + $0x24] sm:$0xf]
    %v430 = vld [vmem:[%s419 + $0x28] sm:$0xf]
    %v431 = vld [vmem:[%s419 + $0x2c] sm:$0xf]
    %v444 = vunpack.c.l.b16 %v420
    %v445 = vunpack.c.l.b16 %v421
    %v446 = vunpack.c.l.b16 %v422
    %v447 = vunpack.c.l.b16 %v423
    %v448 = vunpack.c.l.b16 %v424
    %v449 = vunpack.c.l.b16 %v425
    %v450 = vunpack.c.l.b16 %v426
    %v451 = vunpack.c.l.b16 %v427
    %v452 = vunpack.c.l.b16 %v428
    %v453 = vunpack.c.l.b16 %v429
    %v454 = vunpack.c.l.b16 %v430
    %v455 = vunpack.c.l.b16 %v431
    %v456 = vpack.c.b16 %v445, %v444
    %v457 = vpack.c.b16 %v447, %v446
    %v458 = vpack.c.b16 %v449, %v448
    %v459 = vpack.c.b16 %v451, %v450
    %v460 = vpack.c.b16 %v453, %v452
    %v461 = vpack.c.b16 %v455, %v454
    %vm468 = vcmask 785408
    %v470 = vsel %vm468, %v417, 0
    %v473 = vsel %vm468, %v418, 0
    %475 = vmatpush.bf16.msra.mxu0 0
    %476 = vmatpush.bf16.msra.mxu0 0
    %477 = vmatpush.bf16.msra.mxu0 %v461
    %478 = vmatpush.bf16.msra.mxu0 %v460
    %479 = vmatpush.bf16.msra.mxu0 %v459
    %480 = vmatpush.bf16.msra.mxu0 %v458
    %481 = vmatpush.bf16.msra.mxu0 %v457
    %482 = vmatpush.bf16.msra.mxu0 %v456
    %483 = vmatmul.bf16.gmra.mxu0 %v470
    %v484 = vpop.f32.mrf.mxu0
    %v485 = vadd.f32 0.0, %v484
    %v486 = vpop.f32.mrf.mxu0
    %v487 = vadd.f32 0.0, %v486
    %488 = vmatmul.bf16.gmra.mxu0 %v473
    %v489 = vpop.f32.mrf.mxu0
    %v490 = vadd.f32 0.0, %v489
    %v491 = vpop.f32.mrf.mxu0
    %v492 = vadd.f32 0.0, %v491
    %493 = vdwg.mxu0
    %v506 = vunpack.c.l.b16 %v365
    %v507 = vunpack.c.l.b16 %v366
    %v508 = vunpack.c.l.b16 %v367
    %v509 = vunpack.c.l.b16 %v368
    %v510 = vunpack.c.l.b16 %v369
    %v511 = vunpack.c.l.b16 %v370
    %v512 = vunpack.c.l.b16 %v371
    %v513 = vunpack.c.l.b16 %v372
    %v514 = vunpack.c.l.b16 %v373
    %v515 = vunpack.c.l.b16 %v374
    %v516 = vunpack.c.l.b16 %v375
    %v517 = vunpack.c.l.b16 %v376
    %v518 = vpack.c.b16 %v507, %v506
    %v519 = vpack.c.b16 %v509, %v508
    %v520 = vpack.c.b16 %v511, %v510
    %v521 = vpack.c.b16 %v513, %v512
    %v522 = vpack.c.b16 %v515, %v514
    %v523 = vpack.c.b16 %v517, %v516
    %v531 = vsel %vm468, %v363, 0
    %v534 = vsel %vm468, %v364, 0
    %536 = vmatpush.bf16.msra.mxu0 0
    %537 = vmatpush.bf16.msra.mxu0 0
    %538 = vmatpush.bf16.msra.mxu0 %v523
    %539 = vmatpush.bf16.msra.mxu0 %v522
    %540 = vmatpush.bf16.msra.mxu0 %v521
    %541 = vmatpush.bf16.msra.mxu0 %v520
    %542 = vmatpush.bf16.msra.mxu0 %v519
    %543 = vmatpush.bf16.msra.mxu0 %v518
    %544 = vmatmul.bf16.gmra.mxu0 %v531
    %v545 = vpop.f32.mrf.mxu0
    %v546 = vadd.f32 %v485, %v545
    %v547 = vpop.f32.mrf.mxu0
    %v548 = vadd.f32 %v487, %v547
    %549 = vmatmul.bf16.gmra.mxu0 %v534
    %v550 = vpop.f32.mrf.mxu0
    %v551 = vadd.f32 %v490, %v550
    %v552 = vpop.f32.mrf.mxu0
    %v553 = vadd.f32 %v492, %v552
    %554 = vdwg.mxu0
    %s555 = scalar_lea.vmem [#allocation7], 32
    %v556 = vld [vmem:[%s555] sm:$0xf]
    %v557 = vld [vmem:[%s555 + $0x4] sm:$0xf]
    %v558 = vld [vmem:[%s555 + $0x8] sm:$0xf]
    %v559 = vld [vmem:[%s555 + $0xc] sm:$0xf]
    %v564 = vunpack.c.l.b16 %v556
    %v565 = vunpack.c.l.b16 %v557
    %v566 = vunpack.c.l.b16 %v558
    %v567 = vunpack.c.l.b16 %v559
    %v568 = vpack.c.b16 %v565, %v564
    %v569 = vpack.c.b16 %v567, %v566
    %v571 = vsel %vm337, %v568, 0
    %v574 = vsel %vm337, %v569, 0
    %576 = vmatpush.bf16.msra.mxu0 0
    %577 = vmatpush.bf16.msra.mxu0 0
    %578 = vmatpush.bf16.msra.mxu0 0
    %579 = vmatpush.bf16.msra.mxu0 0
    %580 = vmatpush.bf16.msra.mxu0 %v332
    %581 = vmatpush.bf16.msra.mxu0 %v331
    %582 = vmatpush.bf16.msra.mxu0 %v330
    %583 = vmatpush.bf16.msra.mxu0 %v329
    %584 = vmatmul.bf16.gmra.mxu0 %v571
    %v585 = vpop.f32.mrf.mxu0
    %v586 = vadd.f32 0.0, %v585
    %v587 = vpop.f32.mrf.mxu0
    %v588 = vadd.f32 0.0, %v587
    %589 = vmatmul.bf16.gmra.mxu0 %v574
    %v590 = vpop.f32.mrf.mxu0
    %v591 = vadd.f32 0.0, %v590
    %v592 = vpop.f32.mrf.mxu0
    %v593 = vadd.f32 0.0, %v592
    %594 = vdwg.mxu0
    %v595 = vpack.c.bf16 %v588, %v586
    %v596 = vpack.c.bf16 %v593, %v591
    %s597 = scalar_lea.vmem %s3, 96
    %v598 = vld [vmem:[%s597] sm:$0xf]
    %v599 = vld [vmem:[%s597 + $0x4] sm:$0xf]
    %v600 = vld [vmem:[%s597 + $0x8] sm:$0xf]
    %v601 = vld [vmem:[%s597 + $0xc] sm:$0xf]
    %v602 = vld [vmem:[%s597 + $0x10] sm:$0xf]
    %v603 = vld [vmem:[%s597 + $0x14] sm:$0xf]
    %v604 = vld [vmem:[%s597 + $0x18] sm:$0xf]
    %v605 = vld [vmem:[%s597 + $0x1c] sm:$0xf]
    %v606 = vld [vmem:[%s597 + $0x20] sm:$0xf]
    %v607 = vld [vmem:[%s597 + $0x24] sm:$0xf]
    %v608 = vld [vmem:[%s597 + $0x28] sm:$0xf]
    %v609 = vld [vmem:[%s597 + $0x2c] sm:$0xf]
    %v622 = vunpack.c.l.b16 %v598
    %v623 = vunpack.c.l.b16 %v599
    %v624 = vunpack.c.l.b16 %v600
    %v625 = vunpack.c.l.b16 %v601
    %v626 = vunpack.c.l.b16 %v602
    %v627 = vunpack.c.l.b16 %v603
    %v628 = vunpack.c.l.b16 %v604
    %v629 = vunpack.c.l.b16 %v605
    %v630 = vunpack.c.l.b16 %v606
    %v631 = vunpack.c.l.b16 %v607
    %v632 = vunpack.c.l.b16 %v608
    %v633 = vunpack.c.l.b16 %v609
    %v634 = vpack.c.b16 %v623, %v622
    %v635 = vpack.c.b16 %v625, %v624
    %v636 = vpack.c.b16 %v627, %v626
    %v637 = vpack.c.b16 %v629, %v628
    %v638 = vpack.c.b16 %v631, %v630
    %v639 = vpack.c.b16 %v633, %v632
    %v647 = vsel %vm468, %v595, 0
    %v650 = vsel %vm468, %v596, 0
    %652 = vmatpush.bf16.msra.mxu0 0
    %653 = vmatpush.bf16.msra.mxu0 0
    %654 = vmatpush.bf16.msra.mxu0 %v639
    %655 = vmatpush.bf16.msra.mxu0 %v638
    %656 = vmatpush.bf16.msra.mxu0 %v637
    %657 = vmatpush.bf16.msra.mxu0 %v636
    %658 = vmatpush.bf16.msra.mxu0 %v635
    %659 = vmatpush.bf16.msra.mxu0 %v634
    %660 = vmatmul.bf16.gmra.mxu0 %v647
    %v661 = vpop.f32.mrf.mxu0
    %v662 = vadd.f32 0.0, %v661
    %v663 = vpop.f32.mrf.mxu0
    %v664 = vadd.f32 0.0, %v663
    %665 = vmatmul.bf16.gmra.mxu0 %v650
    %v666 = vpop.f32.mrf.mxu0
    %v667 = vadd.f32 0.0, %v666
    %v668 = vpop.f32.mrf.mxu0
    %v669 = vadd.f32 0.0, %v668
    %670 = vdwg.mxu0
    %v671 = vadd.f32 %v546, %v662
    %v672 = vadd.f32 %v548, %v664
    %v673 = vadd.f32 %v551, %v667
    %v674 = vadd.f32 %v553, %v669
    %s675 = scalar_lea.vmem [#allocation7], 48
    %v676 = vld [vmem:[%s675] sm:$0xf]
    %v677 = vld [vmem:[%s675 + $0x4] sm:$0xf]
    %v678 = vld [vmem:[%s675 + $0x8] sm:$0xf]
    %v679 = vld [vmem:[%s675 + $0xc] sm:$0xf]
    %v684 = vunpack.c.l.b16 %v676
    %v685 = vunpack.c.l.b16 %v677
    %v686 = vunpack.c.l.b16 %v678
    %v687 = vunpack.c.l.b16 %v679
    %v688 = vpack.c.b16 %v685, %v684
    %v689 = vpack.c.b16 %v687, %v686
    %v691 = vsel %vm337, %v688, 0
    %v694 = vsel %vm337, %v689, 0
    %696 = vmatpush.bf16.msra.mxu0 0
    %697 = vmatpush.bf16.msra.mxu0 0
    %698 = vmatpush.bf16.msra.mxu0 0
    %699 = vmatpush.bf16.msra.mxu0 0
    %700 = vmatpush.bf16.msra.mxu0 %v332
    %701 = vmatpush.bf16.msra.mxu0 %v331
    %702 = vmatpush.bf16.msra.mxu0 %v330
    %703 = vmatpush.bf16.msra.mxu0 %v329
    %704 = vmatmul.bf16.gmra.mxu0 %v691
    %v705 = vpop.f32.mrf.mxu0
    %v706 = vadd.f32 0.0, %v705
    %v707 = vpop.f32.mrf.mxu0
    %v708 = vadd.f32 0.0, %v707
    %709 = vmatmul.bf16.gmra.mxu0 %v694
    %v710 = vpop.f32.mrf.mxu0
    %v711 = vadd.f32 0.0, %v710
    %v712 = vpop.f32.mrf.mxu0
    %v713 = vadd.f32 0.0, %v712
    %714 = vdwg.mxu0
    %v715 = vpack.c.bf16 %v708, %v706
    %v716 = vpack.c.bf16 %v713, %v711
    %s717 = scalar_lea.vmem %s3, 144
    %v718 = vld [vmem:[%s717] sm:$0xf]
    %v719 = vld [vmem:[%s717 + $0x4] sm:$0xf]
    %v720 = vld [vmem:[%s717 + $0x8] sm:$0xf]
    %v721 = vld [vmem:[%s717 + $0xc] sm:$0xf]
    %v722 = vld [vmem:[%s717 + $0x10] sm:$0xf]
    %v723 = vld [vmem:[%s717 + $0x14] sm:$0xf]
    %v724 = vld [vmem:[%s717 + $0x18] sm:$0xf]
    %v725 = vld [vmem:[%s717 + $0x1c] sm:$0xf]
    %v726 = vld [vmem:[%s717 + $0x20] sm:$0xf]
    %v727 = vld [vmem:[%s717 + $0x24] sm:$0xf]
    %v728 = vld [vmem:[%s717 + $0x28] sm:$0xf]
    %v729 = vld [vmem:[%s717 + $0x2c] sm:$0xf]
    %v742 = vunpack.c.l.b16 %v718
    %v743 = vunpack.c.l.b16 %v719
    %v744 = vunpack.c.l.b16 %v720
    %v745 = vunpack.c.l.b16 %v721
    %v746 = vunpack.c.l.b16 %v722
    %v747 = vunpack.c.l.b16 %v723
    %v748 = vunpack.c.l.b16 %v724
    %v749 = vunpack.c.l.b16 %v725
    %v750 = vunpack.c.l.b16 %v726
    %v751 = vunpack.c.l.b16 %v727
    %v752 = vunpack.c.l.b16 %v728
    %v753 = vunpack.c.l.b16 %v729
    %v754 = vpack.c.b16 %v743, %v742
    %v755 = vpack.c.b16 %v745, %v744
    %v756 = vpack.c.b16 %v747, %v746
    %v757 = vpack.c.b16 %v749, %v748
    %v758 = vpack.c.b16 %v751, %v750
    %v759 = vpack.c.b16 %v753, %v752
    %v767 = vsel %vm468, %v715, 0
    %v770 = vsel %vm468, %v716, 0
    %772 = vmatpush.bf16.msra.mxu0 0
    %773 = vmatpush.bf16.msra.mxu0 0
    %774 = vmatpush.bf16.msra.mxu0 %v759
    %775 = vmatpush.bf16.msra.mxu0 %v758
    %776 = vmatpush.bf16.msra.mxu0 %v757
    %777 = vmatpush.bf16.msra.mxu0 %v756
    %778 = vmatpush.bf16.msra.mxu0 %v755
    %779 = vmatpush.bf16.msra.mxu0 %v754
    %780 = vmatmul.bf16.gmra.mxu0 %v767
    %v781 = vpop.f32.mrf.mxu0
    %v782 = vadd.f32 0.0, %v781
    %v783 = vpop.f32.mrf.mxu0
    %v784 = vadd.f32 0.0, %v783
    %785 = vmatmul.bf16.gmra.mxu0 %v770
    %v786 = vpop.f32.mrf.mxu0
    %v787 = vadd.f32 0.0, %v786
    %v788 = vpop.f32.mrf.mxu0
    %v789 = vadd.f32 0.0, %v788
    %790 = vdwg.mxu0
    %v791 = vadd.f32 %v671, %v782
    %v792 = vadd.f32 %v672, %v784
    %v793 = vadd.f32 %v673, %v787
    %v794 = vadd.f32 %v674, %v789
    %vm795 = vcmp.ge.f32.partialorder %v791, 0.0
    %vm796 = vcmp.ge.f32.partialorder %v792, 0.0
    %vm797 = vcmp.ge.f32.partialorder %v793, 0.0
    %vm798 = vcmp.ge.f32.partialorder %v794, 0.0
    %v799 = vmul.f32 %v791, 0.1
    %v800 = vmul.f32 %v792, 0.1
    %v801 = vmul.f32 %v793, 0.1
    %v802 = vmul.f32 %v794, 0.1
    %v803 = vsel %vm795, %v791, %v799
    %v804 = vsel %vm796, %v792, %v800
    %v805 = vsel %vm797, %v793, %v801
    %v806 = vsel %vm798, %v794, %v802
    %v807 = vpack.c.bf16 %v804, %v803
    %v808 = vpack.c.bf16 %v806, %v805
    %v809 = vld [vmem:[#allocation10] sm:$0xf]
    %v810 = vld [vmem:[#allocation10 + $0x4] sm:$0xf]
    %v813 = vunpack.c.l.b16 %v809
    %v814 = vunpack.c.l.b16 %v810
    %v815 = vpack.c.b16 %v814, %v813
    %vm816 = vcmask 261120
    %v818 = vsel %vm816, %v815, 0
    %820 = vmatpush.bf16.msra.mxu0 0
    %821 = vmatpush.bf16.msra.mxu0 0
    %822 = vmatpush.bf16.msra.mxu0 0
    %823 = vmatpush.bf16.msra.mxu0 0
    %824 = vmatpush.bf16.msra.mxu0 0
    %825 = vmatpush.bf16.msra.mxu0 0
    %826 = vmatpush.bf16.msra.mxu0 %v808
    %827 = vmatpush.bf16.msra.mxu0 %v807
    %828 = vmatmul.bf16.gmra.mxu0 %v818
    %v829 = vpop.f32.mrf.mxu0
    %v830 = vadd.f32 0.0, %v829
    %v831 = vpop.f32.mrf.mxu0
    %v832 = vadd.f32 0.0, %v831
    %833 = vdwg.mxu0
    %v834 = vpack.c.bf16 %v832, %v830
    %v835 = vld [vmem:[%s5] sm:$0xf]
    %v836 = vld [vmem:[%s5 + $0x4] sm:$0xf]
    %v837 = vld [vmem:[%s5 + $0x8] sm:$0xf]
    %v838 = vld [vmem:[%s5 + $0xc] sm:$0xf]
    %v839 = vld [vmem:[%s5 + $0x10] sm:$0xf]
    %v840 = vld [vmem:[%s5 + $0x14] sm:$0xf]
    %v841 = vld [vmem:[%s5 + $0x18] sm:$0xf]
    %v842 = vld [vmem:[%s5 + $0x1c] sm:$0xf]
    %v843 = vld [vmem:[%s5 + $0x20] sm:$0xf]
    %v844 = vld [vmem:[%s5 + $0x24] sm:$0xf]
    %v845 = vld [vmem:[%s5 + $0x28] sm:$0xf]
    %v846 = vld [vmem:[%s5 + $0x2c] sm:$0xf]
    %v847 = vld [vmem:[%s5 + $0x30] sm:$0xf]
    %v848 = vld [vmem:[%s5 + $0x34] sm:$0xf]
    %v849 = vld [vmem:[%s5 + $0x38] sm:$0xf]
    %v850 = vld [vmem:[%s5 + $0x3c] sm:$0xf]
    %s851 = scalar_lea.vmem [#allocation10], 8
    %v852 = vld [vmem:[%s851] sm:$0xf]
    %v853 = vld [vmem:[%s851 + $0x4] sm:$0xf]
    %v856 = vunpack.c.l.b16 %v852
    %v857 = vunpack.c.l.b16 %v853
    %v858 = vpack.c.b16 %v857, %v856
    %v860 = vsel %vm816, %v858, 0
    %862 = vmatpush.bf16.msra.mxu0 0
    %863 = vmatpush.bf16.msra.mxu0 0
    %864 = vmatpush.bf16.msra.mxu0 0
    %865 = vmatpush.bf16.msra.mxu0 0
    %866 = vmatpush.bf16.msra.mxu0 0
    %867 = vmatpush.bf16.msra.mxu0 0
    %868 = vmatpush.bf16.msra.mxu0 %v808
    %869 = vmatpush.bf16.msra.mxu0 %v807
    %870 = vmatmul.bf16.gmra.mxu0 %v860
    %v871 = vpop.f32.mrf.mxu0
    %v872 = vadd.f32 0.0, %v871
    %v873 = vpop.f32.mrf.mxu0
    %v874 = vadd.f32 0.0, %v873
    %875 = vdwg.mxu0
    %v876 = vpack.c.bf16 %v874, %v872
    %s877 = scalar_lea.vmem %s5, 64
    %v878 = vld [vmem:[%s877] sm:$0xf]
    %v879 = vld [vmem:[%s877 + $0x4] sm:$0xf]
    %v880 = vld [vmem:[%s877 + $0x8] sm:$0xf]
    %v881 = vld [vmem:[%s877 + $0xc] sm:$0xf]
    %v882 = vld [vmem:[%s877 + $0x10] sm:$0xf]
    %v883 = vld [vmem:[%s877 + $0x14] sm:$0xf]
    %v884 = vld [vmem:[%s877 + $0x18] sm:$0xf]
    %v885 = vld [vmem:[%s877 + $0x1c] sm:$0xf]
    %v886 = vld [vmem:[%s877 + $0x20] sm:$0xf]
    %v887 = vld [vmem:[%s877 + $0x24] sm:$0xf]
    %v888 = vld [vmem:[%s877 + $0x28] sm:$0xf]
    %v889 = vld [vmem:[%s877 + $0x2c] sm:$0xf]
    %v890 = vld [vmem:[%s877 + $0x30] sm:$0xf]
    %v891 = vld [vmem:[%s877 + $0x34] sm:$0xf]
    %v892 = vld [vmem:[%s877 + $0x38] sm:$0xf]
    %v893 = vld [vmem:[%s877 + $0x3c] sm:$0xf]
    %v910 = vunpack.c.l.b16 %v878
    %v911 = vunpack.c.l.b16 %v879
    %v912 = vunpack.c.l.b16 %v880
    %v913 = vunpack.c.l.b16 %v881
    %v914 = vunpack.c.l.b16 %v882
    %v915 = vunpack.c.l.b16 %v883
    %v916 = vunpack.c.l.b16 %v884
    %v917 = vunpack.c.l.b16 %v885
    %v918 = vunpack.c.l.b16 %v886
    %v919 = vunpack.c.l.b16 %v887
    %v920 = vunpack.c.l.b16 %v888
    %v921 = vunpack.c.l.b16 %v889
    %v922 = vunpack.c.l.b16 %v890
    %v923 = vunpack.c.l.b16 %v891
    %v924 = vunpack.c.l.b16 %v892
    %v925 = vunpack.c.l.b16 %v893
    %v926 = vpack.c.b16 %v911, %v910
    %v927 = vpack.c.b16 %v913, %v912
    %v928 = vpack.c.b16 %v915, %v914
    %v929 = vpack.c.b16 %v917, %v916
    %v930 = vpack.c.b16 %v919, %v918
    %v931 = vpack.c.b16 %v921, %v920
    %v932 = vpack.c.b16 %v923, %v922
    %v933 = vpack.c.b16 %v925, %v924
    %942 = vmatpush.bf16.msra.mxu0 %v933
    %943 = vmatpush.bf16.msra.mxu0 %v932
    %944 = vmatpush.bf16.msra.mxu0 %v931
    %945 = vmatpush.bf16.msra.mxu0 %v930
    %946 = vmatpush.bf16.msra.mxu0 %v929
    %947 = vmatpush.bf16.msra.mxu0 %v928
    %948 = vmatpush.bf16.msra.mxu0 %v927
    %949 = vmatpush.bf16.msra.mxu0 %v926
    %950 = vmatmul.bf16.gmra.mxu0 %v876
    %v951 = vpop.f32.mrf.mxu0
    %v952 = vadd.f32 0.0, %v951
    %v953 = vpop.f32.mrf.mxu0
    %v954 = vadd.f32 0.0, %v953
    %955 = vdwg.mxu0
    %v972 = vunpack.c.l.b16 %v835
    %v973 = vunpack.c.l.b16 %v836
    %v974 = vunpack.c.l.b16 %v837
    %v975 = vunpack.c.l.b16 %v838
    %v976 = vunpack.c.l.b16 %v839
    %v977 = vunpack.c.l.b16 %v840
    %v978 = vunpack.c.l.b16 %v841
    %v979 = vunpack.c.l.b16 %v842
    %v980 = vunpack.c.l.b16 %v843
    %v981 = vunpack.c.l.b16 %v844
    %v982 = vunpack.c.l.b16 %v845
    %v983 = vunpack.c.l.b16 %v846
    %v984 = vunpack.c.l.b16 %v847
    %v985 = vunpack.c.l.b16 %v848
    %v986 = vunpack.c.l.b16 %v849
    %v987 = vunpack.c.l.b16 %v850
    %v988 = vpack.c.b16 %v973, %v972
    %v989 = vpack.c.b16 %v975, %v974
    %v990 = vpack.c.b16 %v977, %v976
    %v991 = vpack.c.b16 %v979, %v978
    %v992 = vpack.c.b16 %v981, %v980
    %v993 = vpack.c.b16 %v983, %v982
    %v994 = vpack.c.b16 %v985, %v984
    %v995 = vpack.c.b16 %v987, %v986
    %1004 = vmatpush.bf16.msra.mxu0 %v995
    %1005 = vmatpush.bf16.msra.mxu0 %v994
    %1006 = vmatpush.bf16.msra.mxu0 %v993
    %1007 = vmatpush.bf16.msra.mxu0 %v992
    %1008 = vmatpush.bf16.msra.mxu0 %v991
    %1009 = vmatpush.bf16.msra.mxu0 %v990
    %1010 = vmatpush.bf16.msra.mxu0 %v989
    %1011 = vmatpush.bf16.msra.mxu0 %v988
    %1012 = vmatmul.bf16.gmra.mxu0 %v834
    %v1013 = vpop.f32.mrf.mxu0
    %v1014 = vadd.f32 %v952, %v1013
    %v1015 = vpop.f32.mrf.mxu0
    %v1016 = vadd.f32 %v954, %v1015
    %1017 = vdwg.mxu0
    %s1018 = scalar_lea.vmem [#allocation10], 16
    %v1019 = vld [vmem:[%s1018] sm:$0xf]
    %v1020 = vld [vmem:[%s1018 + $0x4] sm:$0xf]
    %v1023 = vunpack.c.l.b16 %v1019
    %v1024 = vunpack.c.l.b16 %v1020
    %v1025 = vpack.c.b16 %v1024, %v1023
    %v1027 = vsel %vm816, %v1025, 0
    %1029 = vmatpush.bf16.msra.mxu0 0
    %1030 = vmatpush.bf16.msra.mxu0 0
    %1031 = vmatpush.bf16.msra.mxu0 0
    %1032 = vmatpush.bf16.msra.mxu0 0
    %1033 = vmatpush.bf16.msra.mxu0 0
    %1034 = vmatpush.bf16.msra.mxu0 0
    %1035 = vmatpush.bf16.msra.mxu0 %v808
    %1036 = vmatpush.bf16.msra.mxu0 %v807
    %1037 = vmatmul.bf16.gmra.mxu0 %v1027
    %v1038 = vpop.f32.mrf.mxu0
    %v1039 = vadd.f32 0.0, %v1038
    %v1040 = vpop.f32.mrf.mxu0
    %v1041 = vadd.f32 0.0, %v1040
    %1042 = vdwg.mxu0
    %v1043 = vpack.c.bf16 %v1041, %v1039
    %s1044 = scalar_lea.vmem %s5, 128
    %v1045 = vld [vmem:[%s1044] sm:$0xf]
    %v1046 = vld [vmem:[%s1044 + $0x4] sm:$0xf]
    %v1047 = vld [vmem:[%s1044 + $0x8] sm:$0xf]
    %v1048 = vld [vmem:[%s1044 + $0xc] sm:$0xf]
    %v1049 = vld [vmem:[%s1044 + $0x10] sm:$0xf]
    %v1050 = vld [vmem:[%s1044 + $0x14] sm:$0xf]
    %v1051 = vld [vmem:[%s1044 + $0x18] sm:$0xf]
    %v1052 = vld [vmem:[%s1044 + $0x1c] sm:$0xf]
    %v1053 = vld [vmem:[%s1044 + $0x20] sm:$0xf]
    %v1054 = vld [vmem:[%s1044 + $0x24] sm:$0xf]
    %v1055 = vld [vmem:[%s1044 + $0x28] sm:$0xf]
    %v1056 = vld [vmem:[%s1044 + $0x2c] sm:$0xf]
    %v1057 = vld [vmem:[%s1044 + $0x30] sm:$0xf]
    %v1058 = vld [vmem:[%s1044 + $0x34] sm:$0xf]
    %v1059 = vld [vmem:[%s1044 + $0x38] sm:$0xf]
    %v1060 = vld [vmem:[%s1044 + $0x3c] sm:$0xf]
    %v1077 = vunpack.c.l.b16 %v1045
    %v1078 = vunpack.c.l.b16 %v1046
    %v1079 = vunpack.c.l.b16 %v1047
    %v1080 = vunpack.c.l.b16 %v1048
    %v1081 = vunpack.c.l.b16 %v1049
    %v1082 = vunpack.c.l.b16 %v1050
    %v1083 = vunpack.c.l.b16 %v1051
    %v1084 = vunpack.c.l.b16 %v1052
    %v1085 = vunpack.c.l.b16 %v1053
    %v1086 = vunpack.c.l.b16 %v1054
    %v1087 = vunpack.c.l.b16 %v1055
    %v1088 = vunpack.c.l.b16 %v1056
    %v1089 = vunpack.c.l.b16 %v1057
    %v1090 = vunpack.c.l.b16 %v1058
    %v1091 = vunpack.c.l.b16 %v1059
    %v1092 = vunpack.c.l.b16 %v1060
    %v1093 = vpack.c.b16 %v1078, %v1077
    %v1094 = vpack.c.b16 %v1080, %v1079
    %v1095 = vpack.c.b16 %v1082, %v1081
    %v1096 = vpack.c.b16 %v1084, %v1083
    %v1097 = vpack.c.b16 %v1086, %v1085
    %v1098 = vpack.c.b16 %v1088, %v1087
    %v1099 = vpack.c.b16 %v1090, %v1089
    %v1100 = vpack.c.b16 %v1092, %v1091
    %1109 = vmatpush.bf16.msra.mxu0 %v1100
    %1110 = vmatpush.bf16.msra.mxu0 %v1099
    %1111 = vmatpush.bf16.msra.mxu0 %v1098
    %1112 = vmatpush.bf16.msra.mxu0 %v1097
    %1113 = vmatpush.bf16.msra.mxu0 %v1096
    %1114 = vmatpush.bf16.msra.mxu0 %v1095
    %1115 = vmatpush.bf16.msra.mxu0 %v1094
    %1116 = vmatpush.bf16.msra.mxu0 %v1093
    %1117 = vmatmul.bf16.gmra.mxu0 %v1043
    %v1118 = vpop.f32.mrf.mxu0
    %v1119 = vadd.f32 0.0, %v1118
    %v1120 = vpop.f32.mrf.mxu0
    %v1121 = vadd.f32 0.0, %v1120
    %1122 = vdwg.mxu0
    %v1123 = vadd.f32 %v1014, %v1119
    %v1124 = vadd.f32 %v1016, %v1121
    %s1125 = scalar_lea.vmem [#allocation10], 24
    %v1126 = vld [vmem:[%s1125] sm:$0xf]
    %v1127 = vld [vmem:[%s1125 + $0x4] sm:$0xf]
    %v1130 = vunpack.c.l.b16 %v1126
    %v1131 = vunpack.c.l.b16 %v1127
    %v1132 = vpack.c.b16 %v1131, %v1130
    %v1134 = vsel %vm816, %v1132, 0
    %1136 = vmatpush.bf16.msra.mxu0 0
    %1137 = vmatpush.bf16.msra.mxu0 0
    %1138 = vmatpush.bf16.msra.mxu0 0
    %1139 = vmatpush.bf16.msra.mxu0 0
    %1140 = vmatpush.bf16.msra.mxu0 0
    %1141 = vmatpush.bf16.msra.mxu0 0
    %1142 = vmatpush.bf16.msra.mxu0 %v808
    %1143 = vmatpush.bf16.msra.mxu0 %v807
    %1144 = vmatmul.bf16.gmra.mxu0 %v1134
    %v1145 = vpop.f32.mrf.mxu0
    %v1146 = vadd.f32 0.0, %v1145
    %v1147 = vpop.f32.mrf.mxu0
    %v1148 = vadd.f32 0.0, %v1147
    %1149 = vdwg.mxu0
    %v1150 = vpack.c.bf16 %v1148, %v1146
    %s1151 = scalar_lea.vmem %s5, 192
    %v1152 = vld [vmem:[%s1151] sm:$0xf]
    %v1153 = vld [vmem:[%s1151 + $0x4] sm:$0xf]
    %v1154 = vld [vmem:[%s1151 + $0x8] sm:$0xf]
    %v1155 = vld [vmem:[%s1151 + $0xc] sm:$0xf]
    %v1156 = vld [vmem:[%s1151 + $0x10] sm:$0xf]
    %v1157 = vld [vmem:[%s1151 + $0x14] sm:$0xf]
    %v1158 = vld [vmem:[%s1151 + $0x18] sm:$0xf]
    %v1159 = vld [vmem:[%s1151 + $0x1c] sm:$0xf]
    %v1160 = vld [vmem:[%s1151 + $0x20] sm:$0xf]
    %v1161 = vld [vmem:[%s1151 + $0x24] sm:$0xf]
    %v1162 = vld [vmem:[%s1151 + $0x28] sm:$0xf]
    %v1163 = vld [vmem:[%s1151 + $0x2c] sm:$0xf]
    %v1164 = vld [vmem:[%s1151 + $0x30] sm:$0xf]
    %v1165 = vld [vmem:[%s1151 + $0x34] sm:$0xf]
    %v1166 = vld [vmem:[%s1151 + $0x38] sm:$0xf]
    %v1167 = vld [vmem:[%s1151 + $0x3c] sm:$0xf]
    %v1184 = vunpack.c.l.b16 %v1152
    %v1185 = vunpack.c.l.b16 %v1153
    %v1186 = vunpack.c.l.b16 %v1154
    %v1187 = vunpack.c.l.b16 %v1155
    %v1188 = vunpack.c.l.b16 %v1156
    %v1189 = vunpack.c.l.b16 %v1157
    %v1190 = vunpack.c.l.b16 %v1158
    %v1191 = vunpack.c.l.b16 %v1159
    %v1192 = vunpack.c.l.b16 %v1160
    %v1193 = vunpack.c.l.b16 %v1161
    %v1194 = vunpack.c.l.b16 %v1162
    %v1195 = vunpack.c.l.b16 %v1163
    %v1196 = vunpack.c.l.b16 %v1164
    %v1197 = vunpack.c.l.b16 %v1165
    %v1198 = vunpack.c.l.b16 %v1166
    %v1199 = vunpack.c.l.b16 %v1167
    %v1200 = vpack.c.b16 %v1185, %v1184
    %v1201 = vpack.c.b16 %v1187, %v1186
    %v1202 = vpack.c.b16 %v1189, %v1188
    %v1203 = vpack.c.b16 %v1191, %v1190
    %v1204 = vpack.c.b16 %v1193, %v1192
    %v1205 = vpack.c.b16 %v1195, %v1194
    %v1206 = vpack.c.b16 %v1197, %v1196
    %v1207 = vpack.c.b16 %v1199, %v1198
    %1216 = vmatpush.bf16.msra.mxu0 %v1207
    %1217 = vmatpush.bf16.msra.mxu0 %v1206
    %1218 = vmatpush.bf16.msra.mxu0 %v1205
    %1219 = vmatpush.bf16.msra.mxu0 %v1204
    %1220 = vmatpush.bf16.msra.mxu0 %v1203
    %1221 = vmatpush.bf16.msra.mxu0 %v1202
    %1222 = vmatpush.bf16.msra.mxu0 %v1201
    %1223 = vmatpush.bf16.msra.mxu0 %v1200
    %1224 = vmatmul.bf16.gmra.mxu0 %v1150
    %v1225 = vpop.f32.mrf.mxu0
    %v1226 = vadd.f32 0.0, %v1225
    %v1227 = vpop.f32.mrf.mxu0
    %v1228 = vadd.f32 0.0, %v1227
    %1229 = vdwg.mxu0
    %v1230 = vadd.f32 %v1123, %v1226
    %v1231 = vadd.f32 %v1124, %v1228
    %vm1232 = vcmp.ge.f32.partialorder %v1230, 0.0
    %vm1233 = vcmp.ge.f32.partialorder %v1231, 0.0
    %v1234 = vmul.f32 %v1230, 0.1
    %v1235 = vmul.f32 %v1231, 0.1
    %v1236 = vsel %vm1232, %v1230, %v1234
    %v1237 = vsel %vm1233, %v1231, %v1235
    %v1238 = vpack.c.bf16 %v1236, %v1236
    %v1239 = vpack.c.bf16 %v1237, %v1237
    %v1240 = vld [vmem:[%s1] sm:$0x3]
    %v1241 = vpack.c.bf16 %v1240, %v1240
    %v1242 = vld [vmem:[#allocation12] sm:$0xff]
    %v1243 = vld [vmem:[#allocation12 + $0x8] sm:$0xff]
    %v1244 = vld [vmem:[#allocation12 + $0x10] sm:$0xff]
    %v1245 = vld [vmem:[#allocation12 + $0x18] sm:$0xff]
    %v1246 = vld [vmem:[%s7] sm:$0xf]
    %v1248 = vperm.slane %v1246, 0
    %v1249 = vperm.slane %v1246, 1
    %v1250 = vperm.slane %v1246, 2
    %v1251 = vperm.slane %v1246, 3
    %v1260 = vunpack.c.l.b16 %v1242
    %v1261 = vunpack.c.h.b16 %v1242
    %v1262 = vunpack.c.l.b16 %v1243
    %v1263 = vunpack.c.h.b16 %v1243
    %v1264 = vunpack.c.l.b16 %v1244
    %v1265 = vunpack.c.h.b16 %v1244
    %v1266 = vunpack.c.l.b16 %v1245
    %v1267 = vunpack.c.h.b16 %v1245
    %v1268 = vpack.c.b16 %v1264, %v1260
    %v1269 = vpack.c.b16 %v1265, %v1261
    %v1270 = vpack.c.b16 %v1266, %v1262
    %v1271 = vpack.c.b16 %v1267, %v1263
    %vm1276 = vcmask 130048
    %v1278 = vsel %vm1276, %v1241, 0
    %1280 = vmatpush.bf16.msra.mxu0 0
    %1281 = vmatpush.bf16.msra.mxu0 0
    %1282 = vmatpush.bf16.msra.mxu0 0
    %1283 = vmatpush.bf16.msra.mxu0 0
    %1284 = vmatpush.bf16.msra.mxu0 0
    %1285 = vmatpush.bf16.msra.mxu0 0
    %1286 = vmatpush.bf16.msra.mxu0 0
    %1287 = vmatpush.bf16.msra.mxu0 %v1268
    %1288 = vmatmul.bf16.gmra.mxu0 %v1278
    %v1289 = vpop.f32.mrf.mxu0
    %v1290 = vadd.f32 %v1248, %v1289
    %v1291 = vpop.f32.mrf.mxu0
    %1292 = vdwg.mxu0
    %1293 = vmatpush.bf16.msra.mxu0 0
    %1294 = vmatpush.bf16.msra.mxu0 0
    %1295 = vmatpush.bf16.msra.mxu0 0
    %1296 = vmatpush.bf16.msra.mxu0 0
    %1297 = vmatpush.bf16.msra.mxu0 0
    %1298 = vmatpush.bf16.msra.mxu0 0
    %1299 = vmatpush.bf16.msra.mxu0 0
    %1300 = vmatpush.bf16.msra.mxu0 %v1269
    %1301 = vmatmul.bf16.gmra.mxu0 %v1278
    %v1302 = vpop.f32.mrf.mxu0
    %v1303 = vadd.f32 %v1249, %v1302
    %v1304 = vpop.f32.mrf.mxu0
    %1305 = vdwg.mxu0
    %1306 = vmatpush.bf16.msra.mxu0 0
    %1307 = vmatpush.bf16.msra.mxu0 0
    %1308 = vmatpush.bf16.msra.mxu0 0
    %1309 = vmatpush.bf16.msra.mxu0 0
    %1310 = vmatpush.bf16.msra.mxu0 0
    %1311 = vmatpush.bf16.msra.mxu0 0
    %1312 = vmatpush.bf16.msra.mxu0 0
    %1313 = vmatpush.bf16.msra.mxu0 %v1270
    %1314 = vmatmul.bf16.gmra.mxu0 %v1278
    %v1315 = vpop.f32.mrf.mxu0
    %v1316 = vadd.f32 %v1250, %v1315
    %v1317 = vpop.f32.mrf.mxu0
    %1318 = vdwg.mxu0
    %1319 = vmatpush.bf16.msra.mxu0 0
    %1320 = vmatpush.bf16.msra.mxu0 0
    %1321 = vmatpush.bf16.msra.mxu0 0
    %1322 = vmatpush.bf16.msra.mxu0 0
    %1323 = vmatpush.bf16.msra.mxu0 0
    %1324 = vmatpush.bf16.msra.mxu0 0
    %1325 = vmatpush.bf16.msra.mxu0 0
    %1326 = vmatpush.bf16.msra.mxu0 %v1271
    %1327 = vmatmul.bf16.gmra.mxu0 %v1278
    %v1328 = vpop.f32.mrf.mxu0
    %v1329 = vadd.f32 %v1251, %v1328
    %v1330 = vpop.f32.mrf.mxu0
    %1331 = vdwg.mxu0
    %vm1332 = vcmp.ge.f32.partialorder %v1290, 0.0
    %vm1333 = vcmp.ge.f32.partialorder %v1303, 0.0
    %vm1334 = vcmp.ge.f32.partialorder %v1316, 0.0
    %vm1335 = vcmp.ge.f32.partialorder %v1329, 0.0
    %v1336 = vmul.f32 %v1290, 0.1
    %v1337 = vmul.f32 %v1303, 0.1
    %v1338 = vmul.f32 %v1316, 0.1
    %v1339 = vmul.f32 %v1329, 0.1
    %v1340 = vsel %vm1332, %v1290, %v1336
    %v1341 = vsel %vm1333, %v1303, %v1337
    %v1342 = vsel %vm1334, %v1316, %v1338
    %v1343 = vsel %vm1335, %v1329, %v1339
    %v1344 = vpack.c.bf16 %v1340, %v1340
    %v1345 = vpack.c.bf16 %v1341, %v1341
    %v1346 = vpack.c.bf16 %v1342, %v1342
    %v1347 = vpack.c.bf16 %v1343, %v1343
    %s1348 = smul.u32 4, 64
    %s1349 = smul.u32 %s1348, 8
    %s1350 = sshll.u32 %s1349, 4
    %1351 = dma.done [#allocation5], %s1350
    %s1352 = sshll.u32 %s1349, 4
    %1353 = dma.done %s133, %s1352
    %v1354 = vld [vmem:[#allocation4] sm:$0xff]
    %v1355 = vld [vmem:[#allocation4 + $0x8] sm:$0xff]
    %v1356 = vld [vmem:[#allocation4 + $0x10] sm:$0xff]
    %v1357 = vld [vmem:[#allocation4 + $0x18] sm:$0xff]
    %v1358 = vld [vmem:[#allocation4 + $0x20] sm:$0xff]
    %v1359 = vld [vmem:[#allocation4 + $0x28] sm:$0xff]
    %v1360 = vld [vmem:[#allocation4 + $0x30] sm:$0xff]
    %v1361 = vld [vmem:[#allocation4 + $0x38] sm:$0xff]
    %v1362 = vld [vmem:[#allocation4 + $0x40] sm:$0xff]
    %v1363 = vld [vmem:[#allocation4 + $0x48] sm:$0xff]
    %v1364 = vld [vmem:[#allocation4 + $0x50] sm:$0xff]
    %v1365 = vld [vmem:[#allocation4 + $0x58] sm:$0xff]
    %v1366 = vld [vmem:[#allocation4 + $0x60] sm:$0xff]
    %v1367 = vld [vmem:[#allocation4 + $0x68] sm:$0xff]
    %v1368 = vld [vmem:[#allocation4 + $0x70] sm:$0xff]
    %v1369 = vld [vmem:[#allocation4 + $0x78] sm:$0xff]
    %v1370 = vld [vmem:[#allocation4 + $0x80] sm:$0xff]
    %v1371 = vld [vmem:[#allocation4 + $0x88] sm:$0xff]
    %v1372 = vld [vmem:[#allocation4 + $0x90] sm:$0xff]
    %v1373 = vld [vmem:[#allocation4 + $0x98] sm:$0xff]
    %v1374 = vld [vmem:[#allocation4 + $0xa0] sm:$0xff]
    %v1375 = vld [vmem:[#allocation4 + $0xa8] sm:$0xff]
    %v1376 = vld [vmem:[#allocation4 + $0xb0] sm:$0xff]
    %v1377 = vld [vmem:[#allocation4 + $0xb8] sm:$0xff]
    %v1378 = vld [vmem:[#allocation4 + $0xc0] sm:$0xff]
    %v1379 = vld [vmem:[#allocation4 + $0xc8] sm:$0xff]
    %v1380 = vld [vmem:[#allocation4 + $0xd0] sm:$0xff]
    %v1381 = vld [vmem:[#allocation4 + $0xd8] sm:$0xff]
    %v1382 = vld [vmem:[#allocation4 + $0xe0] sm:$0xff]
    %v1383 = vld [vmem:[#allocation4 + $0xe8] sm:$0xff]
    %v1384 = vld [vmem:[#allocation4 + $0xf0] sm:$0xff]
    %v1385 = vld [vmem:[#allocation4 + $0xf8] sm:$0xff]
    %v1386 = vld [vmem:[#allocation4 + $0x100] sm:$0xff]
    %v1387 = vld [vmem:[#allocation4 + $0x108] sm:$0xff]
    %v1388 = vld [vmem:[#allocation4 + $0x110] sm:$0xff]
    %v1389 = vld [vmem:[#allocation4 + $0x118] sm:$0xff]
    %v1390 = vld [vmem:[#allocation4 + $0x120] sm:$0xff]
    %v1391 = vld [vmem:[#allocation4 + $0x128] sm:$0xff]
    %v1392 = vld [vmem:[#allocation4 + $0x130] sm:$0xff]
    %v1393 = vld [vmem:[#allocation4 + $0x138] sm:$0xff]
    %v1394 = vld [vmem:[#allocation4 + $0x140] sm:$0xff]
    %v1395 = vld [vmem:[#allocation4 + $0x148] sm:$0xff]
    %v1396 = vld [vmem:[#allocation4 + $0x150] sm:$0xff]
    %v1397 = vld [vmem:[#allocation4 + $0x158] sm:$0xff]
    %v1398 = vld [vmem:[#allocation4 + $0x160] sm:$0xff]
    %v1399 = vld [vmem:[#allocation4 + $0x168] sm:$0xff]
    %v1400 = vld [vmem:[#allocation4 + $0x170] sm:$0xff]
    %v1401 = vld [vmem:[#allocation4 + $0x178] sm:$0xff]
    %v1402 = vld [vmem:[#allocation4 + $0x180] sm:$0xff]
    %v1403 = vld [vmem:[#allocation4 + $0x188] sm:$0xff]
    %v1404 = vld [vmem:[#allocation4 + $0x190] sm:$0xff]
    %v1405 = vld [vmem:[#allocation4 + $0x198] sm:$0xff]
    %v1406 = vld [vmem:[#allocation4 + $0x1a0] sm:$0xff]
    %v1407 = vld [vmem:[#allocation4 + $0x1a8] sm:$0xff]
    %v1408 = vld [vmem:[#allocation4 + $0x1b0] sm:$0xff]
    %v1409 = vld [vmem:[#allocation4 + $0x1b8] sm:$0xff]
    %v1410 = vld [vmem:[#allocation4 + $0x1c0] sm:$0xff]
    %v1411 = vld [vmem:[#allocation4 + $0x1c8] sm:$0xff]
    %v1412 = vld [vmem:[#allocation4 + $0x1d0] sm:$0xff]
    %v1413 = vld [vmem:[#allocation4 + $0x1d8] sm:$0xff]
    %v1414 = vld [vmem:[#allocation4 + $0x1e0] sm:$0xff]
    %v1415 = vld [vmem:[#allocation4 + $0x1e8] sm:$0xff]
    %v1416 = vld [vmem:[#allocation4 + $0x1f0] sm:$0xff]
    %v1417 = vld [vmem:[#allocation4 + $0x1f8] sm:$0xff]
    %v1418 = vld [vmem:[#allocation4 + $0x200] sm:$0xff]
    %v1419 = vld [vmem:[#allocation4 + $0x208] sm:$0xff]
    %v1420 = vld [vmem:[#allocation4 + $0x210] sm:$0xff]
    %v1421 = vld [vmem:[#allocation4 + $0x218] sm:$0xff]
    %v1422 = vld [vmem:[#allocation4 + $0x220] sm:$0xff]
    %v1423 = vld [vmem:[#allocation4 + $0x228] sm:$0xff]
    %v1424 = vld [vmem:[#allocation4 + $0x230] sm:$0xff]
    %v1425 = vld [vmem:[#allocation4 + $0x238] sm:$0xff]
    %v1426 = vld [vmem:[#allocation4 + $0x240] sm:$0xff]
    %v1427 = vld [vmem:[#allocation4 + $0x248] sm:$0xff]
    %v1428 = vld [vmem:[#allocation4 + $0x250] sm:$0xff]
    %v1429 = vld [vmem:[#allocation4 + $0x258] sm:$0xff]
    %v1430 = vld [vmem:[#allocation4 + $0x260] sm:$0xff]
    %v1431 = vld [vmem:[#allocation4 + $0x268] sm:$0xff]
    %v1432 = vld [vmem:[#allocation4 + $0x270] sm:$0xff]
    %v1433 = vld [vmem:[#allocation4 + $0x278] sm:$0xff]
    %v1434 = vld [vmem:[#allocation4 + $0x280] sm:$0xff]
    %v1435 = vld [vmem:[#allocation4 + $0x288] sm:$0xff]
    %v1436 = vld [vmem:[#allocation4 + $0x290] sm:$0xff]
    %v1437 = vld [vmem:[#allocation4 + $0x298] sm:$0xff]
    %v1438 = vld [vmem:[#allocation4 + $0x2a0] sm:$0xff]
    %v1439 = vld [vmem:[#allocation4 + $0x2a8] sm:$0xff]
    %v1440 = vld [vmem:[#allocation4 + $0x2b0] sm:$0xff]
    %v1441 = vld [vmem:[#allocation4 + $0x2b8] sm:$0xff]
    %v1442 = vld [vmem:[#allocation4 + $0x2c0] sm:$0xff]
    %v1443 = vld [vmem:[#allocation4 + $0x2c8] sm:$0xff]
    %v1444 = vld [vmem:[#allocation4 + $0x2d0] sm:$0xff]
    %v1445 = vld [vmem:[#allocation4 + $0x2d8] sm:$0xff]
    %v1446 = vld [vmem:[#allocation4 + $0x2e0] sm:$0xff]
    %v1447 = vld [vmem:[#allocation4 + $0x2e8] sm:$0xff]
    %v1448 = vld [vmem:[#allocation4 + $0x2f0] sm:$0xff]
    %v1449 = vld [vmem:[#allocation4 + $0x2f8] sm:$0xff]
    %v1450 = vld [vmem:[#allocation4 + $0x300] sm:$0xff]
    %v1451 = vld [vmem:[#allocation4 + $0x308] sm:$0xff]
    %v1452 = vld [vmem:[#allocation4 + $0x310] sm:$0xff]
    %v1453 = vld [vmem:[#allocation4 + $0x318] sm:$0xff]
    %v1454 = vld [vmem:[#allocation4 + $0x320] sm:$0xff]
    %v1455 = vld [vmem:[#allocation4 + $0x328] sm:$0xff]
    %v1456 = vld [vmem:[#allocation4 + $0x330] sm:$0xff]
    %v1457 = vld [vmem:[#allocation4 + $0x338] sm:$0xff]
    %v1458 = vld [vmem:[#allocation4 + $0x340] sm:$0xff]
    %v1459 = vld [vmem:[#allocation4 + $0x348] sm:$0xff]
    %v1460 = vld [vmem:[#allocation4 + $0x350] sm:$0xff]
    %v1461 = vld [vmem:[#allocation4 + $0x358] sm:$0xff]
    %v1462 = vld [vmem:[#allocation4 + $0x360] sm:$0xff]
    %v1463 = vld [vmem:[#allocation4 + $0x368] sm:$0xff]
    %v1464 = vld [vmem:[#allocation4 + $0x370] sm:$0xff]
    %v1465 = vld [vmem:[#allocation4 + $0x378] sm:$0xff]
    %v1466 = vld [vmem:[#allocation4 + $0x380] sm:$0xff]
    %v1467 = vld [vmem:[#allocation4 + $0x388] sm:$0xff]
    %v1468 = vld [vmem:[#allocation4 + $0x390] sm:$0xff]
    %v1469 = vld [vmem:[#allocation4 + $0x398] sm:$0xff]
    %v1470 = vld [vmem:[#allocation4 + $0x3a0] sm:$0xff]
    %v1471 = vld [vmem:[#allocation4 + $0x3a8] sm:$0xff]
    %v1472 = vld [vmem:[#allocation4 + $0x3b0] sm:$0xff]
    %v1473 = vld [vmem:[#allocation4 + $0x3b8] sm:$0xff]
    %v1474 = vld [vmem:[#allocation4 + $0x3c0] sm:$0xff]
    %v1475 = vld [vmem:[#allocation4 + $0x3c8] sm:$0xff]
    %v1476 = vld [vmem:[#allocation4 + $0x3d0] sm:$0xff]
    %v1477 = vld [vmem:[#allocation4 + $0x3d8] sm:$0xff]
    %v1478 = vld [vmem:[#allocation4 + $0x3e0] sm:$0xff]
    %v1479 = vld [vmem:[#allocation4 + $0x3e8] sm:$0xff]
    %v1480 = vld [vmem:[#allocation4 + $0x3f0] sm:$0xff]
    %v1481 = vld [vmem:[#allocation4 + $0x3f8] sm:$0xff]
    %v1482 = vld [vmem:[#allocation4 + $0x400] sm:$0xff]
    %v1483 = vld [vmem:[#allocation4 + $0x408] sm:$0xff]
    %v1484 = vld [vmem:[#allocation4 + $0x410] sm:$0xff]
    %v1485 = vld [vmem:[#allocation4 + $0x418] sm:$0xff]
    %v1486 = vld [vmem:[#allocation4 + $0x420] sm:$0xff]
    %v1487 = vld [vmem:[#allocation4 + $0x428] sm:$0xff]
    %v1488 = vld [vmem:[#allocation4 + $0x430] sm:$0xff]
    %v1489 = vld [vmem:[#allocation4 + $0x438] sm:$0xff]
    %v1490 = vld [vmem:[#allocation4 + $0x440] sm:$0xff]
    %v1491 = vld [vmem:[#allocation4 + $0x448] sm:$0xff]
    %v1492 = vld [vmem:[#allocation4 + $0x450] sm:$0xff]
    %v1493 = vld [vmem:[#allocation4 + $0x458] sm:$0xff]
    %v1494 = vld [vmem:[#allocation4 + $0x460] sm:$0xff]
    %v1495 = vld [vmem:[#allocation4 + $0x468] sm:$0xff]
    %v1496 = vld [vmem:[#allocation4 + $0x470] sm:$0xff]
    %v1497 = vld [vmem:[#allocation4 + $0x478] sm:$0xff]
    %v1498 = vld [vmem:[#allocation4 + $0x480] sm:$0xff]
    %v1499 = vld [vmem:[#allocation4 + $0x488] sm:$0xff]
    %v1500 = vld [vmem:[#allocation4 + $0x490] sm:$0xff]
    %v1501 = vld [vmem:[#allocation4 + $0x498] sm:$0xff]
    %v1502 = vld [vmem:[#allocation4 + $0x4a0] sm:$0xff]
    %v1503 = vld [vmem:[#allocation4 + $0x4a8] sm:$0xff]
    %v1504 = vld [vmem:[#allocation4 + $0x4b0] sm:$0xff]
    %v1505 = vld [vmem:[#allocation4 + $0x4b8] sm:$0xff]
    %v1506 = vld [vmem:[#allocation4 + $0x4c0] sm:$0xff]
    %v1507 = vld [vmem:[#allocation4 + $0x4c8] sm:$0xff]
    %v1508 = vld [vmem:[#allocation4 + $0x4d0] sm:$0xff]
    %v1509 = vld [vmem:[#allocation4 + $0x4d8] sm:$0xff]
    %v1510 = vld [vmem:[#allocation4 + $0x4e0] sm:$0xff]
    %v1511 = vld [vmem:[#allocation4 + $0x4e8] sm:$0xff]
    %v1512 = vld [vmem:[#allocation4 + $0x4f0] sm:$0xff]
    %v1513 = vld [vmem:[#allocation4 + $0x4f8] sm:$0xff]
    %v1514 = vld [vmem:[#allocation4 + $0x500] sm:$0xff]
    %v1515 = vld [vmem:[#allocation4 + $0x508] sm:$0xff]
    %v1516 = vld [vmem:[#allocation4 + $0x510] sm:$0xff]
    %v1517 = vld [vmem:[#allocation4 + $0x518] sm:$0xff]
    %v1518 = vld [vmem:[#allocation4 + $0x520] sm:$0xff]
    %v1519 = vld [vmem:[#allocation4 + $0x528] sm:$0xff]
    %v1520 = vld [vmem:[#allocation4 + $0x530] sm:$0xff]
    %v1521 = vld [vmem:[#allocation4 + $0x538] sm:$0xff]
    %v1522 = vld [vmem:[#allocation4 + $0x540] sm:$0xff]
    %v1523 = vld [vmem:[#allocation4 + $0x548] sm:$0xff]
    %v1524 = vld [vmem:[#allocation4 + $0x550] sm:$0xff]
    %v1525 = vld [vmem:[#allocation4 + $0x558] sm:$0xff]
    %v1526 = vld [vmem:[#allocation4 + $0x560] sm:$0xff]
    %v1527 = vld [vmem:[#allocation4 + $0x568] sm:$0xff]
    %v1528 = vld [vmem:[#allocation4 + $0x570] sm:$0xff]
    %v1529 = vld [vmem:[#allocation4 + $0x578] sm:$0xff]
    %v1530 = vld [vmem:[#allocation4 + $0x580] sm:$0xff]
    %v1531 = vld [vmem:[#allocation4 + $0x588] sm:$0xff]
    %v1532 = vld [vmem:[#allocation4 + $0x590] sm:$0xff]
    %v1533 = vld [vmem:[#allocation4 + $0x598] sm:$0xff]
    %v1534 = vld [vmem:[#allocation4 + $0x5a0] sm:$0xff]
    %v1535 = vld [vmem:[#allocation4 + $0x5a8] sm:$0xff]
    %v1536 = vld [vmem:[#allocation4 + $0x5b0] sm:$0xff]
    %v1537 = vld [vmem:[#allocation4 + $0x5b8] sm:$0xff]
    %v1538 = vld [vmem:[#allocation4 + $0x5c0] sm:$0xff]
    %v1539 = vld [vmem:[#allocation4 + $0x5c8] sm:$0xff]
    %v1540 = vld [vmem:[#allocation4 + $0x5d0] sm:$0xff]
    %v1541 = vld [vmem:[#allocation4 + $0x5d8] sm:$0xff]
    %v1542 = vld [vmem:[#allocation4 + $0x5e0] sm:$0xff]
    %v1543 = vld [vmem:[#allocation4 + $0x5e8] sm:$0xff]
    %v1544 = vld [vmem:[#allocation4 + $0x5f0] sm:$0xff]
    %v1545 = vld [vmem:[#allocation4 + $0x5f8] sm:$0xff]
    %v1546 = vld [vmem:[#allocation4 + $0x600] sm:$0xff]
    %v1547 = vld [vmem:[#allocation4 + $0x608] sm:$0xff]
    %v1548 = vld [vmem:[#allocation4 + $0x610] sm:$0xff]
    %v1549 = vld [vmem:[#allocation4 + $0x618] sm:$0xff]
    %v1550 = vld [vmem:[#allocation4 + $0x620] sm:$0xff]
    %v1551 = vld [vmem:[#allocation4 + $0x628] sm:$0xff]
    %v1552 = vld [vmem:[#allocation4 + $0x630] sm:$0xff]
    %v1553 = vld [vmem:[#allocation4 + $0x638] sm:$0xff]
    %v1554 = vld [vmem:[#allocation4 + $0x640] sm:$0xff]
    %v1555 = vld [vmem:[#allocation4 + $0x648] sm:$0xff]
    %v1556 = vld [vmem:[#allocation4 + $0x650] sm:$0xff]
    %v1557 = vld [vmem:[#allocation4 + $0x658] sm:$0xff]
    %v1558 = vld [vmem:[#allocation4 + $0x660] sm:$0xff]
    %v1559 = vld [vmem:[#allocation4 + $0x668] sm:$0xff]
    %v1560 = vld [vmem:[#allocation4 + $0x670] sm:$0xff]
    %v1561 = vld [vmem:[#allocation4 + $0x678] sm:$0xff]
    %v1562 = vld [vmem:[#allocation4 + $0x680] sm:$0xff]
    %v1563 = vld [vmem:[#allocation4 + $0x688] sm:$0xff]
    %v1564 = vld [vmem:[#allocation4 + $0x690] sm:$0xff]
    %v1565 = vld [vmem:[#allocation4 + $0x698] sm:$0xff]
    %v1566 = vld [vmem:[#allocation4 + $0x6a0] sm:$0xff]
    %v1567 = vld [vmem:[#allocation4 + $0x6a8] sm:$0xff]
    %v1568 = vld [vmem:[#allocation4 + $0x6b0] sm:$0xff]
    %v1569 = vld [vmem:[#allocation4 + $0x6b8] sm:$0xff]
    %v1570 = vld [vmem:[#allocation4 + $0x6c0] sm:$0xff]
    %v1571 = vld [vmem:[#allocation4 + $0x6c8] sm:$0xff]
    %v1572 = vld [vmem:[#allocation4 + $0x6d0] sm:$0xff]
    %v1573 = vld [vmem:[#allocation4 + $0x6d8] sm:$0xff]
    %v1574 = vld [vmem:[#allocation4 + $0x6e0] sm:$0xff]
    %v1575 = vld [vmem:[#allocation4 + $0x6e8] sm:$0xff]
    %v1576 = vld [vmem:[#allocation4 + $0x6f0] sm:$0xff]
    %v1577 = vld [vmem:[#allocation4 + $0x6f8] sm:$0xff]
    %v1578 = vld [vmem:[#allocation4 + $0x700] sm:$0xff]
    %v1579 = vld [vmem:[#allocation4 + $0x708] sm:$0xff]
    %v1580 = vld [vmem:[#allocation4 + $0x710] sm:$0xff]
    %v1581 = vld [vmem:[#allocation4 + $0x718] sm:$0xff]
    %v1582 = vld [vmem:[#allocation4 + $0x720] sm:$0xff]
    %v1583 = vld [vmem:[#allocation4 + $0x728] sm:$0xff]
    %v1584 = vld [vmem:[#allocation4 + $0x730] sm:$0xff]
    %v1585 = vld [vmem:[#allocation4 + $0x738] sm:$0xff]
    %v1586 = vld [vmem:[#allocation4 + $0x740] sm:$0xff]
    %v1587 = vld [vmem:[#allocation4 + $0x748] sm:$0xff]
    %v1588 = vld [vmem:[#allocation4 + $0x750] sm:$0xff]
    %v1589 = vld [vmem:[#allocation4 + $0x758] sm:$0xff]
    %v1590 = vld [vmem:[#allocation4 + $0x760] sm:$0xff]
    %v1591 = vld [vmem:[#allocation4 + $0x768] sm:$0xff]
    %v1592 = vld [vmem:[#allocation4 + $0x770] sm:$0xff]
    %v1593 = vld [vmem:[#allocation4 + $0x778] sm:$0xff]
    %v1594 = vld [vmem:[#allocation4 + $0x780] sm:$0xff]
    %v1595 = vld [vmem:[#allocation4 + $0x788] sm:$0xff]
    %v1596 = vld [vmem:[#allocation4 + $0x790] sm:$0xff]
    %v1597 = vld [vmem:[#allocation4 + $0x798] sm:$0xff]
    %v1598 = vld [vmem:[#allocation4 + $0x7a0] sm:$0xff]
    %v1599 = vld [vmem:[#allocation4 + $0x7a8] sm:$0xff]
    %v1600 = vld [vmem:[#allocation4 + $0x7b0] sm:$0xff]
    %v1601 = vld [vmem:[#allocation4 + $0x7b8] sm:$0xff]
    %v1602 = vld [vmem:[#allocation4 + $0x7c0] sm:$0xff]
    %v1603 = vld [vmem:[#allocation4 + $0x7c8] sm:$0xff]
    %v1604 = vld [vmem:[#allocation4 + $0x7d0] sm:$0xff]
    %v1605 = vld [vmem:[#allocation4 + $0x7d8] sm:$0xff]
    %v1606 = vld [vmem:[#allocation4 + $0x7e0] sm:$0xff]
    %v1607 = vld [vmem:[#allocation4 + $0x7e8] sm:$0xff]
    %v1608 = vld [vmem:[#allocation4 + $0x7f0] sm:$0xff]
    %v1609 = vld [vmem:[#allocation4 + $0x7f8] sm:$0xff]
    %v1610 = vld [vmem:[#allocation13] sm:$0xff]
    %v1612 = vperm.slane %v1610, 0
    %v1613 = vperm.slane %v1610, 1
    %v1614 = vperm.slane %v1610, 2
    %v1615 = vperm.slane %v1610, 3
    %v1616 = vperm.slane %v1610, 4
    %v1617 = vperm.slane %v1610, 5
    %v1618 = vperm.slane %v1610, 6
    %v1619 = vperm.slane %v1610, 7
    %v1884 = vunpack.c.l.b16 %v1354
    %v1885 = vunpack.c.h.b16 %v1354
    %v1886 = vunpack.c.l.b16 %v1355
    %v1887 = vunpack.c.h.b16 %v1355
    %v1888 = vunpack.c.l.b16 %v1356
    %v1889 = vunpack.c.h.b16 %v1356
    %v1890 = vunpack.c.l.b16 %v1357
    %v1891 = vunpack.c.h.b16 %v1357
    %v1892 = vunpack.c.l.b16 %v1358
    %v1893 = vunpack.c.h.b16 %v1358
    %v1894 = vunpack.c.l.b16 %v1359
    %v1895 = vunpack.c.h.b16 %v1359
    %v1896 = vunpack.c.l.b16 %v1360
    %v1897 = vunpack.c.h.b16 %v1360
    %v1898 = vunpack.c.l.b16 %v1361
    %v1899 = vunpack.c.h.b16 %v1361
    %v1900 = vunpack.c.l.b16 %v1362
    %v1901 = vunpack.c.h.b16 %v1362
    %v1902 = vunpack.c.l.b16 %v1363
    %v1903 = vunpack.c.h.b16 %v1363
    %v1904 = vunpack.c.l.b16 %v1364
    %v1905 = vunpack.c.h.b16 %v1364
    %v1906 = vunpack.c.l.b16 %v1365
    %v1907 = vunpack.c.h.b16 %v1365
    %v1908 = vunpack.c.l.b16 %v1366
    %v1909 = vunpack.c.h.b16 %v1366
    %v1910 = vunpack.c.l.b16 %v1367
    %v1911 = vunpack.c.h.b16 %v1367
    %v1912 = vunpack.c.l.b16 %v1368
    %v1913 = vunpack.c.h.b16 %v1368
    %v1914 = vunpack.c.l.b16 %v1369
    %v1915 = vunpack.c.h.b16 %v1369
    %v1916 = vunpack.c.l.b16 %v1370
    %v1917 = vunpack.c.h.b16 %v1370
    %v1918 = vunpack.c.l.b16 %v1371
    %v1919 = vunpack.c.h.b16 %v1371
    %v1920 = vunpack.c.l.b16 %v1372
    %v1921 = vunpack.c.h.b16 %v1372
    %v1922 = vunpack.c.l.b16 %v1373
    %v1923 = vunpack.c.h.b16 %v1373
    %v1924 = vunpack.c.l.b16 %v1374
    %v1925 = vunpack.c.h.b16 %v1374
    %v1926 = vunpack.c.l.b16 %v1375
    %v1927 = vunpack.c.h.b16 %v1375
    %v1928 = vunpack.c.l.b16 %v1376
    %v1929 = vunpack.c.h.b16 %v1376
    %v1930 = vunpack.c.l.b16 %v1377
    %v1931 = vunpack.c.h.b16 %v1377
    %v1932 = vunpack.c.l.b16 %v1378
    %v1933 = vunpack.c.h.b16 %v1378
    %v1934 = vunpack.c.l.b16 %v1379
    %v1935 = vunpack.c.h.b16 %v1379
    %v1936 = vunpack.c.l.b16 %v1380
    %v1937 = vunpack.c.h.b16 %v1380
    %v1938 = vunpack.c.l.b16 %v1381
    %v1939 = vunpack.c.h.b16 %v1381
    %v1940 = vunpack.c.l.b16 %v1382
    %v1941 = vunpack.c.h.b16 %v1382
    %v1942 = vunpack.c.l.b16 %v1383
    %v1943 = vunpack.c.h.b16 %v1383
    %v1944 = vunpack.c.l.b16 %v1384
    %v1945 = vunpack.c.h.b16 %v1384
    %v1946 = vunpack.c.l.b16 %v1385
    %v1947 = vunpack.c.h.b16 %v1385
    %v1948 = vunpack.c.l.b16 %v1386
    %v1949 = vunpack.c.h.b16 %v1386
    %v1950 = vunpack.c.l.b16 %v1387
    %v1951 = vunpack.c.h.b16 %v1387
    %v1952 = vunpack.c.l.b16 %v1388
    %v1953 = vunpack.c.h.b16 %v1388
    %v1954 = vunpack.c.l.b16 %v1389
    %v1955 = vunpack.c.h.b16 %v1389
    %v1956 = vunpack.c.l.b16 %v1390
    %v1957 = vunpack.c.h.b16 %v1390
    %v1958 = vunpack.c.l.b16 %v1391
    %v1959 = vunpack.c.h.b16 %v1391
    %v1960 = vunpack.c.l.b16 %v1392
    %v1961 = vunpack.c.h.b16 %v1392
    %v1962 = vunpack.c.l.b16 %v1393
    %v1963 = vunpack.c.h.b16 %v1393
    %v1964 = vunpack.c.l.b16 %v1394
    %v1965 = vunpack.c.h.b16 %v1394
    %v1966 = vunpack.c.l.b16 %v1395
    %v1967 = vunpack.c.h.b16 %v1395
    %v1968 = vunpack.c.l.b16 %v1396
    %v1969 = vunpack.c.h.b16 %v1396
    %v1970 = vunpack.c.l.b16 %v1397
    %v1971 = vunpack.c.h.b16 %v1397
    %v1972 = vunpack.c.l.b16 %v1398
    %v1973 = vunpack.c.h.b16 %v1398
    %v1974 = vunpack.c.l.b16 %v1399
    %v1975 = vunpack.c.h.b16 %v1399
    %v1976 = vunpack.c.l.b16 %v1400
    %v1977 = vunpack.c.h.b16 %v1400
    %v1978 = vunpack.c.l.b16 %v1401
    %v1979 = vunpack.c.h.b16 %v1401
    %v1980 = vunpack.c.l.b16 %v1402
    %v1981 = vunpack.c.h.b16 %v1402
    %v1982 = vunpack.c.l.b16 %v1403
    %v1983 = vunpack.c.h.b16 %v1403
    %v1984 = vunpack.c.l.b16 %v1404
    %v1985 = vunpack.c.h.b16 %v1404
    %v1986 = vunpack.c.l.b16 %v1405
    %v1987 = vunpack.c.h.b16 %v1405
    %v1988 = vunpack.c.l.b16 %v1406
    %v1989 = vunpack.c.h.b16 %v1406
    %v1990 = vunpack.c.l.b16 %v1407
    %v1991 = vunpack.c.h.b16 %v1407
    %v1992 = vunpack.c.l.b16 %v1408
    %v1993 = vunpack.c.h.b16 %v1408
    %v1994 = vunpack.c.l.b16 %v1409
    %v1995 = vunpack.c.h.b16 %v1409
    %v1996 = vunpack.c.l.b16 %v1410
    %v1997 = vunpack.c.h.b16 %v1410
    %v1998 = vunpack.c.l.b16 %v1411
    %v1999 = vunpack.c.h.b16 %v1411
    %v2000 = vunpack.c.l.b16 %v1412
    %v2001 = vunpack.c.h.b16 %v1412
    %v2002 = vunpack.c.l.b16 %v1413
    %v2003 = vunpack.c.h.b16 %v1413
    %v2004 = vunpack.c.l.b16 %v1414
    %v2005 = vunpack.c.h.b16 %v1414
    %v2006 = vunpack.c.l.b16 %v1415
    %v2007 = vunpack.c.h.b16 %v1415
    %v2008 = vunpack.c.l.b16 %v1416
    %v2009 = vunpack.c.h.b16 %v1416
    %v2010 = vunpack.c.l.b16 %v1417
    %v2011 = vunpack.c.h.b16 %v1417
    %v2012 = vunpack.c.l.b16 %v1418
    %v2013 = vunpack.c.h.b16 %v1418
    %v2014 = vunpack.c.l.b16 %v1419
    %v2015 = vunpack.c.h.b16 %v1419
    %v2016 = vunpack.c.l.b16 %v1420
    %v2017 = vunpack.c.h.b16 %v1420
    %v2018 = vunpack.c.l.b16 %v1421
    %v2019 = vunpack.c.h.b16 %v1421
    %v2020 = vunpack.c.l.b16 %v1422
    %v2021 = vunpack.c.h.b16 %v1422
    %v2022 = vunpack.c.l.b16 %v1423
    %v2023 = vunpack.c.h.b16 %v1423
    %v2024 = vunpack.c.l.b16 %v1424
    %v2025 = vunpack.c.h.b16 %v1424
    %v2026 = vunpack.c.l.b16 %v1425
    %v2027 = vunpack.c.h.b16 %v1425
    %v2028 = vunpack.c.l.b16 %v1426
    %v2029 = vunpack.c.h.b16 %v1426
    %v2030 = vunpack.c.l.b16 %v1427
    %v2031 = vunpack.c.h.b16 %v1427
    %v2032 = vunpack.c.l.b16 %v1428
    %v2033 = vunpack.c.h.b16 %v1428
    %v2034 = vunpack.c.l.b16 %v1429
    %v2035 = vunpack.c.h.b16 %v1429
    %v2036 = vunpack.c.l.b16 %v1430
    %v2037 = vunpack.c.h.b16 %v1430
    %v2038 = vunpack.c.l.b16 %v1431
    %v2039 = vunpack.c.h.b16 %v1431
    %v2040 = vunpack.c.l.b16 %v1432
    %v2041 = vunpack.c.h.b16 %v1432
    %v2042 = vunpack.c.l.b16 %v1433
    %v2043 = vunpack.c.h.b16 %v1433
    %v2044 = vunpack.c.l.b16 %v1434
    %v2045 = vunpack.c.h.b16 %v1434
    %v2046 = vunpack.c.l.b16 %v1435
    %v2047 = vunpack.c.h.b16 %v1435
    %v2048 = vunpack.c.l.b16 %v1436
    %v2049 = vunpack.c.h.b16 %v1436
    %v2050 = vunpack.c.l.b16 %v1437
    %v2051 = vunpack.c.h.b16 %v1437
    %v2052 = vunpack.c.l.b16 %v1438
    %v2053 = vunpack.c.h.b16 %v1438
    %v2054 = vunpack.c.l.b16 %v1439
    %v2055 = vunpack.c.h.b16 %v1439
    %v2056 = vunpack.c.l.b16 %v1440
    %v2057 = vunpack.c.h.b16 %v1440
    %v2058 = vunpack.c.l.b16 %v1441
    %v2059 = vunpack.c.h.b16 %v1441
    %v2060 = vunpack.c.l.b16 %v1442
    %v2061 = vunpack.c.h.b16 %v1442
    %v2062 = vunpack.c.l.b16 %v1443
    %v2063 = vunpack.c.h.b16 %v1443
    %v2064 = vunpack.c.l.b16 %v1444
    %v2065 = vunpack.c.h.b16 %v1444
    %v2066 = vunpack.c.l.b16 %v1445
    %v2067 = vunpack.c.h.b16 %v1445
    %v2068 = vunpack.c.l.b16 %v1446
    %v2069 = vunpack.c.h.b16 %v1446
    %v2070 = vunpack.c.l.b16 %v1447
    %v2071 = vunpack.c.h.b16 %v1447
    %v2072 = vunpack.c.l.b16 %v1448
    %v2073 = vunpack.c.h.b16 %v1448
    %v2074 = vunpack.c.l.b16 %v1449
    %v2075 = vunpack.c.h.b16 %v1449
    %v2076 = vunpack.c.l.b16 %v1450
    %v2077 = vunpack.c.h.b16 %v1450
    %v2078 = vunpack.c.l.b16 %v1451
    %v2079 = vunpack.c.h.b16 %v1451
    %v2080 = vunpack.c.l.b16 %v1452
    %v2081 = vunpack.c.h.b16 %v1452
    %v2082 = vunpack.c.l.b16 %v1453
    %v2083 = vunpack.c.h.b16 %v1453
    %v2084 = vunpack.c.l.b16 %v1454
    %v2085 = vunpack.c.h.b16 %v1454
    %v2086 = vunpack.c.l.b16 %v1455
    %v2087 = vunpack.c.h.b16 %v1455
    %v2088 = vunpack.c.l.b16 %v1456
    %v2089 = vunpack.c.h.b16 %v1456
    %v2090 = vunpack.c.l.b16 %v1457
    %v2091 = vunpack.c.h.b16 %v1457
    %v2092 = vunpack.c.l.b16 %v1458
    %v2093 = vunpack.c.h.b16 %v1458
    %v2094 = vunpack.c.l.b16 %v1459
    %v2095 = vunpack.c.h.b16 %v1459
    %v2096 = vunpack.c.l.b16 %v1460
    %v2097 = vunpack.c.h.b16 %v1460
    %v2098 = vunpack.c.l.b16 %v1461
    %v2099 = vunpack.c.h.b16 %v1461
    %v2100 = vunpack.c.l.b16 %v1462
    %v2101 = vunpack.c.h.b16 %v1462
    %v2102 = vunpack.c.l.b16 %v1463
    %v2103 = vunpack.c.h.b16 %v1463
    %v2104 = vunpack.c.l.b16 %v1464
    %v2105 = vunpack.c.h.b16 %v1464
    %v2106 = vunpack.c.l.b16 %v1465
    %v2107 = vunpack.c.h.b16 %v1465
    %v2108 = vunpack.c.l.b16 %v1466
    %v2109 = vunpack.c.h.b16 %v1466
    %v2110 = vunpack.c.l.b16 %v1467
    %v2111 = vunpack.c.h.b16 %v1467
    %v2112 = vunpack.c.l.b16 %v1468
    %v2113 = vunpack.c.h.b16 %v1468
    %v2114 = vunpack.c.l.b16 %v1469
    %v2115 = vunpack.c.h.b16 %v1469
    %v2116 = vunpack.c.l.b16 %v1470
    %v2117 = vunpack.c.h.b16 %v1470
    %v2118 = vunpack.c.l.b16 %v1471
    %v2119 = vunpack.c.h.b16 %v1471
    %v2120 = vunpack.c.l.b16 %v1472
    %v2121 = vunpack.c.h.b16 %v1472
    %v2122 = vunpack.c.l.b16 %v1473
    %v2123 = vunpack.c.h.b16 %v1473
    %v2124 = vunpack.c.l.b16 %v1474
    %v2125 = vunpack.c.h.b16 %v1474
    %v2126 = vunpack.c.l.b16 %v1475
    %v2127 = vunpack.c.h.b16 %v1475
    %v2128 = vunpack.c.l.b16 %v1476
    %v2129 = vunpack.c.h.b16 %v1476
    %v2130 = vunpack.c.l.b16 %v1477
    %v2131 = vunpack.c.h.b16 %v1477
    %v2132 = vunpack.c.l.b16 %v1478
    %v2133 = vunpack.c.h.b16 %v1478
    %v2134 = vunpack.c.l.b16 %v1479
    %v2135 = vunpack.c.h.b16 %v1479
    %v2136 = vunpack.c.l.b16 %v1480
    %v2137 = vunpack.c.h.b16 %v1480
    %v2138 = vunpack.c.l.b16 %v1481
    %v2139 = vunpack.c.h.b16 %v1481
    %v2140 = vunpack.c.l.b16 %v1482
    %v2141 = vunpack.c.h.b16 %v1482
    %v2142 = vunpack.c.l.b16 %v1483
    %v2143 = vunpack.c.h.b16 %v1483
    %v2144 = vunpack.c.l.b16 %v1484
    %v2145 = vunpack.c.h.b16 %v1484
    %v2146 = vunpack.c.l.b16 %v1485
    %v2147 = vunpack.c.h.b16 %v1485
    %v2148 = vunpack.c.l.b16 %v1486
    %v2149 = vunpack.c.h.b16 %v1486
    %v2150 = vunpack.c.l.b16 %v1487
    %v2151 = vunpack.c.h.b16 %v1487
    %v2152 = vunpack.c.l.b16 %v1488
    %v2153 = vunpack.c.h.b16 %v1488
    %v2154 = vunpack.c.l.b16 %v1489
    %v2155 = vunpack.c.h.b16 %v1489
    %v2156 = vunpack.c.l.b16 %v1490
    %v2157 = vunpack.c.h.b16 %v1490
    %v2158 = vunpack.c.l.b16 %v1491
    %v2159 = vunpack.c.h.b16 %v1491
    %v2160 = vunpack.c.l.b16 %v1492
    %v2161 = vunpack.c.h.b16 %v1492
    %v2162 = vunpack.c.l.b16 %v1493
    %v2163 = vunpack.c.h.b16 %v1493
    %v2164 = vunpack.c.l.b16 %v1494
    %v2165 = vunpack.c.h.b16 %v1494
    %v2166 = vunpack.c.l.b16 %v1495
    %v2167 = vunpack.c.h.b16 %v1495
    %v2168 = vunpack.c.l.b16 %v1496
    %v2169 = vunpack.c.h.b16 %v1496
    %v2170 = vunpack.c.l.b16 %v1497
    %v2171 = vunpack.c.h.b16 %v1497
    %v2172 = vunpack.c.l.b16 %v1498
    %v2173 = vunpack.c.h.b16 %v1498
    %v2174 = vunpack.c.l.b16 %v1499
    %v2175 = vunpack.c.h.b16 %v1499
    %v2176 = vunpack.c.l.b16 %v1500
    %v2177 = vunpack.c.h.b16 %v1500
    %v2178 = vunpack.c.l.b16 %v1501
    %v2179 = vunpack.c.h.b16 %v1501
    %v2180 = vunpack.c.l.b16 %v1502
    %v2181 = vunpack.c.h.b16 %v1502
    %v2182 = vunpack.c.l.b16 %v1503
    %v2183 = vunpack.c.h.b16 %v1503
    %v2184 = vunpack.c.l.b16 %v1504
    %v2185 = vunpack.c.h.b16 %v1504
    %v2186 = vunpack.c.l.b16 %v1505
    %v2187 = vunpack.c.h.b16 %v1505
    %v2188 = vunpack.c.l.b16 %v1506
    %v2189 = vunpack.c.h.b16 %v1506
    %v2190 = vunpack.c.l.b16 %v1507
    %v2191 = vunpack.c.h.b16 %v1507
    %v2192 = vunpack.c.l.b16 %v1508
    %v2193 = vunpack.c.h.b16 %v1508
    %v2194 = vunpack.c.l.b16 %v1509
    %v2195 = vunpack.c.h.b16 %v1509
    %v2196 = vunpack.c.l.b16 %v1510
    %v2197 = vunpack.c.h.b16 %v1510
    %v2198 = vunpack.c.l.b16 %v1511
    %v2199 = vunpack.c.h.b16 %v1511
    %v2200 = vunpack.c.l.b16 %v1512
    %v2201 = vunpack.c.h.b16 %v1512
    %v2202 = vunpack.c.l.b16 %v1513
    %v2203 = vunpack.c.h.b16 %v1513
    %v2204 = vunpack.c.l.b16 %v1514
    %v2205 = vunpack.c.h.b16 %v1514
    %v2206 = vunpack.c.l.b16 %v1515
    %v2207 = vunpack.c.h.b16 %v1515
    %v2208 = vunpack.c.l.b16 %v1516
    %v2209 = vunpack.c.h.b16 %v1516
    %v2210 = vunpack.c.l.b16 %v1517
    %v2211 = vunpack.c.h.b16 %v1517
    %v2212 = vunpack.c.l.b16 %v1518
    %v2213 = vunpack.c.h.b16 %v1518
    %v2214 = vunpack.c.l.b16 %v1519
    %v2215 = vunpack.c.h.b16 %v1519
    %v2216 = vunpack.c.l.b16 %v1520
    %v2217 = vunpack.c.h.b16 %v1520
    %v2218 = vunpack.c.l.b16 %v1521
    %v2219 = vunpack.c.h.b16 %v1521
    %v2220 = vunpack.c.l.b16 %v1522
    %v2221 = vunpack.c.h.b16 %v1522
    %v2222 = vunpack.c.l.b16 %v1523
    %v2223 = vunpack.c.h.b16 %v1523
    %v2224 = vunpack.c.l.b16 %v1524
    %v2225 = vunpack.c.h.b16 %v1524
    %v2226 = vunpack.c.l.b16 %v1525
    %v2227 = vunpack.c.h.b16 %v1525
    %v2228 = vunpack.c.l.b16 %v1526
    %v2229 = vunpack.c.h.b16 %v1526
    %v2230 = vunpack.c.l.b16 %v1527
    %v2231 = vunpack.c.h.b16 %v1527
    %v2232 = vunpack.c.l.b16 %v1528
    %v2233 = vunpack.c.h.b16 %v1528
    %v2234 = vunpack.c.l.b16 %v1529
    %v2235 = vunpack.c.h.b16 %v1529
    %v2236 = vunpack.c.l.b16 %v1530
    %v2237 = vunpack.c.h.b16 %v1530
    %v2238 = vunpack.c.l.b16 %v1531
    %v2239 = vunpack.c.h.b16 %v1531
    %v2240 = vunpack.c.l.b16 %v1532
    %v2241 = vunpack.c.h.b16 %v1532
    %v2242 = vunpack.c.l.b16 %v1533
    %v2243 = vunpack.c.h.b16 %v1533
    %v2244 = vunpack.c.l.b16 %v1534
    %v2245 = vunpack.c.h.b16 %v1534
    %v2246 = vunpack.c.l.b16 %v1535
    %v2247 = vunpack.c.h.b16 %v1535
    %v2248 = vunpack.c.l.b16 %v1536
    %v2249 = vunpack.c.h.b16 %v1536
    %v2250 = vunpack.c.l.b16 %v1537
    %v2251 = vunpack.c.h.b16 %v1537
    %v2252 = vunpack.c.l.b16 %v1538
    %v2253 = vunpack.c.h.b16 %v1538
    %v2254 = vunpack.c.l.b16 %v1539
    %v2255 = vunpack.c.h.b16 %v1539
    %v2256 = vunpack.c.l.b16 %v1540
    %v2257 = vunpack.c.h.b16 %v1540
    %v2258 = vunpack.c.l.b16 %v1541
    %v2259 = vunpack.c.h.b16 %v1541
    %v2260 = vunpack.c.l.b16 %v1542
    %v2261 = vunpack.c.h.b16 %v1542
    %v2262 = vunpack.c.l.b16 %v1543
    %v2263 = vunpack.c.h.b16 %v1543
    %v2264 = vunpack.c.l.b16 %v1544
    %v2265 = vunpack.c.h.b16 %v1544
    %v2266 = vunpack.c.l.b16 %v1545
    %v2267 = vunpack.c.h.b16 %v1545
    %v2268 = vunpack.c.l.b16 %v1546
    %v2269 = vunpack.c.h.b16 %v1546
    %v2270 = vunpack.c.l.b16 %v1547
    %v2271 = vunpack.c.h.b16 %v1547
    %v2272 = vunpack.c.l.b16 %v1548
    %v2273 = vunpack.c.h.b16 %v1548
    %v2274 = vunpack.c.l.b16 %v1549
    %v2275 = vunpack.c.h.b16 %v1549
    %v2276 = vunpack.c.l.b16 %v1550
    %v2277 = vunpack.c.h.b16 %v1550
    %v2278 = vunpack.c.l.b16 %v1551
    %v2279 = vunpack.c.h.b16 %v1551
    %v2280 = vunpack.c.l.b16 %v1552
    %v2281 = vunpack.c.h.b16 %v1552
    %v2282 = vunpack.c.l.b16 %v1553
    %v2283 = vunpack.c.h.b16 %v1553
    %v2284 = vunpack.c.l.b16 %v1554
    %v2285 = vunpack.c.h.b16 %v1554
    %v2286 = vunpack.c.l.b16 %v1555
    %v2287 = vunpack.c.h.b16 %v1555
    %v2288 = vunpack.c.l.b16 %v1556
    %v2289 = vunpack.c.h.b16 %v1556
    %v2290 = vunpack.c.l.b16 %v1557
    %v2291 = vunpack.c.h.b16 %v1557
    %v2292 = vunpack.c.l.b16 %v1558
    %v2293 = vunpack.c.h.b16 %v1558
    %v2294 = vunpack.c.l.b16 %v1559
    %v2295 = vunpack.c.h.b16 %v1559
    %v2296 = vunpack.c.l.b16 %v1560
    %v2297 = vunpack.c.h.b16 %v1560
    %v2298 = vunpack.c.l.b16 %v1561
    %v2299 = vunpack.c.h.b16 %v1561
    %v2300 = vunpack.c.l.b16 %v1562
    %v2301 = vunpack.c.h.b16 %v1562
    %v2302 = vunpack.c.l.b16 %v1563
    %v2303 = vunpack.c.h.b16 %v1563
    %v2304 = vunpack.c.l.b16 %v1564
    %v2305 = vunpack.c.h.b16 %v1564
    %v2306 = vunpack.c.l.b16 %v1565
    %v2307 = vunpack.c.h.b16 %v1565
    %v2308 = vunpack.c.l.b16 %v1566
    %v2309 = vunpack.c.h.b16 %v1566
    %v2310 = vunpack.c.l.b16 %v1567
    %v2311 = vunpack.c.h.b16 %v1567
    %v2312 = vunpack.c.l.b16 %v1568
    %v2313 = vunpack.c.h.b16 %v1568
    %v2314 = vunpack.c.l.b16 %v1569
    %v2315 = vunpack.c.h.b16 %v1569
    %v2316 = vunpack.c.l.b16 %v1570
    %v2317 = vunpack.c.h.b16 %v1570
    %v2318 = vunpack.c.l.b16 %v1571
    %v2319 = vunpack.c.h.b16 %v1571
    %v2320 = vunpack.c.l.b16 %v1572
    %v2321 = vunpack.c.h.b16 %v1572
    %v2322 = vunpack.c.l.b16 %v1573
    %v2323 = vunpack.c.h.b16 %v1573
    %v2324 = vunpack.c.l.b16 %v1574
    %v2325 = vunpack.c.h.b16 %v1574
    %v2326 = vunpack.c.l.b16 %v1575
    %v2327 = vunpack.c.h.b16 %v1575
    %v2328 = vunpack.c.l.b16 %v1576
    %v2329 = vunpack.c.h.b16 %v1576
    %v2330 = vunpack.c.l.b16 %v1577
    %v2331 = vunpack.c.h.b16 %v1577
    %v2332 = vunpack.c.l.b16 %v1578
    %v2333 = vunpack.c.h.b16 %v1578
    %v2334 = vunpack.c.l.b16 %v1579
    %v2335 = vunpack.c.h.b16 %v1579
    %v2336 = vunpack.c.l.b16 %v1580
    %v2337 = vunpack.c.h.b16 %v1580
    %v2338 = vunpack.c.l.b16 %v1581
    %v2339 = vunpack.c.h.b16 %v1581
    %v2340 = vunpack.c.l.b16 %v1582
    %v2341 = vunpack.c.h.b16 %v1582
    %v2342 = vunpack.c.l.b16 %v1583
    %v2343 = vunpack.c.h.b16 %v1583
    %v2344 = vunpack.c.l.b16 %v1584
    %v2345 = vunpack.c.h.b16 %v1584
    %v2346 = vunpack.c.l.b16 %v1585
    %v2347 = vunpack.c.h.b16 %v1585
    %v2348 = vunpack.c.l.b16 %v1586
    %v2349 = vunpack.c.h.b16 %v1586
    %v2350 = vunpack.c.l.b16 %v1587
    %v2351 = vunpack.c.h.b16 %v1587
    %v2352 = vunpack.c.l.b16 %v1588
    %v2353 = vunpack.c.h.b16 %v1588
    %v2354 = vunpack.c.l.b16 %v1589
    %v2355 = vunpack.c.h.b16 %v1589
    %v2356 = vunpack.c.l.b16 %v1590
    %v2357 = vunpack.c.h.b16 %v1590
    %v2358 = vunpack.c.l.b16 %v1591
    %v2359 = vunpack.c.h.b16 %v1591
    %v2360 = vunpack.c.l.b16 %v1592
    %v2361 = vunpack.c.h.b16 %v1592
    %v2362 = vunpack.c.l.b16 %v1593
    %v2363 = vunpack.c.h.b16 %v1593
    %v2364 = vunpack.c.l.b16 %v1594
    %v2365 = vunpack.c.h.b16 %v1594
    %v2366 = vunpack.c.l.b16 %v1595
    %v2367 = vunpack.c.h.b16 %v1595
    %v2368 = vunpack.c.l.b16 %v1596
    %v2369 = vunpack.c.h.b16 %v1596
    %v2370 = vunpack.c.l.b16 %v1597
    %v2371 = vunpack.c.h.b16 %v1597
    %v2372 = vunpack.c.l.b16 %v1598
    %v2373 = vunpack.c.h.b16 %v1598
    %v2374 = vunpack.c.l.b16 %v1599
    %v2375 = vunpack.c.h.b16 %v1599
    %v2376 = vunpack.c.l.b16 %v1600
    %v2377 = vunpack.c.h.b16 %v1600
    %v2378 = vunpack.c.l.b16 %v1601
    %v2379 = vunpack.c.h.b16 %v1601
    %v2380 = vunpack.c.l.b16 %v1602
    %v2381 = vunpack.c.h.b16 %v1602
    %v2382 = vunpack.c.l.b16 %v1603
    %v2383 = vunpack.c.h.b16 %v1603
    %v2384 = vunpack.c.l.b16 %v1604
    %v2385 = vunpack.c.h.b16 %v1604
    %v2386 = vunpack.c.l.b16 %v1605
    %v2387 = vunpack.c.h.b16 %v1605
    %v2388 = vunpack.c.l.b16 %v1606
    %v2389 = vunpack.c.h.b16 %v1606
    %v2390 = vunpack.c.l.b16 %v1607
    %v2391 = vunpack.c.h.b16 %v1607
    %v2392 = vunpack.c.l.b16 %v1608
    %v2393 = vunpack.c.h.b16 %v1608
    %v2394 = vunpack.c.l.b16 %v1609
    %v2395 = vunpack.c.h.b16 %v1609
    %v2396 = vpack.c.b16 %v1892, %v1884
    %v2397 = vpack.c.b16 %v1893, %v1885
    %v2398 = vpack.c.b16 %v1894, %v1886
    %v2399 = vpack.c.b16 %v1895, %v1887
    %v2400 = vpack.c.b16 %v1896, %v1888
    %v2401 = vpack.c.b16 %v1897, %v1889
    %v2402 = vpack.c.b16 %v1898, %v1890
    %v2403 = vpack.c.b16 %v1899, %v1891
    %v2404 = vpack.c.b16 %v1908, %v1900
    %v2405 = vpack.c.b16 %v1909, %v1901
    %v2406 = vpack.c.b16 %v1910, %v1902
    %v2407 = vpack.c.b16 %v1911, %v1903
    %v2408 = vpack.c.b16 %v1912, %v1904
    %v2409 = vpack.c.b16 %v1913, %v1905
    %v2410 = vpack.c.b16 %v1914, %v1906
    %v2411 = vpack.c.b16 %v1915, %v1907
    %v2412 = vpack.c.b16 %v1924, %v1916
    %v2413 = vpack.c.b16 %v1925, %v1917
    %v2414 = vpack.c.b16 %v1926, %v1918
    %v2415 = vpack.c.b16 %v1927, %v1919
    %v2416 = vpack.c.b16 %v1928, %v1920
    %v2417 = vpack.c.b16 %v1929, %v1921
    %v2418 = vpack.c.b16 %v1930, %v1922
    %v2419 = vpack.c.b16 %v1931, %v1923
    %v2420 = vpack.c.b16 %v1940, %v1932
    %v2421 = vpack.c.b16 %v1941, %v1933
    %v2422 = vpack.c.b16 %v1942, %v1934
    %v2423 = vpack.c.b16 %v1943, %v1935
    %v2424 = vpack.c.b16 %v1944, %v1936
    %v2425 = vpack.c.b16 %v1945, %v1937
    %v2426 = vpack.c.b16 %v1946, %v1938
    %v2427 = vpack.c.b16 %v1947, %v1939
    %v2428 = vpack.c.b16 %v1956, %v1948
    %v2429 = vpack.c.b16 %v1957, %v1949
    %v2430 = vpack.c.b16 %v1958, %v1950
    %v2431 = vpack.c.b16 %v1959, %v1951
    %v2432 = vpack.c.b16 %v1960, %v1952
    %v2433 = vpack.c.b16 %v1961, %v1953
    %v2434 = vpack.c.b16 %v1962, %v1954
    %v2435 = vpack.c.b16 %v1963, %v1955
    %v2436 = vpack.c.b16 %v1972, %v1964
    %v2437 = vpack.c.b16 %v1973, %v1965
    %v2438 = vpack.c.b16 %v1974, %v1966
    %v2439 = vpack.c.b16 %v1975, %v1967
    %v2440 = vpack.c.b16 %v1976, %v1968
    %v2441 = vpack.c.b16 %v1977, %v1969
    %v2442 = vpack.c.b16 %v1978, %v1970
    %v2443 = vpack.c.b16 %v1979, %v1971
    %v2444 = vpack.c.b16 %v1988, %v1980
    %v2445 = vpack.c.b16 %v1989, %v1981
    %v2446 = vpack.c.b16 %v1990, %v1982
    %v2447 = vpack.c.b16 %v1991, %v1983
    %v2448 = vpack.c.b16 %v1992, %v1984
    %v2449 = vpack.c.b16 %v1993, %v1985
    %v2450 = vpack.c.b16 %v1994, %v1986
    %v2451 = vpack.c.b16 %v1995, %v1987
    %v2452 = vpack.c.b16 %v2004, %v1996
    %v2453 = vpack.c.b16 %v2005, %v1997
    %v2454 = vpack.c.b16 %v2006, %v1998
    %v2455 = vpack.c.b16 %v2007, %v1999
    %v2456 = vpack.c.b16 %v2008, %v2000
    %v2457 = vpack.c.b16 %v2009, %v2001
    %v2458 = vpack.c.b16 %v2010, %v2002
    %v2459 = vpack.c.b16 %v2011, %v2003
    %v2460 = vpack.c.b16 %v2020, %v2012
    %v2461 = vpack.c.b16 %v2021, %v2013
    %v2462 = vpack.c.b16 %v2022, %v2014
    %v2463 = vpack.c.b16 %v2023, %v2015
    %v2464 = vpack.c.b16 %v2024, %v2016
    %v2465 = vpack.c.b16 %v2025, %v2017
    %v2466 = vpack.c.b16 %v2026, %v2018
    %v2467 = vpack.c.b16 %v2027, %v2019
    %v2468 = vpack.c.b16 %v2036, %v2028
    %v2469 = vpack.c.b16 %v2037, %v2029
    %v2470 = vpack.c.b16 %v2038, %v2030
    %v2471 = vpack.c.b16 %v2039, %v2031
    %v2472 = vpack.c.b16 %v2040, %v2032
    %v2473 = vpack.c.b16 %v2041, %v2033
    %v2474 = vpack.c.b16 %v2042, %v2034
    %v2475 = vpack.c.b16 %v2043, %v2035
    %v2476 = vpack.c.b16 %v2052, %v2044
    %v2477 = vpack.c.b16 %v2053, %v2045
    %v2478 = vpack.c.b16 %v2054, %v2046
    %v2479 = vpack.c.b16 %v2055, %v2047
    %v2480 = vpack.c.b16 %v2056, %v2048
    %v2481 = vpack.c.b16 %v2057, %v2049
    %v2482 = vpack.c.b16 %v2058, %v2050
    %v2483 = vpack.c.b16 %v2059, %v2051
    %v2484 = vpack.c.b16 %v2068, %v2060
    %v2485 = vpack.c.b16 %v2069, %v2061
    %v2486 = vpack.c.b16 %v2070, %v2062
    %v2487 = vpack.c.b16 %v2071, %v2063
    %v2488 = vpack.c.b16 %v2072, %v2064
    %v2489 = vpack.c.b16 %v2073, %v2065
    %v2490 = vpack.c.b16 %v2074, %v2066
    %v2491 = vpack.c.b16 %v2075, %v2067
    %v2492 = vpack.c.b16 %v2084, %v2076
    %v2493 = vpack.c.b16 %v2085, %v2077
    %v2494 = vpack.c.b16 %v2086, %v2078
    %v2495 = vpack.c.b16 %v2087, %v2079
    %v2496 = vpack.c.b16 %v2088, %v2080
    %v2497 = vpack.c.b16 %v2089, %v2081
    %v2498 = vpack.c.b16 %v2090, %v2082
    %v2499 = vpack.c.b16 %v2091, %v2083
    %v2500 = vpack.c.b16 %v2100, %v2092
    %v2501 = vpack.c.b16 %v2101, %v2093
    %v2502 = vpack.c.b16 %v2102, %v2094
    %v2503 = vpack.c.b16 %v2103, %v2095
    %v2504 = vpack.c.b16 %v2104, %v2096
    %v2505 = vpack.c.b16 %v2105, %v2097
    %v2506 = vpack.c.b16 %v2106, %v2098
    %v2507 = vpack.c.b16 %v2107, %v2099
    %v2508 = vpack.c.b16 %v2116, %v2108
    %v2509 = vpack.c.b16 %v2117, %v2109
    %v2510 = vpack.c.b16 %v2118, %v2110
    %v2511 = vpack.c.b16 %v2119, %v2111
    %v2512 = vpack.c.b16 %v2120, %v2112
    %v2513 = vpack.c.b16 %v2121, %v2113
    %v2514 = vpack.c.b16 %v2122, %v2114
    %v2515 = vpack.c.b16 %v2123, %v2115
    %v2516 = vpack.c.b16 %v2132, %v2124
    %v2517 = vpack.c.b16 %v2133, %v2125
    %v2518 = vpack.c.b16 %v2134, %v2126
    %v2519 = vpack.c.b16 %v2135, %v2127
    %v2520 = vpack.c.b16 %v2136, %v2128
    %v2521 = vpack.c.b16 %v2137, %v2129
    %v2522 = vpack.c.b16 %v2138, %v2130
    %v2523 = vpack.c.b16 %v2139, %v2131
    %v2524 = vpack.c.b16 %v2148, %v2140
    %v2525 = vpack.c.b16 %v2149, %v2141
    %v2526 = vpack.c.b16 %v2150, %v2142
    %v2527 = vpack.c.b16 %v2151, %v2143
    %v2528 = vpack.c.b16 %v2152, %v2144
    %v2529 = vpack.c.b16 %v2153, %v2145
    %v2530 = vpack.c.b16 %v2154, %v2146
    %v2531 = vpack.c.b16 %v2155, %v2147
    %v2532 = vpack.c.b16 %v2164, %v2156
    %v2533 = vpack.c.b16 %v2165, %v2157
    %v2534 = vpack.c.b16 %v2166, %v2158
    %v2535 = vpack.c.b16 %v2167, %v2159
    %v2536 = vpack.c.b16 %v2168, %v2160
    %v2537 = vpack.c.b16 %v2169, %v2161
    %v2538 = vpack.c.b16 %v2170, %v2162
    %v2539 = vpack.c.b16 %v2171, %v2163
    %v2540 = vpack.c.b16 %v2180, %v2172
    %v2541 = vpack.c.b16 %v2181, %v2173
    %v2542 = vpack.c.b16 %v2182, %v2174
    %v2543 = vpack.c.b16 %v2183, %v2175
    %v2544 = vpack.c.b16 %v2184, %v2176
    %v2545 = vpack.c.b16 %v2185, %v2177
    %v2546 = vpack.c.b16 %v2186, %v2178
    %v2547 = vpack.c.b16 %v2187, %v2179
    %v2548 = vpack.c.b16 %v2196, %v2188
    %v2549 = vpack.c.b16 %v2197, %v2189
    %v2550 = vpack.c.b16 %v2198, %v2190
    %v2551 = vpack.c.b16 %v2199, %v2191
    %v2552 = vpack.c.b16 %v2200, %v2192
    %v2553 = vpack.c.b16 %v2201, %v2193
    %v2554 = vpack.c.b16 %v2202, %v2194
    %v2555 = vpack.c.b16 %v2203, %v2195
    %v2556 = vpack.c.b16 %v2212, %v2204
    %v2557 = vpack.c.b16 %v2213, %v2205
    %v2558 = vpack.c.b16 %v2214, %v2206
    %v2559 = vpack.c.b16 %v2215, %v2207
    %v2560 = vpack.c.b16 %v2216, %v2208
    %v2561 = vpack.c.b16 %v2217, %v2209
    %v2562 = vpack.c.b16 %v2218, %v2210
    %v2563 = vpack.c.b16 %v2219, %v2211
    %v2564 = vpack.c.b16 %v2228, %v2220
    %v2565 = vpack.c.b16 %v2229, %v2221
    %v2566 = vpack.c.b16 %v2230, %v2222
    %v2567 = vpack.c.b16 %v2231, %v2223
    %v2568 = vpack.c.b16 %v2232, %v2224
    %v2569 = vpack.c.b16 %v2233, %v2225
    %v2570 = vpack.c.b16 %v2234, %v2226
    %v2571 = vpack.c.b16 %v2235, %v2227
    %v2572 = vpack.c.b16 %v2244, %v2236
    %v2573 = vpack.c.b16 %v2245, %v2237
    %v2574 = vpack.c.b16 %v2246, %v2238
    %v2575 = vpack.c.b16 %v2247, %v2239
    %v2576 = vpack.c.b16 %v2248, %v2240
    %v2577 = vpack.c.b16 %v2249, %v2241
    %v2578 = vpack.c.b16 %v2250, %v2242
    %v2579 = vpack.c.b16 %v2251, %v2243
    %v2580 = vpack.c.b16 %v2260, %v2252
    %v2581 = vpack.c.b16 %v2261, %v2253
    %v2582 = vpack.c.b16 %v2262, %v2254
    %v2583 = vpack.c.b16 %v2263, %v2255
    %v2584 = vpack.c.b16 %v2264, %v2256
    %v2585 = vpack.c.b16 %v2265, %v2257
    %v2586 = vpack.c.b16 %v2266, %v2258
    %v2587 = vpack.c.b16 %v2267, %v2259
    %v2588 = vpack.c.b16 %v2276, %v2268
    %v2589 = vpack.c.b16 %v2277, %v2269
    %v2590 = vpack.c.b16 %v2278, %v2270
    %v2591 = vpack.c.b16 %v2279, %v2271
    %v2592 = vpack.c.b16 %v2280, %v2272
    %v2593 = vpack.c.b16 %v2281, %v2273
    %v2594 = vpack.c.b16 %v2282, %v2274
    %v2595 = vpack.c.b16 %v2283, %v2275
    %v2596 = vpack.c.b16 %v2292, %v2284
    %v2597 = vpack.c.b16 %v2293, %v2285
    %v2598 = vpack.c.b16 %v2294, %v2286
    %v2599 = vpack.c.b16 %v2295, %v2287
    %v2600 = vpack.c.b16 %v2296, %v2288
    %v2601 = vpack.c.b16 %v2297, %v2289
    %v2602 = vpack.c.b16 %v2298, %v2290
    %v2603 = vpack.c.b16 %v2299, %v2291
    %v2604 = vpack.c.b16 %v2308, %v2300
    %v2605 = vpack.c.b16 %v2309, %v2301
    %v2606 = vpack.c.b16 %v2310, %v2302
    %v2607 = vpack.c.b16 %v2311, %v2303
    %v2608 = vpack.c.b16 %v2312, %v2304
    %v2609 = vpack.c.b16 %v2313, %v2305
    %v2610 = vpack.c.b16 %v2314, %v2306
    %v2611 = vpack.c.b16 %v2315, %v2307
    %v2612 = vpack.c.b16 %v2324, %v2316
    %v2613 = vpack.c.b16 %v2325, %v2317
    %v2614 = vpack.c.b16 %v2326, %v2318
    %v2615 = vpack.c.b16 %v2327, %v2319
    %v2616 = vpack.c.b16 %v2328, %v2320
    %v2617 = vpack.c.b16 %v2329, %v2321
    %v2618 = vpack.c.b16 %v2330, %v2322
    %v2619 = vpack.c.b16 %v2331, %v2323
    %v2620 = vpack.c.b16 %v2340, %v2332
    %v2621 = vpack.c.b16 %v2341, %v2333
    %v2622 = vpack.c.b16 %v2342, %v2334
    %v2623 = vpack.c.b16 %v2343, %v2335
    %v2624 = vpack.c.b16 %v2344, %v2336
    %v2625 = vpack.c.b16 %v2345, %v2337
    %v2626 = vpack.c.b16 %v2346, %v2338
    %v2627 = vpack.c.b16 %v2347, %v2339
    %v2628 = vpack.c.b16 %v2356, %v2348
    %v2629 = vpack.c.b16 %v2357, %v2349
    %v2630 = vpack.c.b16 %v2358, %v2350
    %v2631 = vpack.c.b16 %v2359, %v2351
    %v2632 = vpack.c.b16 %v2360, %v2352
    %v2633 = vpack.c.b16 %v2361, %v2353
    %v2634 = vpack.c.b16 %v2362, %v2354
    %v2635 = vpack.c.b16 %v2363, %v2355
    %v2636 = vpack.c.b16 %v2372, %v2364
    %v2637 = vpack.c.b16 %v2373, %v2365
    %v2638 = vpack.c.b16 %v2374, %v2366
    %v2639 = vpack.c.b16 %v2375, %v2367
    %v2640 = vpack.c.b16 %v2376, %v2368
    %v2641 = vpack.c.b16 %v2377, %v2369
    %v2642 = vpack.c.b16 %v2378, %v2370
    %v2643 = vpack.c.b16 %v2379, %v2371
    %v2644 = vpack.c.b16 %v2388, %v2380
    %v2645 = vpack.c.b16 %v2389, %v2381
    %v2646 = vpack.c.b16 %v2390, %v2382
    %v2647 = vpack.c.b16 %v2391, %v2383
    %v2648 = vpack.c.b16 %v2392, %v2384
    %v2649 = vpack.c.b16 %v2393, %v2385
    %v2650 = vpack.c.b16 %v2394, %v2386
    %v2651 = vpack.c.b16 %v2395, %v2387
    %2908 = vmatpush.bf16.msra.mxu0 %v2452
    %2909 = vmatpush.bf16.msra.mxu0 %v2444
    %2910 = vmatpush.bf16.msra.mxu0 %v2436
    %2911 = vmatpush.bf16.msra.mxu0 %v2428
    %2912 = vmatpush.bf16.msra.mxu0 %v2420
    %2913 = vmatpush.bf16.msra.mxu0 %v2412
    %2914 = vmatpush.bf16.msra.mxu0 %v2404
    %2915 = vmatpush.bf16.msra.mxu0 %v2396
    %2916 = vmatmul.bf16.gmra.mxu0 %v1344
    %v2917 = vpop.f32.mrf.mxu0
    %v2918 = vadd.f32 %v1612, %v2917
    %v2919 = vpop.f32.mrf.mxu0
    %2920 = vdwg.mxu0
    %2921 = vmatpush.bf16.msra.mxu0 %v2516
    %2922 = vmatpush.bf16.msra.mxu0 %v2508
    %2923 = vmatpush.bf16.msra.mxu0 %v2500
    %2924 = vmatpush.bf16.msra.mxu0 %v2492
    %2925 = vmatpush.bf16.msra.mxu0 %v2484
    %2926 = vmatpush.bf16.msra.mxu0 %v2476
    %2927 = vmatpush.bf16.msra.mxu0 %v2468
    %2928 = vmatpush.bf16.msra.mxu0 %v2460
    %2929 = vmatmul.bf16.gmra.mxu0 %v1345
    %v2930 = vpop.f32.mrf.mxu0
    %v2931 = vadd.f32 %v2918, %v2930
    %v2932 = vpop.f32.mrf.mxu0
    %2933 = vdwg.mxu0
    %2934 = vmatpush.bf16.msra.mxu0 %v2580
    %2935 = vmatpush.bf16.msra.mxu0 %v2572
    %2936 = vmatpush.bf16.msra.mxu0 %v2564
    %2937 = vmatpush.bf16.msra.mxu0 %v2556
    %2938 = vmatpush.bf16.msra.mxu0 %v2548
    %2939 = vmatpush.bf16.msra.mxu0 %v2540
    %2940 = vmatpush.bf16.msra.mxu0 %v2532
    %2941 = vmatpush.bf16.msra.mxu0 %v2524
    %2942 = vmatmul.bf16.gmra.mxu0 %v1346
    %v2943 = vpop.f32.mrf.mxu0
    %v2944 = vadd.f32 %v2931, %v2943
    %v2945 = vpop.f32.mrf.mxu0
    %2946 = vdwg.mxu0
    %2947 = vmatpush.bf16.msra.mxu0 %v2644
    %2948 = vmatpush.bf16.msra.mxu0 %v2636
    %2949 = vmatpush.bf16.msra.mxu0 %v2628
    %2950 = vmatpush.bf16.msra.mxu0 %v2620
    %2951 = vmatpush.bf16.msra.mxu0 %v2612
    %2952 = vmatpush.bf16.msra.mxu0 %v2604
    %2953 = vmatpush.bf16.msra.mxu0 %v2596
    %2954 = vmatpush.bf16.msra.mxu0 %v2588
    %2955 = vmatmul.bf16.gmra.mxu0 %v1347
    %v2956 = vpop.f32.mrf.mxu0
    %v2957 = vadd.f32 %v2944, %v2956
    %v2958 = vpop.f32.mrf.mxu0
    %2959 = vdwg.mxu0
    %2960 = vmatpush.bf16.msra.mxu0 %v2453
    %2961 = vmatpush.bf16.msra.mxu0 %v2445
    %2962 = vmatpush.bf16.msra.mxu0 %v2437
    %2963 = vmatpush.bf16.msra.mxu0 %v2429
    %2964 = vmatpush.bf16.msra.mxu0 %v2421
    %2965 = vmatpush.bf16.msra.mxu0 %v2413
    %2966 = vmatpush.bf16.msra.mxu0 %v2405
    %2967 = vmatpush.bf16.msra.mxu0 %v2397
    %2968 = vmatmul.bf16.gmra.mxu0 %v1344
    %v2969 = vpop.f32.mrf.mxu0
    %v2970 = vadd.f32 %v1613, %v2969
    %v2971 = vpop.f32.mrf.mxu0
    %2972 = vdwg.mxu0
    %2973 = vmatpush.bf16.msra.mxu0 %v2517
    %2974 = vmatpush.bf16.msra.mxu0 %v2509
    %2975 = vmatpush.bf16.msra.mxu0 %v2501
    %2976 = vmatpush.bf16.msra.mxu0 %v2493
    %2977 = vmatpush.bf16.msra.mxu0 %v2485
    %2978 = vmatpush.bf16.msra.mxu0 %v2477
    %2979 = vmatpush.bf16.msra.mxu0 %v2469
    %2980 = vmatpush.bf16.msra.mxu0 %v2461
    %2981 = vmatmul.bf16.gmra.mxu0 %v1345
    %v2982 = vpop.f32.mrf.mxu0
    %v2983 = vadd.f32 %v2970, %v2982
    %v2984 = vpop.f32.mrf.mxu0
    %2985 = vdwg.mxu0
    %2986 = vmatpush.bf16.msra.mxu0 %v2581
    %2987 = vmatpush.bf16.msra.mxu0 %v2573
    %2988 = vmatpush.bf16.msra.mxu0 %v2565
    %2989 = vmatpush.bf16.msra.mxu0 %v2557
    %2990 = vmatpush.bf16.msra.mxu0 %v2549
    %2991 = vmatpush.bf16.msra.mxu0 %v2541
    %2992 = vmatpush.bf16.msra.mxu0 %v2533
    %2993 = vmatpush.bf16.msra.mxu0 %v2525
    %2994 = vmatmul.bf16.gmra.mxu0 %v1346
    %v2995 = vpop.f32.mrf.mxu0
    %v2996 = vadd.f32 %v2983, %v2995
    %v2997 = vpop.f32.mrf.mxu0
    %2998 = vdwg.mxu0
    %2999 = vmatpush.bf16.msra.mxu0 %v2645
    %3000 = vmatpush.bf16.msra.mxu0 %v2637
    %3001 = vmatpush.bf16.msra.mxu0 %v2629
    %3002 = vmatpush.bf16.msra.mxu0 %v2621
    %3003 = vmatpush.bf16.msra.mxu0 %v2613
    %3004 = vmatpush.bf16.msra.mxu0 %v2605
    %3005 = vmatpush.bf16.msra.mxu0 %v2597
    %3006 = vmatpush.bf16.msra.mxu0 %v2589
    %3007 = vmatmul.bf16.gmra.mxu0 %v1347
    %v3008 = vpop.f32.mrf.mxu0
    %v3009 = vadd.f32 %v2996, %v3008
    %v3010 = vpop.f32.mrf.mxu0
    %3011 = vdwg.mxu0
    %3012 = vmatpush.bf16.msra.mxu0 %v2454
    %3013 = vmatpush.bf16.msra.mxu0 %v2446
    %3014 = vmatpush.bf16.msra.mxu0 %v2438
    %3015 = vmatpush.bf16.msra.mxu0 %v2430
    %3016 = vmatpush.bf16.msra.mxu0 %v2422
    %3017 = vmatpush.bf16.msra.mxu0 %v2414
    %3018 = vmatpush.bf16.msra.mxu0 %v2406
    %3019 = vmatpush.bf16.msra.mxu0 %v2398
    %3020 = vmatmul.bf16.gmra.mxu0 %v1344
    %v3021 = vpop.f32.mrf.mxu0
    %v3022 = vadd.f32 %v1614, %v3021
    %v3023 = vpop.f32.mrf.mxu0
    %3024 = vdwg.mxu0
    %3025 = vmatpush.bf16.msra.mxu0 %v2518
    %3026 = vmatpush.bf16.msra.mxu0 %v2510
    %3027 = vmatpush.bf16.msra.mxu0 %v2502
    %3028 = vmatpush.bf16.msra.mxu0 %v2494
    %3029 = vmatpush.bf16.msra.mxu0 %v2486
    %3030 = vmatpush.bf16.msra.mxu0 %v2478
    %3031 = vmatpush.bf16.msra.mxu0 %v2470
    %3032 = vmatpush.bf16.msra.mxu0 %v2462
    %3033 = vmatmul.bf16.gmra.mxu0 %v1345
    %v3034 = vpop.f32.mrf.mxu0
    %v3035 = vadd.f32 %v3022, %v3034
    %v3036 = vpop.f32.mrf.mxu0
    %3037 = vdwg.mxu0
    %3038 = vmatpush.bf16.msra.mxu0 %v2582
    %3039 = vmatpush.bf16.msra.mxu0 %v2574
    %3040 = vmatpush.bf16.msra.mxu0 %v2566
    %3041 = vmatpush.bf16.msra.mxu0 %v2558
    %3042 = vmatpush.bf16.msra.mxu0 %v2550
    %3043 = vmatpush.bf16.msra.mxu0 %v2542
    %3044 = vmatpush.bf16.msra.mxu0 %v2534
    %3045 = vmatpush.bf16.msra.mxu0 %v2526
    %3046 = vmatmul.bf16.gmra.mxu0 %v1346
    %v3047 = vpop.f32.mrf.mxu0
    %v3048 = vadd.f32 %v3035, %v3047
    %v3049 = vpop.f32.mrf.mxu0
    %3050 = vdwg.mxu0
    %3051 = vmatpush.bf16.msra.mxu0 %v2646
    %3052 = vmatpush.bf16.msra.mxu0 %v2638
    %3053 = vmatpush.bf16.msra.mxu0 %v2630
    %3054 = vmatpush.bf16.msra.mxu0 %v2622
    %3055 = vmatpush.bf16.msra.mxu0 %v2614
    %3056 = vmatpush.bf16.msra.mxu0 %v2606
    %3057 = vmatpush.bf16.msra.mxu0 %v2598
    %3058 = vmatpush.bf16.msra.mxu0 %v2590
    %3059 = vmatmul.bf16.gmra.mxu0 %v1347
    %v3060 = vpop.f32.mrf.mxu0
    %v3061 = vadd.f32 %v3048, %v3060
    %v3062 = vpop.f32.mrf.mxu0
    %3063 = vdwg.mxu0
    %3064 = vmatpush.bf16.msra.mxu0 %v2455
    %3065 = vmatpush.bf16.msra.mxu0 %v2447
    %3066 = vmatpush.bf16.msra.mxu0 %v2439
    %3067 = vmatpush.bf16.msra.mxu0 %v2431
    %3068 = vmatpush.bf16.msra.mxu0 %v2423
    %3069 = vmatpush.bf16.msra.mxu0 %v2415
    %3070 = vmatpush.bf16.msra.mxu0 %v2407
    %3071 = vmatpush.bf16.msra.mxu0 %v2399
    %3072 = vmatmul.bf16.gmra.mxu0 %v1344
    %v3073 = vpop.f32.mrf.mxu0
    %v3074 = vadd.f32 %v1615, %v3073
    %v3075 = vpop.f32.mrf.mxu0
    %3076 = vdwg.mxu0
    %3077 = vmatpush.bf16.msra.mxu0 %v2519
    %3078 = vmatpush.bf16.msra.mxu0 %v2511
    %3079 = vmatpush.bf16.msra.mxu0 %v2503
    %3080 = vmatpush.bf16.msra.mxu0 %v2495
    %3081 = vmatpush.bf16.msra.mxu0 %v2487
    %3082 = vmatpush.bf16.msra.mxu0 %v2479
    %3083 = vmatpush.bf16.msra.mxu0 %v2471
    %3084 = vmatpush.bf16.msra.mxu0 %v2463
    %3085 = vmatmul.bf16.gmra.mxu0 %v1345
    %v3086 = vpop.f32.mrf.mxu0
    %v3087 = vadd.f32 %v3074, %v3086
    %v3088 = vpop.f32.mrf.mxu0
    %3089 = vdwg.mxu0
    %3090 = vmatpush.bf16.msra.mxu0 %v2583
    %3091 = vmatpush.bf16.msra.mxu0 %v2575
    %3092 = vmatpush.bf16.msra.mxu0 %v2567
    %3093 = vmatpush.bf16.msra.mxu0 %v2559
    %3094 = vmatpush.bf16.msra.mxu0 %v2551
    %3095 = vmatpush.bf16.msra.mxu0 %v2543
    %3096 = vmatpush.bf16.msra.mxu0 %v2535
    %3097 = vmatpush.bf16.msra.mxu0 %v2527
    %3098 = vmatmul.bf16.gmra.mxu0 %v1346
    %v3099 = vpop.f32.mrf.mxu0
    %v3100 = vadd.f32 %v3087, %v3099
    %v3101 = vpop.f32.mrf.mxu0
    %3102 = vdwg.mxu0
    %3103 = vmatpush.bf16.msra.mxu0 %v2647
    %3104 = vmatpush.bf16.msra.mxu0 %v2639
    %3105 = vmatpush.bf16.msra.mxu0 %v2631
    %3106 = vmatpush.bf16.msra.mxu0 %v2623
    %3107 = vmatpush.bf16.msra.mxu0 %v2615
    %3108 = vmatpush.bf16.msra.mxu0 %v2607
    %3109 = vmatpush.bf16.msra.mxu0 %v2599
    %3110 = vmatpush.bf16.msra.mxu0 %v2591
    %3111 = vmatmul.bf16.gmra.mxu0 %v1347
    %v3112 = vpop.f32.mrf.mxu0
    %v3113 = vadd.f32 %v3100, %v3112
    %v3114 = vpop.f32.mrf.mxu0
    %3115 = vdwg.mxu0
    %3116 = vmatpush.bf16.msra.mxu0 %v2456
    %3117 = vmatpush.bf16.msra.mxu0 %v2448
    %3118 = vmatpush.bf16.msra.mxu0 %v2440
    %3119 = vmatpush.bf16.msra.mxu0 %v2432
    %3120 = vmatpush.bf16.msra.mxu0 %v2424
    %3121 = vmatpush.bf16.msra.mxu0 %v2416
    %3122 = vmatpush.bf16.msra.mxu0 %v2408
    %3123 = vmatpush.bf16.msra.mxu0 %v2400
    %3124 = vmatmul.bf16.gmra.mxu0 %v1344
    %v3125 = vpop.f32.mrf.mxu0
    %v3126 = vadd.f32 %v1616, %v3125
    %v3127 = vpop.f32.mrf.mxu0
    %3128 = vdwg.mxu0
    %3129 = vmatpush.bf16.msra.mxu0 %v2520
    %3130 = vmatpush.bf16.msra.mxu0 %v2512
    %3131 = vmatpush.bf16.msra.mxu0 %v2504
    %3132 = vmatpush.bf16.msra.mxu0 %v2496
    %3133 = vmatpush.bf16.msra.mxu0 %v2488
    %3134 = vmatpush.bf16.msra.mxu0 %v2480
    %3135 = vmatpush.bf16.msra.mxu0 %v2472
    %3136 = vmatpush.bf16.msra.mxu0 %v2464
    %3137 = vmatmul.bf16.gmra.mxu0 %v1345
    %v3138 = vpop.f32.mrf.mxu0
    %v3139 = vadd.f32 %v3126, %v3138
    %v3140 = vpop.f32.mrf.mxu0
    %3141 = vdwg.mxu0
    %3142 = vmatpush.bf16.msra.mxu0 %v2584
    %3143 = vmatpush.bf16.msra.mxu0 %v2576
    %3144 = vmatpush.bf16.msra.mxu0 %v2568
    %3145 = vmatpush.bf16.msra.mxu0 %v2560
    %3146 = vmatpush.bf16.msra.mxu0 %v2552
    %3147 = vmatpush.bf16.msra.mxu0 %v2544
    %3148 = vmatpush.bf16.msra.mxu0 %v2536
    %3149 = vmatpush.bf16.msra.mxu0 %v2528
    %3150 = vmatmul.bf16.gmra.mxu0 %v1346
    %v3151 = vpop.f32.mrf.mxu0
    %v3152 = vadd.f32 %v3139, %v3151
    %v3153 = vpop.f32.mrf.mxu0
    %3154 = vdwg.mxu0
    %3155 = vmatpush.bf16.msra.mxu0 %v2648
    %3156 = vmatpush.bf16.msra.mxu0 %v2640
    %3157 = vmatpush.bf16.msra.mxu0 %v2632
    %3158 = vmatpush.bf16.msra.mxu0 %v2624
    %3159 = vmatpush.bf16.msra.mxu0 %v2616
    %3160 = vmatpush.bf16.msra.mxu0 %v2608
    %3161 = vmatpush.bf16.msra.mxu0 %v2600
    %3162 = vmatpush.bf16.msra.mxu0 %v2592
    %3163 = vmatmul.bf16.gmra.mxu0 %v1347
    %v3164 = vpop.f32.mrf.mxu0
    %v3165 = vadd.f32 %v3152, %v3164
    %v3166 = vpop.f32.mrf.mxu0
    %3167 = vdwg.mxu0
    %3168 = vmatpush.bf16.msra.mxu0 %v2457
    %3169 = vmatpush.bf16.msra.mxu0 %v2449
    %3170 = vmatpush.bf16.msra.mxu0 %v2441
    %3171 = vmatpush.bf16.msra.mxu0 %v2433
    %3172 = vmatpush.bf16.msra.mxu0 %v2425
    %3173 = vmatpush.bf16.msra.mxu0 %v2417
    %3174 = vmatpush.bf16.msra.mxu0 %v2409
    %3175 = vmatpush.bf16.msra.mxu0 %v2401
    %3176 = vmatmul.bf16.gmra.mxu0 %v1344
    %v3177 = vpop.f32.mrf.mxu0
    %v3178 = vadd.f32 %v1617, %v3177
    %v3179 = vpop.f32.mrf.mxu0
    %3180 = vdwg.mxu0
    %3181 = vmatpush.bf16.msra.mxu0 %v2521
    %3182 = vmatpush.bf16.msra.mxu0 %v2513
    %3183 = vmatpush.bf16.msra.mxu0 %v2505
    %3184 = vmatpush.bf16.msra.mxu0 %v2497
    %3185 = vmatpush.bf16.msra.mxu0 %v2489
    %3186 = vmatpush.bf16.msra.mxu0 %v2481
    %3187 = vmatpush.bf16.msra.mxu0 %v2473
    %3188 = vmatpush.bf16.msra.mxu0 %v2465
    %3189 = vmatmul.bf16.gmra.mxu0 %v1345
    %v3190 = vpop.f32.mrf.mxu0
    %v3191 = vadd.f32 %v3178, %v3190
    %v3192 = vpop.f32.mrf.mxu0
    %3193 = vdwg.mxu0
    %3194 = vmatpush.bf16.msra.mxu0 %v2585
    %3195 = vmatpush.bf16.msra.mxu0 %v2577
    %3196 = vmatpush.bf16.msra.mxu0 %v2569
    %3197 = vmatpush.bf16.msra.mxu0 %v2561
    %3198 = vmatpush.bf16.msra.mxu0 %v2553
    %3199 = vmatpush.bf16.msra.mxu0 %v2545
    %3200 = vmatpush.bf16.msra.mxu0 %v2537
    %3201 = vmatpush.bf16.msra.mxu0 %v2529
    %3202 = vmatmul.bf16.gmra.mxu0 %v1346
    %v3203 = vpop.f32.mrf.mxu0
    %v3204 = vadd.f32 %v3191, %v3203
    %v3205 = vpop.f32.mrf.mxu0
    %3206 = vdwg.mxu0
    %3207 = vmatpush.bf16.msra.mxu0 %v2649
    %3208 = vmatpush.bf16.msra.mxu0 %v2641
    %3209 = vmatpush.bf16.msra.mxu0 %v2633
    %3210 = vmatpush.bf16.msra.mxu0 %v2625
    %3211 = vmatpush.bf16.msra.mxu0 %v2617
    %3212 = vmatpush.bf16.msra.mxu0 %v2609
    %3213 = vmatpush.bf16.msra.mxu0 %v2601
    %3214 = vmatpush.bf16.msra.mxu0 %v2593
    %3215 = vmatmul.bf16.gmra.mxu0 %v1347
    %v3216 = vpop.f32.mrf.mxu0
    %v3217 = vadd.f32 %v3204, %v3216
    %v3218 = vpop.f32.mrf.mxu0
    %3219 = vdwg.mxu0
    %3220 = vmatpush.bf16.msra.mxu0 %v2458
    %3221 = vmatpush.bf16.msra.mxu0 %v2450
    %3222 = vmatpush.bf16.msra.mxu0 %v2442
    %3223 = vmatpush.bf16.msra.mxu0 %v2434
    %3224 = vmatpush.bf16.msra.mxu0 %v2426
    %3225 = vmatpush.bf16.msra.mxu0 %v2418
    %3226 = vmatpush.bf16.msra.mxu0 %v2410
    %3227 = vmatpush.bf16.msra.mxu0 %v2402
    %3228 = vmatmul.bf16.gmra.mxu0 %v1344
    %v3229 = vpop.f32.mrf.mxu0
    %v3230 = vadd.f32 %v1618, %v3229
    %v3231 = vpop.f32.mrf.mxu0
    %3232 = vdwg.mxu0
    %3233 = vmatpush.bf16.msra.mxu0 %v2522
    %3234 = vmatpush.bf16.msra.mxu0 %v2514
    %3235 = vmatpush.bf16.msra.mxu0 %v2506
    %3236 = vmatpush.bf16.msra.mxu0 %v2498
    %3237 = vmatpush.bf16.msra.mxu0 %v2490
    %3238 = vmatpush.bf16.msra.mxu0 %v2482
    %3239 = vmatpush.bf16.msra.mxu0 %v2474
    %3240 = vmatpush.bf16.msra.mxu0 %v2466
    %3241 = vmatmul.bf16.gmra.mxu0 %v1345
    %v3242 = vpop.f32.mrf.mxu0
    %v3243 = vadd.f32 %v3230, %v3242
    %v3244 = vpop.f32.mrf.mxu0
    %3245 = vdwg.mxu0
    %3246 = vmatpush.bf16.msra.mxu0 %v2586
    %3247 = vmatpush.bf16.msra.mxu0 %v2578
    %3248 = vmatpush.bf16.msra.mxu0 %v2570
    %3249 = vmatpush.bf16.msra.mxu0 %v2562
    %3250 = vmatpush.bf16.msra.mxu0 %v2554
    %3251 = vmatpush.bf16.msra.mxu0 %v2546
    %3252 = vmatpush.bf16.msra.mxu0 %v2538
    %3253 = vmatpush.bf16.msra.mxu0 %v2530
    %3254 = vmatmul.bf16.gmra.mxu0 %v1346
    %v3255 = vpop.f32.mrf.mxu0
    %v3256 = vadd.f32 %v3243, %v3255
    %v3257 = vpop.f32.mrf.mxu0
    %3258 = vdwg.mxu0
    %3259 = vmatpush.bf16.msra.mxu0 %v2650
    %3260 = vmatpush.bf16.msra.mxu0 %v2642
    %3261 = vmatpush.bf16.msra.mxu0 %v2634
    %3262 = vmatpush.bf16.msra.mxu0 %v2626
    %3263 = vmatpush.bf16.msra.mxu0 %v2618
    %3264 = vmatpush.bf16.msra.mxu0 %v2610
    %3265 = vmatpush.bf16.msra.mxu0 %v2602
    %3266 = vmatpush.bf16.msra.mxu0 %v2594
    %3267 = vmatmul.bf16.gmra.mxu0 %v1347
    %v3268 = vpop.f32.mrf.mxu0
    %v3269 = vadd.f32 %v3256, %v3268
    %v3270 = vpop.f32.mrf.mxu0
    %3271 = vdwg.mxu0
    %3272 = vmatpush.bf16.msra.mxu0 %v2459
    %3273 = vmatpush.bf16.msra.mxu0 %v2451
    %3274 = vmatpush.bf16.msra.mxu0 %v2443
    %3275 = vmatpush.bf16.msra.mxu0 %v2435
    %3276 = vmatpush.bf16.msra.mxu0 %v2427
    %3277 = vmatpush.bf16.msra.mxu0 %v2419
    %3278 = vmatpush.bf16.msra.mxu0 %v2411
    %3279 = vmatpush.bf16.msra.mxu0 %v2403
    %3280 = vmatmul.bf16.gmra.mxu0 %v1344
    %v3281 = vpop.f32.mrf.mxu0
    %v3282 = vadd.f32 %v1619, %v3281
    %v3283 = vpop.f32.mrf.mxu0
    %3284 = vdwg.mxu0
    %3285 = vmatpush.bf16.msra.mxu0 %v2523
    %3286 = vmatpush.bf16.msra.mxu0 %v2515
    %3287 = vmatpush.bf16.msra.mxu0 %v2507
    %3288 = vmatpush.bf16.msra.mxu0 %v2499
    %3289 = vmatpush.bf16.msra.mxu0 %v2491
    %3290 = vmatpush.bf16.msra.mxu0 %v2483
    %3291 = vmatpush.bf16.msra.mxu0 %v2475
    %3292 = vmatpush.bf16.msra.mxu0 %v2467
    %3293 = vmatmul.bf16.gmra.mxu0 %v1345
    %v3294 = vpop.f32.mrf.mxu0
    %v3295 = vadd.f32 %v3282, %v3294
    %v3296 = vpop.f32.mrf.mxu0
    %3297 = vdwg.mxu0
    %3298 = vmatpush.bf16.msra.mxu0 %v2587
    %3299 = vmatpush.bf16.msra.mxu0 %v2579
    %3300 = vmatpush.bf16.msra.mxu0 %v2571
    %3301 = vmatpush.bf16.msra.mxu0 %v2563
    %3302 = vmatpush.bf16.msra.mxu0 %v2555
    %3303 = vmatpush.bf16.msra.mxu0 %v2547
    %3304 = vmatpush.bf16.msra.mxu0 %v2539
    %3305 = vmatpush.bf16.msra.mxu0 %v2531
    %3306 = vmatmul.bf16.gmra.mxu0 %v1346
    %v3307 = vpop.f32.mrf.mxu0
    %v3308 = vadd.f32 %v3295, %v3307
    %v3309 = vpop.f32.mrf.mxu0
    %3310 = vdwg.mxu0
    %3311 = vmatpush.bf16.msra.mxu0 %v2651
    %3312 = vmatpush.bf16.msra.mxu0 %v2643
    %3313 = vmatpush.bf16.msra.mxu0 %v2635
    %3314 = vmatpush.bf16.msra.mxu0 %v2627
    %3315 = vmatpush.bf16.msra.mxu0 %v2619
    %3316 = vmatpush.bf16.msra.mxu0 %v2611
    %3317 = vmatpush.bf16.msra.mxu0 %v2603
    %3318 = vmatpush.bf16.msra.mxu0 %v2595
    %3319 = vmatmul.bf16.gmra.mxu0 %v1347
    %v3320 = vpop.f32.mrf.mxu0
    %v3321 = vadd.f32 %v3308, %v3320
    %v3322 = vpop.f32.mrf.mxu0
    %3323 = vdwg.mxu0
    %v3324 = vld [vmem:[#allocation3] sm:$0xff]
    %v3325 = vld [vmem:[#allocation3 + $0x8] sm:$0xff]
    %v3326 = vld [vmem:[#allocation3 + $0x10] sm:$0xff]
    %v3327 = vld [vmem:[#allocation3 + $0x18] sm:$0xff]
    %v3328 = vld [vmem:[#allocation3 + $0x20] sm:$0xff]
    %v3329 = vld [vmem:[#allocation3 + $0x28] sm:$0xff]
    %v3330 = vld [vmem:[#allocation3 + $0x30] sm:$0xff]
    %v3331 = vld [vmem:[#allocation3 + $0x38] sm:$0xff]
    %v3332 = vld [vmem:[#allocation3 + $0x40] sm:$0xff]
    %v3333 = vld [vmem:[#allocation3 + $0x48] sm:$0xff]
    %v3334 = vld [vmem:[#allocation3 + $0x50] sm:$0xff]
    %v3335 = vld [vmem:[#allocation3 + $0x58] sm:$0xff]
    %v3336 = vld [vmem:[#allocation3 + $0x60] sm:$0xff]
    %v3337 = vld [vmem:[#allocation3 + $0x68] sm:$0xff]
    %v3338 = vld [vmem:[#allocation3 + $0x70] sm:$0xff]
    %v3339 = vld [vmem:[#allocation3 + $0x78] sm:$0xff]
    %v3340 = vld [vmem:[#allocation3 + $0x80] sm:$0xff]
    %v3341 = vld [vmem:[#allocation3 + $0x88] sm:$0xff]
    %v3342 = vld [vmem:[#allocation3 + $0x90] sm:$0xff]
    %v3343 = vld [vmem:[#allocation3 + $0x98] sm:$0xff]
    %v3344 = vld [vmem:[#allocation3 + $0xa0] sm:$0xff]
    %v3345 = vld [vmem:[#allocation3 + $0xa8] sm:$0xff]
    %v3346 = vld [vmem:[#allocation3 + $0xb0] sm:$0xff]
    %v3347 = vld [vmem:[#allocation3 + $0xb8] sm:$0xff]
    %v3348 = vld [vmem:[#allocation3 + $0xc0] sm:$0xff]
    %v3349 = vld [vmem:[#allocation3 + $0xc8] sm:$0xff]
    %v3350 = vld [vmem:[#allocation3 + $0xd0] sm:$0xff]
    %v3351 = vld [vmem:[#allocation3 + $0xd8] sm:$0xff]
    %v3352 = vld [vmem:[#allocation3 + $0xe0] sm:$0xff]
    %v3353 = vld [vmem:[#allocation3 + $0xe8] sm:$0xff]
    %v3354 = vld [vmem:[#allocation3 + $0xf0] sm:$0xff]
    %v3355 = vld [vmem:[#allocation3 + $0xf8] sm:$0xff]
    %v3388 = vunpack.c.l.b16 %v3324
    %v3389 = vunpack.c.h.b16 %v3324
    %v3390 = vunpack.c.l.b16 %v3325
    %v3391 = vunpack.c.h.b16 %v3325
    %v3392 = vunpack.c.l.b16 %v3326
    %v3393 = vunpack.c.h.b16 %v3326
    %v3394 = vunpack.c.l.b16 %v3327
    %v3395 = vunpack.c.h.b16 %v3327
    %v3396 = vunpack.c.l.b16 %v3328
    %v3397 = vunpack.c.h.b16 %v3328
    %v3398 = vunpack.c.l.b16 %v3329
    %v3399 = vunpack.c.h.b16 %v3329
    %v3400 = vunpack.c.l.b16 %v3330
    %v3401 = vunpack.c.h.b16 %v3330
    %v3402 = vunpack.c.l.b16 %v3331
    %v3403 = vunpack.c.h.b16 %v3331
    %v3404 = vunpack.c.l.b16 %v3332
    %v3405 = vunpack.c.h.b16 %v3332
    %v3406 = vunpack.c.l.b16 %v3333
    %v3407 = vunpack.c.h.b16 %v3333
    %v3408 = vunpack.c.l.b16 %v3334
    %v3409 = vunpack.c.h.b16 %v3334
    %v3410 = vunpack.c.l.b16 %v3335
    %v3411 = vunpack.c.h.b16 %v3335
    %v3412 = vunpack.c.l.b16 %v3336
    %v3413 = vunpack.c.h.b16 %v3336
    %v3414 = vunpack.c.l.b16 %v3337
    %v3415 = vunpack.c.h.b16 %v3337
    %v3416 = vunpack.c.l.b16 %v3338
    %v3417 = vunpack.c.h.b16 %v3338
    %v3418 = vunpack.c.l.b16 %v3339
    %v3419 = vunpack.c.h.b16 %v3339
    %v3420 = vunpack.c.l.b16 %v3340
    %v3421 = vunpack.c.h.b16 %v3340
    %v3422 = vunpack.c.l.b16 %v3341
    %v3423 = vunpack.c.h.b16 %v3341
    %v3424 = vunpack.c.l.b16 %v3342
    %v3425 = vunpack.c.h.b16 %v3342
    %v3426 = vunpack.c.l.b16 %v3343
    %v3427 = vunpack.c.h.b16 %v3343
    %v3428 = vunpack.c.l.b16 %v3344
    %v3429 = vunpack.c.h.b16 %v3344
    %v3430 = vunpack.c.l.b16 %v3345
    %v3431 = vunpack.c.h.b16 %v3345
    %v3432 = vunpack.c.l.b16 %v3346
    %v3433 = vunpack.c.h.b16 %v3346
    %v3434 = vunpack.c.l.b16 %v3347
    %v3435 = vunpack.c.h.b16 %v3347
    %v3436 = vunpack.c.l.b16 %v3348
    %v3437 = vunpack.c.h.b16 %v3348
    %v3438 = vunpack.c.l.b16 %v3349
    %v3439 = vunpack.c.h.b16 %v3349
    %v3440 = vunpack.c.l.b16 %v3350
    %v3441 = vunpack.c.h.b16 %v3350
    %v3442 = vunpack.c.l.b16 %v3351
    %v3443 = vunpack.c.h.b16 %v3351
    %v3444 = vunpack.c.l.b16 %v3352
    %v3445 = vunpack.c.h.b16 %v3352
    %v3446 = vunpack.c.l.b16 %v3353
    %v3447 = vunpack.c.h.b16 %v3353
    %v3448 = vunpack.c.l.b16 %v3354
    %v3449 = vunpack.c.h.b16 %v3354
    %v3450 = vunpack.c.l.b16 %v3355
    %v3451 = vunpack.c.h.b16 %v3355
    %v3452 = vpack.c.b16 %v3396, %v3388
    %v3453 = vpack.c.b16 %v3397, %v3389
    %v3454 = vpack.c.b16 %v3398, %v3390
    %v3455 = vpack.c.b16 %v3399, %v3391
    %v3456 = vpack.c.b16 %v3400, %v3392
    %v3457 = vpack.c.b16 %v3401, %v3393
    %v3458 = vpack.c.b16 %v3402, %v3394
    %v3459 = vpack.c.b16 %v3403, %v3395
    %v3460 = vpack.c.b16 %v3412, %v3404
    %v3461 = vpack.c.b16 %v3413, %v3405
    %v3462 = vpack.c.b16 %v3414, %v3406
    %v3463 = vpack.c.b16 %v3415, %v3407
    %v3464 = vpack.c.b16 %v3416, %v3408
    %v3465 = vpack.c.b16 %v3417, %v3409
    %v3466 = vpack.c.b16 %v3418, %v3410
    %v3467 = vpack.c.b16 %v3419, %v3411
    %v3468 = vpack.c.b16 %v3428, %v3420
    %v3469 = vpack.c.b16 %v3429, %v3421
    %v3470 = vpack.c.b16 %v3430, %v3422
    %v3471 = vpack.c.b16 %v3431, %v3423
    %v3472 = vpack.c.b16 %v3432, %v3424
    %v3473 = vpack.c.b16 %v3433, %v3425
    %v3474 = vpack.c.b16 %v3434, %v3426
    %v3475 = vpack.c.b16 %v3435, %v3427
    %v3476 = vpack.c.b16 %v3444, %v3436
    %v3477 = vpack.c.b16 %v3445, %v3437
    %v3478 = vpack.c.b16 %v3446, %v3438
    %v3479 = vpack.c.b16 %v3447, %v3439
    %v3480 = vpack.c.b16 %v3448, %v3440
    %v3481 = vpack.c.b16 %v3449, %v3441
    %v3482 = vpack.c.b16 %v3450, %v3442
    %v3483 = vpack.c.b16 %v3451, %v3443
    %v3517 = vsel %vm337, %v1238, 0
    %3519 = vmatpush.bf16.msra.mxu0 0
    %3520 = vmatpush.bf16.msra.mxu0 0
    %3521 = vmatpush.bf16.msra.mxu0 0
    %3522 = vmatpush.bf16.msra.mxu0 0
    %3523 = vmatpush.bf16.msra.mxu0 %v3476
    %3524 = vmatpush.bf16.msra.mxu0 %v3468
    %3525 = vmatpush.bf16.msra.mxu0 %v3460
    %3526 = vmatpush.bf16.msra.mxu0 %v3452
    %3527 = vmatmul.bf16.gmra.mxu0 %v3517
    %v3528 = vpop.f32.mrf.mxu0
    %v3529 = vadd.f32 0.0, %v3528
    %v3530 = vpop.f32.mrf.mxu0
    %3531 = vdwg.mxu0
    %3532 = vmatpush.bf16.msra.mxu0 0
    %3533 = vmatpush.bf16.msra.mxu0 0
    %3534 = vmatpush.bf16.msra.mxu0 0
    %3535 = vmatpush.bf16.msra.mxu0 0
    %3536 = vmatpush.bf16.msra.mxu0 %v3477
    %3537 = vmatpush.bf16.msra.mxu0 %v3469
    %3538 = vmatpush.bf16.msra.mxu0 %v3461
    %3539 = vmatpush.bf16.msra.mxu0 %v3453
    %3540 = vmatmul.bf16.gmra.mxu0 %v3517
    %v3541 = vpop.f32.mrf.mxu0
    %v3542 = vadd.f32 0.0, %v3541
    %v3543 = vpop.f32.mrf.mxu0
    %3544 = vdwg.mxu0
    %3545 = vmatpush.bf16.msra.mxu0 0
    %3546 = vmatpush.bf16.msra.mxu0 0
    %3547 = vmatpush.bf16.msra.mxu0 0
    %3548 = vmatpush.bf16.msra.mxu0 0
    %3549 = vmatpush.bf16.msra.mxu0 %v3478
    %3550 = vmatpush.bf16.msra.mxu0 %v3470
    %3551 = vmatpush.bf16.msra.mxu0 %v3462
    %3552 = vmatpush.bf16.msra.mxu0 %v3454
    %3553 = vmatmul.bf16.gmra.mxu0 %v3517
    %v3554 = vpop.f32.mrf.mxu0
    %v3555 = vadd.f32 0.0, %v3554
    %v3556 = vpop.f32.mrf.mxu0
    %3557 = vdwg.mxu0
    %3558 = vmatpush.bf16.msra.mxu0 0
    %3559 = vmatpush.bf16.msra.mxu0 0
    %3560 = vmatpush.bf16.msra.mxu0 0
    %3561 = vmatpush.bf16.msra.mxu0 0
    %3562 = vmatpush.bf16.msra.mxu0 %v3479
    %3563 = vmatpush.bf16.msra.mxu0 %v3471
    %3564 = vmatpush.bf16.msra.mxu0 %v3463
    %3565 = vmatpush.bf16.msra.mxu0 %v3455
    %3566 = vmatmul.bf16.gmra.mxu0 %v3517
    %v3567 = vpop.f32.mrf.mxu0
    %v3568 = vadd.f32 0.0, %v3567
    %v3569 = vpop.f32.mrf.mxu0
    %3570 = vdwg.mxu0
    %3571 = vmatpush.bf16.msra.mxu0 0
    %3572 = vmatpush.bf16.msra.mxu0 0
    %3573 = vmatpush.bf16.msra.mxu0 0
    %3574 = vmatpush.bf16.msra.mxu0 0
    %3575 = vmatpush.bf16.msra.mxu0 %v3480
    %3576 = vmatpush.bf16.msra.mxu0 %v3472
    %3577 = vmatpush.bf16.msra.mxu0 %v3464
    %3578 = vmatpush.bf16.msra.mxu0 %v3456
    %3579 = vmatmul.bf16.gmra.mxu0 %v3517
    %v3580 = vpop.f32.mrf.mxu0
    %v3581 = vadd.f32 0.0, %v3580
    %v3582 = vpop.f32.mrf.mxu0
    %3583 = vdwg.mxu0
    %3584 = vmatpush.bf16.msra.mxu0 0
    %3585 = vmatpush.bf16.msra.mxu0 0
    %3586 = vmatpush.bf16.msra.mxu0 0
    %3587 = vmatpush.bf16.msra.mxu0 0
    %3588 = vmatpush.bf16.msra.mxu0 %v3481
    %3589 = vmatpush.bf16.msra.mxu0 %v3473
    %3590 = vmatpush.bf16.msra.mxu0 %v3465
    %3591 = vmatpush.bf16.msra.mxu0 %v3457
    %3592 = vmatmul.bf16.gmra.mxu0 %v3517
    %v3593 = vpop.f32.mrf.mxu0
    %v3594 = vadd.f32 0.0, %v3593
    %v3595 = vpop.f32.mrf.mxu0
    %3596 = vdwg.mxu0
    %3597 = vmatpush.bf16.msra.mxu0 0
    %3598 = vmatpush.bf16.msra.mxu0 0
    %3599 = vmatpush.bf16.msra.mxu0 0
    %3600 = vmatpush.bf16.msra.mxu0 0
    %3601 = vmatpush.bf16.msra.mxu0 %v3482
    %3602 = vmatpush.bf16.msra.mxu0 %v3474
    %3603 = vmatpush.bf16.msra.mxu0 %v3466
    %3604 = vmatpush.bf16.msra.mxu0 %v3458
    %3605 = vmatmul.bf16.gmra.mxu0 %v3517
    %v3606 = vpop.f32.mrf.mxu0
    %v3607 = vadd.f32 0.0, %v3606
    %v3608 = vpop.f32.mrf.mxu0
    %3609 = vdwg.mxu0
    %3610 = vmatpush.bf16.msra.mxu0 0
    %3611 = vmatpush.bf16.msra.mxu0 0
    %3612 = vmatpush.bf16.msra.mxu0 0
    %3613 = vmatpush.bf16.msra.mxu0 0
    %3614 = vmatpush.bf16.msra.mxu0 %v3483
    %3615 = vmatpush.bf16.msra.mxu0 %v3475
    %3616 = vmatpush.bf16.msra.mxu0 %v3467
    %3617 = vmatpush.bf16.msra.mxu0 %v3459
    %3618 = vmatmul.bf16.gmra.mxu0 %v3517
    %v3619 = vpop.f32.mrf.mxu0
    %v3620 = vadd.f32 0.0, %v3619
    %v3621 = vpop.f32.mrf.mxu0
    %3622 = vdwg.mxu0
    %v3623 = vadd.f32 %v2957, %v3529
    %v3624 = vadd.f32 %v3009, %v3542
    %v3625 = vadd.f32 %v3061, %v3555
    %v3626 = vadd.f32 %v3113, %v3568
    %v3627 = vadd.f32 %v3165, %v3581
    %v3628 = vadd.f32 %v3217, %v3594
    %v3629 = vadd.f32 %v3269, %v3607
    %v3630 = vadd.f32 %v3321, %v3620
    %v3631 = vld [vmem:[#allocation3 + $0x100] sm:$0xff]
    %v3632 = vld [vmem:[#allocation3 + $0x108] sm:$0xff]
    %v3633 = vld [vmem:[#allocation3 + $0x110] sm:$0xff]
    %v3634 = vld [vmem:[#allocation3 + $0x118] sm:$0xff]
    %v3635 = vld [vmem:[#allocation3 + $0x120] sm:$0xff]
    %v3636 = vld [vmem:[#allocation3 + $0x128] sm:$0xff]
    %v3637 = vld [vmem:[#allocation3 + $0x130] sm:$0xff]
    %v3638 = vld [vmem:[#allocation3 + $0x138] sm:$0xff]
    %v3639 = vld [vmem:[#allocation3 + $0x140] sm:$0xff]
    %v3640 = vld [vmem:[#allocation3 + $0x148] sm:$0xff]
    %v3641 = vld [vmem:[#allocation3 + $0x150] sm:$0xff]
    %v3642 = vld [vmem:[#allocation3 + $0x158] sm:$0xff]
    %v3643 = vld [vmem:[#allocation3 + $0x160] sm:$0xff]
    %v3644 = vld [vmem:[#allocation3 + $0x168] sm:$0xff]
    %v3645 = vld [vmem:[#allocation3 + $0x170] sm:$0xff]
    %v3646 = vld [vmem:[#allocation3 + $0x178] sm:$0xff]
    %v3647 = vld [vmem:[#allocation3 + $0x180] sm:$0xff]
    %v3648 = vld [vmem:[#allocation3 + $0x188] sm:$0xff]
    %v3649 = vld [vmem:[#allocation3 + $0x190] sm:$0xff]
    %v3650 = vld [vmem:[#allocation3 + $0x198] sm:$0xff]
    %v3651 = vld [vmem:[#allocation3 + $0x1a0] sm:$0xff]
    %v3652 = vld [vmem:[#allocation3 + $0x1a8] sm:$0xff]
    %v3653 = vld [vmem:[#allocation3 + $0x1b0] sm:$0xff]
    %v3654 = vld [vmem:[#allocation3 + $0x1b8] sm:$0xff]
    %v3655 = vld [vmem:[#allocation3 + $0x1c0] sm:$0xff]
    %v3656 = vld [vmem:[#allocation3 + $0x1c8] sm:$0xff]
    %v3657 = vld [vmem:[#allocation3 + $0x1d0] sm:$0xff]
    %v3658 = vld [vmem:[#allocation3 + $0x1d8] sm:$0xff]
    %v3659 = vld [vmem:[#allocation3 + $0x1e0] sm:$0xff]
    %v3660 = vld [vmem:[#allocation3 + $0x1e8] sm:$0xff]
    %v3661 = vld [vmem:[#allocation3 + $0x1f0] sm:$0xff]
    %v3662 = vld [vmem:[#allocation3 + $0x1f8] sm:$0xff]
    %v3664 = vunpack.c.l.b16 %v1238
    %v3665 = vpack.c.b16 %v3664, %v3664
    %v3666 = vrot.slane %v3665, 1
    %v3699 = vunpack.c.l.b16 %v3631
    %v3700 = vunpack.c.h.b16 %v3631
    %v3701 = vunpack.c.l.b16 %v3632
    %v3702 = vunpack.c.h.b16 %v3632
    %v3703 = vunpack.c.l.b16 %v3633
    %v3704 = vunpack.c.h.b16 %v3633
    %v3705 = vunpack.c.l.b16 %v3634
    %v3706 = vunpack.c.h.b16 %v3634
    %v3707 = vunpack.c.l.b16 %v3635
    %v3708 = vunpack.c.h.b16 %v3635
    %v3709 = vunpack.c.l.b16 %v3636
    %v3710 = vunpack.c.h.b16 %v3636
    %v3711 = vunpack.c.l.b16 %v3637
    %v3712 = vunpack.c.h.b16 %v3637
    %v3713 = vunpack.c.l.b16 %v3638
    %v3714 = vunpack.c.h.b16 %v3638
    %v3715 = vunpack.c.l.b16 %v3639
    %v3716 = vunpack.c.h.b16 %v3639
    %v3717 = vunpack.c.l.b16 %v3640
    %v3718 = vunpack.c.h.b16 %v3640
    %v3719 = vunpack.c.l.b16 %v3641
    %v3720 = vunpack.c.h.b16 %v3641
    %v3721 = vunpack.c.l.b16 %v3642
    %v3722 = vunpack.c.h.b16 %v3642
    %v3723 = vunpack.c.l.b16 %v3643
    %v3724 = vunpack.c.h.b16 %v3643
    %v3725 = vunpack.c.l.b16 %v3644
    %v3726 = vunpack.c.h.b16 %v3644
    %v3727 = vunpack.c.l.b16 %v3645
    %v3728 = vunpack.c.h.b16 %v3645
    %v3729 = vunpack.c.l.b16 %v3646
    %v3730 = vunpack.c.h.b16 %v3646
    %v3731 = vunpack.c.l.b16 %v3647
    %v3732 = vunpack.c.h.b16 %v3647
    %v3733 = vunpack.c.l.b16 %v3648
    %v3734 = vunpack.c.h.b16 %v3648
    %v3735 = vunpack.c.l.b16 %v3649
    %v3736 = vunpack.c.h.b16 %v3649
    %v3737 = vunpack.c.l.b16 %v3650
    %v3738 = vunpack.c.h.b16 %v3650
    %v3739 = vunpack.c.l.b16 %v3651
    %v3740 = vunpack.c.h.b16 %v3651
    %v3741 = vunpack.c.l.b16 %v3652
    %v3742 = vunpack.c.h.b16 %v3652
    %v3743 = vunpack.c.l.b16 %v3653
    %v3744 = vunpack.c.h.b16 %v3653
    %v3745 = vunpack.c.l.b16 %v3654
    %v3746 = vunpack.c.h.b16 %v3654
    %v3747 = vunpack.c.l.b16 %v3655
    %v3748 = vunpack.c.h.b16 %v3655
    %v3749 = vunpack.c.l.b16 %v3656
    %v3750 = vunpack.c.h.b16 %v3656
    %v3751 = vunpack.c.l.b16 %v3657
    %v3752 = vunpack.c.h.b16 %v3657
    %v3753 = vunpack.c.l.b16 %v3658
    %v3754 = vunpack.c.h.b16 %v3658
    %v3755 = vunpack.c.l.b16 %v3659
    %v3756 = vunpack.c.h.b16 %v3659
    %v3757 = vunpack.c.l.b16 %v3660
    %v3758 = vunpack.c.h.b16 %v3660
    %v3759 = vunpack.c.l.b16 %v3661
    %v3760 = vunpack.c.h.b16 %v3661
    %v3761 = vunpack.c.l.b16 %v3662
    %v3762 = vunpack.c.h.b16 %v3662
    %v3763 = vpack.c.b16 %v3707, %v3699
    %v3764 = vpack.c.b16 %v3708, %v3700
    %v3765 = vpack.c.b16 %v3709, %v3701
    %v3766 = vpack.c.b16 %v3710, %v3702
    %v3767 = vpack.c.b16 %v3711, %v3703
    %v3768 = vpack.c.b16 %v3712, %v3704
    %v3769 = vpack.c.b16 %v3713, %v3705
    %v3770 = vpack.c.b16 %v3714, %v3706
    %v3771 = vpack.c.b16 %v3723, %v3715
    %v3772 = vpack.c.b16 %v3724, %v3716
    %v3773 = vpack.c.b16 %v3725, %v3717
    %v3774 = vpack.c.b16 %v3726, %v3718
    %v3775 = vpack.c.b16 %v3727, %v3719
    %v3776 = vpack.c.b16 %v3728, %v3720
    %v3777 = vpack.c.b16 %v3729, %v3721
    %v3778 = vpack.c.b16 %v3730, %v3722
    %v3779 = vpack.c.b16 %v3739, %v3731
    %v3780 = vpack.c.b16 %v3740, %v3732
    %v3781 = vpack.c.b16 %v3741, %v3733
    %v3782 = vpack.c.b16 %v3742, %v3734
    %v3783 = vpack.c.b16 %v3743, %v3735
    %v3784 = vpack.c.b16 %v3744, %v3736
    %v3785 = vpack.c.b16 %v3745, %v3737
    %v3786 = vpack.c.b16 %v3746, %v3738
    %v3787 = vpack.c.b16 %v3755, %v3747
    %v3788 = vpack.c.b16 %v3756, %v3748
    %v3789 = vpack.c.b16 %v3757, %v3749
    %v3790 = vpack.c.b16 %v3758, %v3750
    %v3791 = vpack.c.b16 %v3759, %v3751
    %v3792 = vpack.c.b16 %v3760, %v3752
    %v3793 = vpack.c.b16 %v3761, %v3753
    %v3794 = vpack.c.b16 %v3762, %v3754
    %v3828 = vsel %vm337, %v3666, 0
    %3830 = vmatpush.bf16.msra.mxu0 0
    %3831 = vmatpush.bf16.msra.mxu0 0
    %3832 = vmatpush.bf16.msra.mxu0 0
    %3833 = vmatpush.bf16.msra.mxu0 0
    %3834 = vmatpush.bf16.msra.mxu0 %v3787
    %3835 = vmatpush.bf16.msra.mxu0 %v3779
    %3836 = vmatpush.bf16.msra.mxu0 %v3771
    %3837 = vmatpush.bf16.msra.mxu0 %v3763
    %3838 = vmatmul.bf16.gmra.mxu0 %v3828
    %v3839 = vpop.f32.mrf.mxu0
    %v3840 = vadd.f32 0.0, %v3839
    %v3841 = vpop.f32.mrf.mxu0
    %3842 = vdwg.mxu0
    %3843 = vmatpush.bf16.msra.mxu0 0
    %3844 = vmatpush.bf16.msra.mxu0 0
    %3845 = vmatpush.bf16.msra.mxu0 0
    %3846 = vmatpush.bf16.msra.mxu0 0
    %3847 = vmatpush.bf16.msra.mxu0 %v3788
    %3848 = vmatpush.bf16.msra.mxu0 %v3780
    %3849 = vmatpush.bf16.msra.mxu0 %v3772
    %3850 = vmatpush.bf16.msra.mxu0 %v3764
    %3851 = vmatmul.bf16.gmra.mxu0 %v3828
    %v3852 = vpop.f32.mrf.mxu0
    %v3853 = vadd.f32 0.0, %v3852
    %v3854 = vpop.f32.mrf.mxu0
    %3855 = vdwg.mxu0
    %3856 = vmatpush.bf16.msra.mxu0 0
    %3857 = vmatpush.bf16.msra.mxu0 0
    %3858 = vmatpush.bf16.msra.mxu0 0
    %3859 = vmatpush.bf16.msra.mxu0 0
    %3860 = vmatpush.bf16.msra.mxu0 %v3789
    %3861 = vmatpush.bf16.msra.mxu0 %v3781
    %3862 = vmatpush.bf16.msra.mxu0 %v3773
    %3863 = vmatpush.bf16.msra.mxu0 %v3765
    %3864 = vmatmul.bf16.gmra.mxu0 %v3828
    %v3865 = vpop.f32.mrf.mxu0
    %v3866 = vadd.f32 0.0, %v3865
    %v3867 = vpop.f32.mrf.mxu0
    %3868 = vdwg.mxu0
    %3869 = vmatpush.bf16.msra.mxu0 0
    %3870 = vmatpush.bf16.msra.mxu0 0
    %3871 = vmatpush.bf16.msra.mxu0 0
    %3872 = vmatpush.bf16.msra.mxu0 0
    %3873 = vmatpush.bf16.msra.mxu0 %v3790
    %3874 = vmatpush.bf16.msra.mxu0 %v3782
    %3875 = vmatpush.bf16.msra.mxu0 %v3774
    %3876 = vmatpush.bf16.msra.mxu0 %v3766
    %3877 = vmatmul.bf16.gmra.mxu0 %v3828
    %v3878 = vpop.f32.mrf.mxu0
    %v3879 = vadd.f32 0.0, %v3878
    %v3880 = vpop.f32.mrf.mxu0
    %3881 = vdwg.mxu0
    %3882 = vmatpush.bf16.msra.mxu0 0
    %3883 = vmatpush.bf16.msra.mxu0 0
    %3884 = vmatpush.bf16.msra.mxu0 0
    %3885 = vmatpush.bf16.msra.mxu0 0
    %3886 = vmatpush.bf16.msra.mxu0 %v3791
    %3887 = vmatpush.bf16.msra.mxu0 %v3783
    %3888 = vmatpush.bf16.msra.mxu0 %v3775
    %3889 = vmatpush.bf16.msra.mxu0 %v3767
    %3890 = vmatmul.bf16.gmra.mxu0 %v3828
    %v3891 = vpop.f32.mrf.mxu0
    %v3892 = vadd.f32 0.0, %v3891
    %v3893 = vpop.f32.mrf.mxu0
    %3894 = vdwg.mxu0
    %3895 = vmatpush.bf16.msra.mxu0 0
    %3896 = vmatpush.bf16.msra.mxu0 0
    %3897 = vmatpush.bf16.msra.mxu0 0
    %3898 = vmatpush.bf16.msra.mxu0 0
    %3899 = vmatpush.bf16.msra.mxu0 %v3792
    %3900 = vmatpush.bf16.msra.mxu0 %v3784
    %3901 = vmatpush.bf16.msra.mxu0 %v3776
    %3902 = vmatpush.bf16.msra.mxu0 %v3768
    %3903 = vmatmul.bf16.gmra.mxu0 %v3828
    %v3904 = vpop.f32.mrf.mxu0
    %v3905 = vadd.f32 0.0, %v3904
    %v3906 = vpop.f32.mrf.mxu0
    %3907 = vdwg.mxu0
    %3908 = vmatpush.bf16.msra.mxu0 0
    %3909 = vmatpush.bf16.msra.mxu0 0
    %3910 = vmatpush.bf16.msra.mxu0 0
    %3911 = vmatpush.bf16.msra.mxu0 0
    %3912 = vmatpush.bf16.msra.mxu0 %v3793
    %3913 = vmatpush.bf16.msra.mxu0 %v3785
    %3914 = vmatpush.bf16.msra.mxu0 %v3777
    %3915 = vmatpush.bf16.msra.mxu0 %v3769
    %3916 = vmatmul.bf16.gmra.mxu0 %v3828
    %v3917 = vpop.f32.mrf.mxu0
    %v3918 = vadd.f32 0.0, %v3917
    %v3919 = vpop.f32.mrf.mxu0
    %3920 = vdwg.mxu0
    %3921 = vmatpush.bf16.msra.mxu0 0
    %3922 = vmatpush.bf16.msra.mxu0 0
    %3923 = vmatpush.bf16.msra.mxu0 0
    %3924 = vmatpush.bf16.msra.mxu0 0
    %3925 = vmatpush.bf16.msra.mxu0 %v3794
    %3926 = vmatpush.bf16.msra.mxu0 %v3786
    %3927 = vmatpush.bf16.msra.mxu0 %v3778
    %3928 = vmatpush.bf16.msra.mxu0 %v3770
    %3929 = vmatmul.bf16.gmra.mxu0 %v3828
    %v3930 = vpop.f32.mrf.mxu0
    %v3931 = vadd.f32 0.0, %v3930
    %v3932 = vpop.f32.mrf.mxu0
    %3933 = vdwg.mxu0
    %v3934 = vadd.f32 %v3623, %v3840
    %v3935 = vadd.f32 %v3624, %v3853
    %v3936 = vadd.f32 %v3625, %v3866
    %v3937 = vadd.f32 %v3626, %v3879
    %v3938 = vadd.f32 %v3627, %v3892
    %v3939 = vadd.f32 %v3628, %v3905
    %v3940 = vadd.f32 %v3629, %v3918
    %v3941 = vadd.f32 %v3630, %v3931
    %v3942 = vld [vmem:[#allocation3 + $0x200] sm:$0xff]
    %v3943 = vld [vmem:[#allocation3 + $0x208] sm:$0xff]
    %v3944 = vld [vmem:[#allocation3 + $0x210] sm:$0xff]
    %v3945 = vld [vmem:[#allocation3 + $0x218] sm:$0xff]
    %v3946 = vld [vmem:[#allocation3 + $0x220] sm:$0xff]
    %v3947 = vld [vmem:[#allocation3 + $0x228] sm:$0xff]
    %v3948 = vld [vmem:[#allocation3 + $0x230] sm:$0xff]
    %v3949 = vld [vmem:[#allocation3 + $0x238] sm:$0xff]
    %v3950 = vld [vmem:[#allocation3 + $0x240] sm:$0xff]
    %v3951 = vld [vmem:[#allocation3 + $0x248] sm:$0xff]
    %v3952 = vld [vmem:[#allocation3 + $0x250] sm:$0xff]
    %v3953 = vld [vmem:[#allocation3 + $0x258] sm:$0xff]
    %v3954 = vld [vmem:[#allocation3 + $0x260] sm:$0xff]
    %v3955 = vld [vmem:[#allocation3 + $0x268] sm:$0xff]
    %v3956 = vld [vmem:[#allocation3 + $0x270] sm:$0xff]
    %v3957 = vld [vmem:[#allocation3 + $0x278] sm:$0xff]
    %v3958 = vld [vmem:[#allocation3 + $0x280] sm:$0xff]
    %v3959 = vld [vmem:[#allocation3 + $0x288] sm:$0xff]
    %v3960 = vld [vmem:[#allocation3 + $0x290] sm:$0xff]
    %v3961 = vld [vmem:[#allocation3 + $0x298] sm:$0xff]
    %v3962 = vld [vmem:[#allocation3 + $0x2a0] sm:$0xff]
    %v3963 = vld [vmem:[#allocation3 + $0x2a8] sm:$0xff]
    %v3964 = vld [vmem:[#allocation3 + $0x2b0] sm:$0xff]
    %v3965 = vld [vmem:[#allocation3 + $0x2b8] sm:$0xff]
    %v3966 = vld [vmem:[#allocation3 + $0x2c0] sm:$0xff]
    %v3967 = vld [vmem:[#allocation3 + $0x2c8] sm:$0xff]
    %v3968 = vld [vmem:[#allocation3 + $0x2d0] sm:$0xff]
    %v3969 = vld [vmem:[#allocation3 + $0x2d8] sm:$0xff]
    %v3970 = vld [vmem:[#allocation3 + $0x2e0] sm:$0xff]
    %v3971 = vld [vmem:[#allocation3 + $0x2e8] sm:$0xff]
    %v3972 = vld [vmem:[#allocation3 + $0x2f0] sm:$0xff]
    %v3973 = vld [vmem:[#allocation3 + $0x2f8] sm:$0xff]
    %v3974 = vrot.slane %v3665, 2
    %v4007 = vunpack.c.l.b16 %v3942
    %v4008 = vunpack.c.h.b16 %v3942
    %v4009 = vunpack.c.l.b16 %v3943
    %v4010 = vunpack.c.h.b16 %v3943
    %v4011 = vunpack.c.l.b16 %v3944
    %v4012 = vunpack.c.h.b16 %v3944
    %v4013 = vunpack.c.l.b16 %v3945
    %v4014 = vunpack.c.h.b16 %v3945
    %v4015 = vunpack.c.l.b16 %v3946
    %v4016 = vunpack.c.h.b16 %v3946
    %v4017 = vunpack.c.l.b16 %v3947
    %v4018 = vunpack.c.h.b16 %v3947
    %v4019 = vunpack.c.l.b16 %v3948
    %v4020 = vunpack.c.h.b16 %v3948
    %v4021 = vunpack.c.l.b16 %v3949
    %v4022 = vunpack.c.h.b16 %v3949
    %v4023 = vunpack.c.l.b16 %v3950
    %v4024 = vunpack.c.h.b16 %v3950
    %v4025 = vunpack.c.l.b16 %v3951
    %v4026 = vunpack.c.h.b16 %v3951
    %v4027 = vunpack.c.l.b16 %v3952
    %v4028 = vunpack.c.h.b16 %v3952
    %v4029 = vunpack.c.l.b16 %v3953
    %v4030 = vunpack.c.h.b16 %v3953
    %v4031 = vunpack.c.l.b16 %v3954
    %v4032 = vunpack.c.h.b16 %v3954
    %v4033 = vunpack.c.l.b16 %v3955
    %v4034 = vunpack.c.h.b16 %v3955
    %v4035 = vunpack.c.l.b16 %v3956
    %v4036 = vunpack.c.h.b16 %v3956
    %v4037 = vunpack.c.l.b16 %v3957
    %v4038 = vunpack.c.h.b16 %v3957
    %v4039 = vunpack.c.l.b16 %v3958
    %v4040 = vunpack.c.h.b16 %v3958
    %v4041 = vunpack.c.l.b16 %v3959
    %v4042 = vunpack.c.h.b16 %v3959
    %v4043 = vunpack.c.l.b16 %v3960
    %v4044 = vunpack.c.h.b16 %v3960
    %v4045 = vunpack.c.l.b16 %v3961
    %v4046 = vunpack.c.h.b16 %v3961
    %v4047 = vunpack.c.l.b16 %v3962
    %v4048 = vunpack.c.h.b16 %v3962
    %v4049 = vunpack.c.l.b16 %v3963
    %v4050 = vunpack.c.h.b16 %v3963
    %v4051 = vunpack.c.l.b16 %v3964
    %v4052 = vunpack.c.h.b16 %v3964
    %v4053 = vunpack.c.l.b16 %v3965
    %v4054 = vunpack.c.h.b16 %v3965
    %v4055 = vunpack.c.l.b16 %v3966
    %v4056 = vunpack.c.h.b16 %v3966
    %v4057 = vunpack.c.l.b16 %v3967
    %v4058 = vunpack.c.h.b16 %v3967
    %v4059 = vunpack.c.l.b16 %v3968
    %v4060 = vunpack.c.h.b16 %v3968
    %v4061 = vunpack.c.l.b16 %v3969
    %v4062 = vunpack.c.h.b16 %v3969
    %v4063 = vunpack.c.l.b16 %v3970
    %v4064 = vunpack.c.h.b16 %v3970
    %v4065 = vunpack.c.l.b16 %v3971
    %v4066 = vunpack.c.h.b16 %v3971
    %v4067 = vunpack.c.l.b16 %v3972
    %v4068 = vunpack.c.h.b16 %v3972
    %v4069 = vunpack.c.l.b16 %v3973
    %v4070 = vunpack.c.h.b16 %v3973
    %v4071 = vpack.c.b16 %v4015, %v4007
    %v4072 = vpack.c.b16 %v4016, %v4008
    %v4073 = vpack.c.b16 %v4017, %v4009
    %v4074 = vpack.c.b16 %v4018, %v4010
    %v4075 = vpack.c.b16 %v4019, %v4011
    %v4076 = vpack.c.b16 %v4020, %v4012
    %v4077 = vpack.c.b16 %v4021, %v4013
    %v4078 = vpack.c.b16 %v4022, %v4014
    %v4079 = vpack.c.b16 %v4031, %v4023
    %v4080 = vpack.c.b16 %v4032, %v4024
    %v4081 = vpack.c.b16 %v4033, %v4025
    %v4082 = vpack.c.b16 %v4034, %v4026
    %v4083 = vpack.c.b16 %v4035, %v4027
    %v4084 = vpack.c.b16 %v4036, %v4028
    %v4085 = vpack.c.b16 %v4037, %v4029
    %v4086 = vpack.c.b16 %v4038, %v4030
    %v4087 = vpack.c.b16 %v4047, %v4039
    %v4088 = vpack.c.b16 %v4048, %v4040
    %v4089 = vpack.c.b16 %v4049, %v4041
    %v4090 = vpack.c.b16 %v4050, %v4042
    %v4091 = vpack.c.b16 %v4051, %v4043
    %v4092 = vpack.c.b16 %v4052, %v4044
    %v4093 = vpack.c.b16 %v4053, %v4045
    %v4094 = vpack.c.b16 %v4054, %v4046
    %v4095 = vpack.c.b16 %v4063, %v4055
    %v4096 = vpack.c.b16 %v4064, %v4056
    %v4097 = vpack.c.b16 %v4065, %v4057
    %v4098 = vpack.c.b16 %v4066, %v4058
    %v4099 = vpack.c.b16 %v4067, %v4059
    %v4100 = vpack.c.b16 %v4068, %v4060
    %v4101 = vpack.c.b16 %v4069, %v4061
    %v4102 = vpack.c.b16 %v4070, %v4062
    %v4136 = vsel %vm337, %v3974, 0
    %4138 = vmatpush.bf16.msra.mxu0 0
    %4139 = vmatpush.bf16.msra.mxu0 0
    %4140 = vmatpush.bf16.msra.mxu0 0
    %4141 = vmatpush.bf16.msra.mxu0 0
    %4142 = vmatpush.bf16.msra.mxu0 %v4095
    %4143 = vmatpush.bf16.msra.mxu0 %v4087
    %4144 = vmatpush.bf16.msra.mxu0 %v4079
    %4145 = vmatpush.bf16.msra.mxu0 %v4071
    %4146 = vmatmul.bf16.gmra.mxu0 %v4136
    %v4147 = vpop.f32.mrf.mxu0
    %v4148 = vadd.f32 0.0, %v4147
    %v4149 = vpop.f32.mrf.mxu0
    %4150 = vdwg.mxu0
    %4151 = vmatpush.bf16.msra.mxu0 0
    %4152 = vmatpush.bf16.msra.mxu0 0
    %4153 = vmatpush.bf16.msra.mxu0 0
    %4154 = vmatpush.bf16.msra.mxu0 0
    %4155 = vmatpush.bf16.msra.mxu0 %v4096
    %4156 = vmatpush.bf16.msra.mxu0 %v4088
    %4157 = vmatpush.bf16.msra.mxu0 %v4080
    %4158 = vmatpush.bf16.msra.mxu0 %v4072
    %4159 = vmatmul.bf16.gmra.mxu0 %v4136
    %v4160 = vpop.f32.mrf.mxu0
    %v4161 = vadd.f32 0.0, %v4160
    %v4162 = vpop.f32.mrf.mxu0
    %4163 = vdwg.mxu0
    %4164 = vmatpush.bf16.msra.mxu0 0
    %4165 = vmatpush.bf16.msra.mxu0 0
    %4166 = vmatpush.bf16.msra.mxu0 0
    %4167 = vmatpush.bf16.msra.mxu0 0
    %4168 = vmatpush.bf16.msra.mxu0 %v4097
    %4169 = vmatpush.bf16.msra.mxu0 %v4089
    %4170 = vmatpush.bf16.msra.mxu0 %v4081
    %4171 = vmatpush.bf16.msra.mxu0 %v4073
    %4172 = vmatmul.bf16.gmra.mxu0 %v4136
    %v4173 = vpop.f32.mrf.mxu0
    %v4174 = vadd.f32 0.0, %v4173
    %v4175 = vpop.f32.mrf.mxu0
    %4176 = vdwg.mxu0
    %4177 = vmatpush.bf16.msra.mxu0 0
    %4178 = vmatpush.bf16.msra.mxu0 0
    %4179 = vmatpush.bf16.msra.mxu0 0
    %4180 = vmatpush.bf16.msra.mxu0 0
    %4181 = vmatpush.bf16.msra.mxu0 %v4098
    %4182 = vmatpush.bf16.msra.mxu0 %v4090
    %4183 = vmatpush.bf16.msra.mxu0 %v4082
    %4184 = vmatpush.bf16.msra.mxu0 %v4074
    %4185 = vmatmul.bf16.gmra.mxu0 %v4136
    %v4186 = vpop.f32.mrf.mxu0
    %v4187 = vadd.f32 0.0, %v4186
    %v4188 = vpop.f32.mrf.mxu0
    %4189 = vdwg.mxu0
    %4190 = vmatpush.bf16.msra.mxu0 0
    %4191 = vmatpush.bf16.msra.mxu0 0
    %4192 = vmatpush.bf16.msra.mxu0 0
    %4193 = vmatpush.bf16.msra.mxu0 0
    %4194 = vmatpush.bf16.msra.mxu0 %v4099
    %4195 = vmatpush.bf16.msra.mxu0 %v4091
    %4196 = vmatpush.bf16.msra.mxu0 %v4083
    %4197 = vmatpush.bf16.msra.mxu0 %v4075
    %4198 = vmatmul.bf16.gmra.mxu0 %v4136
    %v4199 = vpop.f32.mrf.mxu0
    %v4200 = vadd.f32 0.0, %v4199
    %v4201 = vpop.f32.mrf.mxu0
    %4202 = vdwg.mxu0
    %4203 = vmatpush.bf16.msra.mxu0 0
    %4204 = vmatpush.bf16.msra.mxu0 0
    %4205 = vmatpush.bf16.msra.mxu0 0
    %4206 = vmatpush.bf16.msra.mxu0 0
    %4207 = vmatpush.bf16.msra.mxu0 %v4100
    %4208 = vmatpush.bf16.msra.mxu0 %v4092
    %4209 = vmatpush.bf16.msra.mxu0 %v4084
    %4210 = vmatpush.bf16.msra.mxu0 %v4076
    %4211 = vmatmul.bf16.gmra.mxu0 %v4136
    %v4212 = vpop.f32.mrf.mxu0
    %v4213 = vadd.f32 0.0, %v4212
    %v4214 = vpop.f32.mrf.mxu0
    %4215 = vdwg.mxu0
    %4216 = vmatpush.bf16.msra.mxu0 0
    %4217 = vmatpush.bf16.msra.mxu0 0
    %4218 = vmatpush.bf16.msra.mxu0 0
    %4219 = vmatpush.bf16.msra.mxu0 0
    %4220 = vmatpush.bf16.msra.mxu0 %v4101
    %4221 = vmatpush.bf16.msra.mxu0 %v4093
    %4222 = vmatpush.bf16.msra.mxu0 %v4085
    %4223 = vmatpush.bf16.msra.mxu0 %v4077
    %4224 = vmatmul.bf16.gmra.mxu0 %v4136
    %v4225 = vpop.f32.mrf.mxu0
    %v4226 = vadd.f32 0.0, %v4225
    %v4227 = vpop.f32.mrf.mxu0
    %4228 = vdwg.mxu0
    %4229 = vmatpush.bf16.msra.mxu0 0
    %4230 = vmatpush.bf16.msra.mxu0 0
    %4231 = vmatpush.bf16.msra.mxu0 0
    %4232 = vmatpush.bf16.msra.mxu0 0
    %4233 = vmatpush.bf16.msra.mxu0 %v4102
    %4234 = vmatpush.bf16.msra.mxu0 %v4094
    %4235 = vmatpush.bf16.msra.mxu0 %v4086
    %4236 = vmatpush.bf16.msra.mxu0 %v4078
    %4237 = vmatmul.bf16.gmra.mxu0 %v4136
    %v4238 = vpop.f32.mrf.mxu0
    %v4239 = vadd.f32 0.0, %v4238
    %v4240 = vpop.f32.mrf.mxu0
    %4241 = vdwg.mxu0
    %v4242 = vadd.f32 %v3934, %v4148
    %v4243 = vadd.f32 %v3935, %v4161
    %v4244 = vadd.f32 %v3936, %v4174
    %v4245 = vadd.f32 %v3937, %v4187
    %v4246 = vadd.f32 %v3938, %v4200
    %v4247 = vadd.f32 %v3939, %v4213
    %v4248 = vadd.f32 %v3940, %v4226
    %v4249 = vadd.f32 %v3941, %v4239
    %v4250 = vld [vmem:[#allocation3 + $0x300] sm:$0xff]
    %v4251 = vld [vmem:[#allocation3 + $0x308] sm:$0xff]
    %v4252 = vld [vmem:[#allocation3 + $0x310] sm:$0xff]
    %v4253 = vld [vmem:[#allocation3 + $0x318] sm:$0xff]
    %v4254 = vld [vmem:[#allocation3 + $0x320] sm:$0xff]
    %v4255 = vld [vmem:[#allocation3 + $0x328] sm:$0xff]
    %v4256 = vld [vmem:[#allocation3 + $0x330] sm:$0xff]
    %v4257 = vld [vmem:[#allocation3 + $0x338] sm:$0xff]
    %v4258 = vld [vmem:[#allocation3 + $0x340] sm:$0xff]
    %v4259 = vld [vmem:[#allocation3 + $0x348] sm:$0xff]
    %v4260 = vld [vmem:[#allocation3 + $0x350] sm:$0xff]
    %v4261 = vld [vmem:[#allocation3 + $0x358] sm:$0xff]
    %v4262 = vld [vmem:[#allocation3 + $0x360] sm:$0xff]
    %v4263 = vld [vmem:[#allocation3 + $0x368] sm:$0xff]
    %v4264 = vld [vmem:[#allocation3 + $0x370] sm:$0xff]
    %v4265 = vld [vmem:[#allocation3 + $0x378] sm:$0xff]
    %v4266 = vld [vmem:[#allocation3 + $0x380] sm:$0xff]
    %v4267 = vld [vmem:[#allocation3 + $0x388] sm:$0xff]
    %v4268 = vld [vmem:[#allocation3 + $0x390] sm:$0xff]
    %v4269 = vld [vmem:[#allocation3 + $0x398] sm:$0xff]
    %v4270 = vld [vmem:[#allocation3 + $0x3a0] sm:$0xff]
    %v4271 = vld [vmem:[#allocation3 + $0x3a8] sm:$0xff]
    %v4272 = vld [vmem:[#allocation3 + $0x3b0] sm:$0xff]
    %v4273 = vld [vmem:[#allocation3 + $0x3b8] sm:$0xff]
    %v4274 = vld [vmem:[#allocation3 + $0x3c0] sm:$0xff]
    %v4275 = vld [vmem:[#allocation3 + $0x3c8] sm:$0xff]
    %v4276 = vld [vmem:[#allocation3 + $0x3d0] sm:$0xff]
    %v4277 = vld [vmem:[#allocation3 + $0x3d8] sm:$0xff]
    %v4278 = vld [vmem:[#allocation3 + $0x3e0] sm:$0xff]
    %v4279 = vld [vmem:[#allocation3 + $0x3e8] sm:$0xff]
    %v4280 = vld [vmem:[#allocation3 + $0x3f0] sm:$0xff]
    %v4281 = vld [vmem:[#allocation3 + $0x3f8] sm:$0xff]
    %v4282 = vrot.slane %v3665, 3
    %v4315 = vunpack.c.l.b16 %v4250
    %v4316 = vunpack.c.h.b16 %v4250
    %v4317 = vunpack.c.l.b16 %v4251
    %v4318 = vunpack.c.h.b16 %v4251
    %v4319 = vunpack.c.l.b16 %v4252
    %v4320 = vunpack.c.h.b16 %v4252
    %v4321 = vunpack.c.l.b16 %v4253
    %v4322 = vunpack.c.h.b16 %v4253
    %v4323 = vunpack.c.l.b16 %v4254
    %v4324 = vunpack.c.h.b16 %v4254
    %v4325 = vunpack.c.l.b16 %v4255
    %v4326 = vunpack.c.h.b16 %v4255
    %v4327 = vunpack.c.l.b16 %v4256
    %v4328 = vunpack.c.h.b16 %v4256
    %v4329 = vunpack.c.l.b16 %v4257
    %v4330 = vunpack.c.h.b16 %v4257
    %v4331 = vunpack.c.l.b16 %v4258
    %v4332 = vunpack.c.h.b16 %v4258
    %v4333 = vunpack.c.l.b16 %v4259
    %v4334 = vunpack.c.h.b16 %v4259
    %v4335 = vunpack.c.l.b16 %v4260
    %v4336 = vunpack.c.h.b16 %v4260
    %v4337 = vunpack.c.l.b16 %v4261
    %v4338 = vunpack.c.h.b16 %v4261
    %v4339 = vunpack.c.l.b16 %v4262
    %v4340 = vunpack.c.h.b16 %v4262
    %v4341 = vunpack.c.l.b16 %v4263
    %v4342 = vunpack.c.h.b16 %v4263
    %v4343 = vunpack.c.l.b16 %v4264
    %v4344 = vunpack.c.h.b16 %v4264
    %v4345 = vunpack.c.l.b16 %v4265
    %v4346 = vunpack.c.h.b16 %v4265
    %v4347 = vunpack.c.l.b16 %v4266
    %v4348 = vunpack.c.h.b16 %v4266
    %v4349 = vunpack.c.l.b16 %v4267
    %v4350 = vunpack.c.h.b16 %v4267
    %v4351 = vunpack.c.l.b16 %v4268
    %v4352 = vunpack.c.h.b16 %v4268
    %v4353 = vunpack.c.l.b16 %v4269
    %v4354 = vunpack.c.h.b16 %v4269
    %v4355 = vunpack.c.l.b16 %v4270
    %v4356 = vunpack.c.h.b16 %v4270
    %v4357 = vunpack.c.l.b16 %v4271
    %v4358 = vunpack.c.h.b16 %v4271
    %v4359 = vunpack.c.l.b16 %v4272
    %v4360 = vunpack.c.h.b16 %v4272
    %v4361 = vunpack.c.l.b16 %v4273
    %v4362 = vunpack.c.h.b16 %v4273
    %v4363 = vunpack.c.l.b16 %v4274
    %v4364 = vunpack.c.h.b16 %v4274
    %v4365 = vunpack.c.l.b16 %v4275
    %v4366 = vunpack.c.h.b16 %v4275
    %v4367 = vunpack.c.l.b16 %v4276
    %v4368 = vunpack.c.h.b16 %v4276
    %v4369 = vunpack.c.l.b16 %v4277
    %v4370 = vunpack.c.h.b16 %v4277
    %v4371 = vunpack.c.l.b16 %v4278
    %v4372 = vunpack.c.h.b16 %v4278
    %v4373 = vunpack.c.l.b16 %v4279
    %v4374 = vunpack.c.h.b16 %v4279
    %v4375 = vunpack.c.l.b16 %v4280
    %v4376 = vunpack.c.h.b16 %v4280
    %v4377 = vunpack.c.l.b16 %v4281
    %v4378 = vunpack.c.h.b16 %v4281
    %v4379 = vpack.c.b16 %v4323, %v4315
    %v4380 = vpack.c.b16 %v4324, %v4316
    %v4381 = vpack.c.b16 %v4325, %v4317
    %v4382 = vpack.c.b16 %v4326, %v4318
    %v4383 = vpack.c.b16 %v4327, %v4319
    %v4384 = vpack.c.b16 %v4328, %v4320
    %v4385 = vpack.c.b16 %v4329, %v4321
    %v4386 = vpack.c.b16 %v4330, %v4322
    %v4387 = vpack.c.b16 %v4339, %v4331
    %v4388 = vpack.c.b16 %v4340, %v4332
    %v4389 = vpack.c.b16 %v4341, %v4333
    %v4390 = vpack.c.b16 %v4342, %v4334
    %v4391 = vpack.c.b16 %v4343, %v4335
    %v4392 = vpack.c.b16 %v4344, %v4336
    %v4393 = vpack.c.b16 %v4345, %v4337
    %v4394 = vpack.c.b16 %v4346, %v4338
    %v4395 = vpack.c.b16 %v4355, %v4347
    %v4396 = vpack.c.b16 %v4356, %v4348
    %v4397 = vpack.c.b16 %v4357, %v4349
    %v4398 = vpack.c.b16 %v4358, %v4350
    %v4399 = vpack.c.b16 %v4359, %v4351
    %v4400 = vpack.c.b16 %v4360, %v4352
    %v4401 = vpack.c.b16 %v4361, %v4353
    %v4402 = vpack.c.b16 %v4362, %v4354
    %v4403 = vpack.c.b16 %v4371, %v4363
    %v4404 = vpack.c.b16 %v4372, %v4364
    %v4405 = vpack.c.b16 %v4373, %v4365
    %v4406 = vpack.c.b16 %v4374, %v4366
    %v4407 = vpack.c.b16 %v4375, %v4367
    %v4408 = vpack.c.b16 %v4376, %v4368
    %v4409 = vpack.c.b16 %v4377, %v4369
    %v4410 = vpack.c.b16 %v4378, %v4370
    %v4444 = vsel %vm337, %v4282, 0
    %4446 = vmatpush.bf16.msra.mxu0 0
    %4447 = vmatpush.bf16.msra.mxu0 0
    %4448 = vmatpush.bf16.msra.mxu0 0
    %4449 = vmatpush.bf16.msra.mxu0 0
    %4450 = vmatpush.bf16.msra.mxu0 %v4403
    %4451 = vmatpush.bf16.msra.mxu0 %v4395
    %4452 = vmatpush.bf16.msra.mxu0 %v4387
    %4453 = vmatpush.bf16.msra.mxu0 %v4379
    %4454 = vmatmul.bf16.gmra.mxu0 %v4444
    %v4455 = vpop.f32.mrf.mxu0
    %v4456 = vadd.f32 0.0, %v4455
    %v4457 = vpop.f32.mrf.mxu0
    %4458 = vdwg.mxu0
    %4459 = vmatpush.bf16.msra.mxu0 0
    %4460 = vmatpush.bf16.msra.mxu0 0
    %4461 = vmatpush.bf16.msra.mxu0 0
    %4462 = vmatpush.bf16.msra.mxu0 0
    %4463 = vmatpush.bf16.msra.mxu0 %v4404
    %4464 = vmatpush.bf16.msra.mxu0 %v4396
    %4465 = vmatpush.bf16.msra.mxu0 %v4388
    %4466 = vmatpush.bf16.msra.mxu0 %v4380
    %4467 = vmatmul.bf16.gmra.mxu0 %v4444
    %v4468 = vpop.f32.mrf.mxu0
    %v4469 = vadd.f32 0.0, %v4468
    %v4470 = vpop.f32.mrf.mxu0
    %4471 = vdwg.mxu0
    %4472 = vmatpush.bf16.msra.mxu0 0
    %4473 = vmatpush.bf16.msra.mxu0 0
    %4474 = vmatpush.bf16.msra.mxu0 0
    %4475 = vmatpush.bf16.msra.mxu0 0
    %4476 = vmatpush.bf16.msra.mxu0 %v4405
    %4477 = vmatpush.bf16.msra.mxu0 %v4397
    %4478 = vmatpush.bf16.msra.mxu0 %v4389
    %4479 = vmatpush.bf16.msra.mxu0 %v4381
    %4480 = vmatmul.bf16.gmra.mxu0 %v4444
    %v4481 = vpop.f32.mrf.mxu0
    %v4482 = vadd.f32 0.0, %v4481
    %v4483 = vpop.f32.mrf.mxu0
    %4484 = vdwg.mxu0
    %4485 = vmatpush.bf16.msra.mxu0 0
    %4486 = vmatpush.bf16.msra.mxu0 0
    %4487 = vmatpush.bf16.msra.mxu0 0
    %4488 = vmatpush.bf16.msra.mxu0 0
    %4489 = vmatpush.bf16.msra.mxu0 %v4406
    %4490 = vmatpush.bf16.msra.mxu0 %v4398
    %4491 = vmatpush.bf16.msra.mxu0 %v4390
    %4492 = vmatpush.bf16.msra.mxu0 %v4382
    %4493 = vmatmul.bf16.gmra.mxu0 %v4444
    %v4494 = vpop.f32.mrf.mxu0
    %v4495 = vadd.f32 0.0, %v4494
    %v4496 = vpop.f32.mrf.mxu0
    %4497 = vdwg.mxu0
    %4498 = vmatpush.bf16.msra.mxu0 0
    %4499 = vmatpush.bf16.msra.mxu0 0
    %4500 = vmatpush.bf16.msra.mxu0 0
    %4501 = vmatpush.bf16.msra.mxu0 0
    %4502 = vmatpush.bf16.msra.mxu0 %v4407
    %4503 = vmatpush.bf16.msra.mxu0 %v4399
    %4504 = vmatpush.bf16.msra.mxu0 %v4391
    %4505 = vmatpush.bf16.msra.mxu0 %v4383
    %4506 = vmatmul.bf16.gmra.mxu0 %v4444
    %v4507 = vpop.f32.mrf.mxu0
    %v4508 = vadd.f32 0.0, %v4507
    %v4509 = vpop.f32.mrf.mxu0
    %4510 = vdwg.mxu0
    %4511 = vmatpush.bf16.msra.mxu0 0
    %4512 = vmatpush.bf16.msra.mxu0 0
    %4513 = vmatpush.bf16.msra.mxu0 0
    %4514 = vmatpush.bf16.msra.mxu0 0
    %4515 = vmatpush.bf16.msra.mxu0 %v4408
    %4516 = vmatpush.bf16.msra.mxu0 %v4400
    %4517 = vmatpush.bf16.msra.mxu0 %v4392
    %4518 = vmatpush.bf16.msra.mxu0 %v4384
    %4519 = vmatmul.bf16.gmra.mxu0 %v4444
    %v4520 = vpop.f32.mrf.mxu0
    %v4521 = vadd.f32 0.0, %v4520
    %v4522 = vpop.f32.mrf.mxu0
    %4523 = vdwg.mxu0
    %4524 = vmatpush.bf16.msra.mxu0 0
    %4525 = vmatpush.bf16.msra.mxu0 0
    %4526 = vmatpush.bf16.msra.mxu0 0
    %4527 = vmatpush.bf16.msra.mxu0 0
    %4528 = vmatpush.bf16.msra.mxu0 %v4409
    %4529 = vmatpush.bf16.msra.mxu0 %v4401
    %4530 = vmatpush.bf16.msra.mxu0 %v4393
    %4531 = vmatpush.bf16.msra.mxu0 %v4385
    %4532 = vmatmul.bf16.gmra.mxu0 %v4444
    %v4533 = vpop.f32.mrf.mxu0
    %v4534 = vadd.f32 0.0, %v4533
    %v4535 = vpop.f32.mrf.mxu0
    %4536 = vdwg.mxu0
    %4537 = vmatpush.bf16.msra.mxu0 0
    %4538 = vmatpush.bf16.msra.mxu0 0
    %4539 = vmatpush.bf16.msra.mxu0 0
    %4540 = vmatpush.bf16.msra.mxu0 0
    %4541 = vmatpush.bf16.msra.mxu0 %v4410
    %4542 = vmatpush.bf16.msra.mxu0 %v4402
    %4543 = vmatpush.bf16.msra.mxu0 %v4394
    %4544 = vmatpush.bf16.msra.mxu0 %v4386
    %4545 = vmatmul.bf16.gmra.mxu0 %v4444
    %v4546 = vpop.f32.mrf.mxu0
    %v4547 = vadd.f32 0.0, %v4546
    %v4548 = vpop.f32.mrf.mxu0
    %4549 = vdwg.mxu0
    %v4550 = vadd.f32 %v4242, %v4456
    %v4551 = vadd.f32 %v4243, %v4469
    %v4552 = vadd.f32 %v4244, %v4482
    %v4553 = vadd.f32 %v4245, %v4495
    %v4554 = vadd.f32 %v4246, %v4508
    %v4555 = vadd.f32 %v4247, %v4521
    %v4556 = vadd.f32 %v4248, %v4534
    %v4557 = vadd.f32 %v4249, %v4547
    %v4558 = vld [vmem:[#allocation3 + $0x400] sm:$0xff]
    %v4559 = vld [vmem:[#allocation3 + $0x408] sm:$0xff]
    %v4560 = vld [vmem:[#allocation3 + $0x410] sm:$0xff]
    %v4561 = vld [vmem:[#allocation3 + $0x418] sm:$0xff]
    %v4562 = vld [vmem:[#allocation3 + $0x420] sm:$0xff]
    %v4563 = vld [vmem:[#allocation3 + $0x428] sm:$0xff]
    %v4564 = vld [vmem:[#allocation3 + $0x430] sm:$0xff]
    %v4565 = vld [vmem:[#allocation3 + $0x438] sm:$0xff]
    %v4566 = vld [vmem:[#allocation3 + $0x440] sm:$0xff]
    %v4567 = vld [vmem:[#allocation3 + $0x448] sm:$0xff]
    %v4568 = vld [vmem:[#allocation3 + $0x450] sm:$0xff]
    %v4569 = vld [vmem:[#allocation3 + $0x458] sm:$0xff]
    %v4570 = vld [vmem:[#allocation3 + $0x460] sm:$0xff]
    %v4571 = vld [vmem:[#allocation3 + $0x468] sm:$0xff]
    %v4572 = vld [vmem:[#allocation3 + $0x470] sm:$0xff]
    %v4573 = vld [vmem:[#allocation3 + $0x478] sm:$0xff]
    %v4574 = vld [vmem:[#allocation3 + $0x480] sm:$0xff]
    %v4575 = vld [vmem:[#allocation3 + $0x488] sm:$0xff]
    %v4576 = vld [vmem:[#allocation3 + $0x490] sm:$0xff]
    %v4577 = vld [vmem:[#allocation3 + $0x498] sm:$0xff]
    %v4578 = vld [vmem:[#allocation3 + $0x4a0] sm:$0xff]
    %v4579 = vld [vmem:[#allocation3 + $0x4a8] sm:$0xff]
    %v4580 = vld [vmem:[#allocation3 + $0x4b0] sm:$0xff]
    %v4581 = vld [vmem:[#allocation3 + $0x4b8] sm:$0xff]
    %v4582 = vld [vmem:[#allocation3 + $0x4c0] sm:$0xff]
    %v4583 = vld [vmem:[#allocation3 + $0x4c8] sm:$0xff]
    %v4584 = vld [vmem:[#allocation3 + $0x4d0] sm:$0xff]
    %v4585 = vld [vmem:[#allocation3 + $0x4d8] sm:$0xff]
    %v4586 = vld [vmem:[#allocation3 + $0x4e0] sm:$0xff]
    %v4587 = vld [vmem:[#allocation3 + $0x4e8] sm:$0xff]
    %v4588 = vld [vmem:[#allocation3 + $0x4f0] sm:$0xff]
    %v4589 = vld [vmem:[#allocation3 + $0x4f8] sm:$0xff]
    %v4622 = vunpack.c.l.b16 %v4558
    %v4623 = vunpack.c.h.b16 %v4558
    %v4624 = vunpack.c.l.b16 %v4559
    %v4625 = vunpack.c.h.b16 %v4559
    %v4626 = vunpack.c.l.b16 %v4560
    %v4627 = vunpack.c.h.b16 %v4560
    %v4628 = vunpack.c.l.b16 %v4561
    %v4629 = vunpack.c.h.b16 %v4561
    %v4630 = vunpack.c.l.b16 %v4562
    %v4631 = vunpack.c.h.b16 %v4562
    %v4632 = vunpack.c.l.b16 %v4563
    %v4633 = vunpack.c.h.b16 %v4563
    %v4634 = vunpack.c.l.b16 %v4564
    %v4635 = vunpack.c.h.b16 %v4564
    %v4636 = vunpack.c.l.b16 %v4565
    %v4637 = vunpack.c.h.b16 %v4565
    %v4638 = vunpack.c.l.b16 %v4566
    %v4639 = vunpack.c.h.b16 %v4566
    %v4640 = vunpack.c.l.b16 %v4567
    %v4641 = vunpack.c.h.b16 %v4567
    %v4642 = vunpack.c.l.b16 %v4568
    %v4643 = vunpack.c.h.b16 %v4568
    %v4644 = vunpack.c.l.b16 %v4569
    %v4645 = vunpack.c.h.b16 %v4569
    %v4646 = vunpack.c.l.b16 %v4570
    %v4647 = vunpack.c.h.b16 %v4570
    %v4648 = vunpack.c.l.b16 %v4571
    %v4649 = vunpack.c.h.b16 %v4571
    %v4650 = vunpack.c.l.b16 %v4572
    %v4651 = vunpack.c.h.b16 %v4572
    %v4652 = vunpack.c.l.b16 %v4573
    %v4653 = vunpack.c.h.b16 %v4573
    %v4654 = vunpack.c.l.b16 %v4574
    %v4655 = vunpack.c.h.b16 %v4574
    %v4656 = vunpack.c.l.b16 %v4575
    %v4657 = vunpack.c.h.b16 %v4575
    %v4658 = vunpack.c.l.b16 %v4576
    %v4659 = vunpack.c.h.b16 %v4576
    %v4660 = vunpack.c.l.b16 %v4577
    %v4661 = vunpack.c.h.b16 %v4577
    %v4662 = vunpack.c.l.b16 %v4578
    %v4663 = vunpack.c.h.b16 %v4578
    %v4664 = vunpack.c.l.b16 %v4579
    %v4665 = vunpack.c.h.b16 %v4579
    %v4666 = vunpack.c.l.b16 %v4580
    %v4667 = vunpack.c.h.b16 %v4580
    %v4668 = vunpack.c.l.b16 %v4581
    %v4669 = vunpack.c.h.b16 %v4581
    %v4670 = vunpack.c.l.b16 %v4582
    %v4671 = vunpack.c.h.b16 %v4582
    %v4672 = vunpack.c.l.b16 %v4583
    %v4673 = vunpack.c.h.b16 %v4583
    %v4674 = vunpack.c.l.b16 %v4584
    %v4675 = vunpack.c.h.b16 %v4584
    %v4676 = vunpack.c.l.b16 %v4585
    %v4677 = vunpack.c.h.b16 %v4585
    %v4678 = vunpack.c.l.b16 %v4586
    %v4679 = vunpack.c.h.b16 %v4586
    %v4680 = vunpack.c.l.b16 %v4587
    %v4681 = vunpack.c.h.b16 %v4587
    %v4682 = vunpack.c.l.b16 %v4588
    %v4683 = vunpack.c.h.b16 %v4588
    %v4684 = vunpack.c.l.b16 %v4589
    %v4685 = vunpack.c.h.b16 %v4589
    %v4686 = vpack.c.b16 %v4630, %v4622
    %v4687 = vpack.c.b16 %v4631, %v4623
    %v4688 = vpack.c.b16 %v4632, %v4624
    %v4689 = vpack.c.b16 %v4633, %v4625
    %v4690 = vpack.c.b16 %v4634, %v4626
    %v4691 = vpack.c.b16 %v4635, %v4627
    %v4692 = vpack.c.b16 %v4636, %v4628
    %v4693 = vpack.c.b16 %v4637, %v4629
    %v4694 = vpack.c.b16 %v4646, %v4638
    %v4695 = vpack.c.b16 %v4647, %v4639
    %v4696 = vpack.c.b16 %v4648, %v4640
    %v4697 = vpack.c.b16 %v4649, %v4641
    %v4698 = vpack.c.b16 %v4650, %v4642
    %v4699 = vpack.c.b16 %v4651, %v4643
    %v4700 = vpack.c.b16 %v4652, %v4644
    %v4701 = vpack.c.b16 %v4653, %v4645
    %v4702 = vpack.c.b16 %v4662, %v4654
    %v4703 = vpack.c.b16 %v4663, %v4655
    %v4704 = vpack.c.b16 %v4664, %v4656
    %v4705 = vpack.c.b16 %v4665, %v4657
    %v4706 = vpack.c.b16 %v4666, %v4658
    %v4707 = vpack.c.b16 %v4667, %v4659
    %v4708 = vpack.c.b16 %v4668, %v4660
    %v4709 = vpack.c.b16 %v4669, %v4661
    %v4710 = vpack.c.b16 %v4678, %v4670
    %v4711 = vpack.c.b16 %v4679, %v4671
    %v4712 = vpack.c.b16 %v4680, %v4672
    %v4713 = vpack.c.b16 %v4681, %v4673
    %v4714 = vpack.c.b16 %v4682, %v4674
    %v4715 = vpack.c.b16 %v4683, %v4675
    %v4716 = vpack.c.b16 %v4684, %v4676
    %v4717 = vpack.c.b16 %v4685, %v4677
    %v4751 = vsel %vm337, %v1239, 0
    %4753 = vmatpush.bf16.msra.mxu0 0
    %4754 = vmatpush.bf16.msra.mxu0 0
    %4755 = vmatpush.bf16.msra.mxu0 0
    %4756 = vmatpush.bf16.msra.mxu0 0
    %4757 = vmatpush.bf16.msra.mxu0 %v4710
    %4758 = vmatpush.bf16.msra.mxu0 %v4702
    %4759 = vmatpush.bf16.msra.mxu0 %v4694
    %4760 = vmatpush.bf16.msra.mxu0 %v4686
    %4761 = vmatmul.bf16.gmra.mxu0 %v4751
    %v4762 = vpop.f32.mrf.mxu0
    %v4763 = vadd.f32 0.0, %v4762
    %v4764 = vpop.f32.mrf.mxu0
    %4765 = vdwg.mxu0
    %4766 = vmatpush.bf16.msra.mxu0 0
    %4767 = vmatpush.bf16.msra.mxu0 0
    %4768 = vmatpush.bf16.msra.mxu0 0
    %4769 = vmatpush.bf16.msra.mxu0 0
    %4770 = vmatpush.bf16.msra.mxu0 %v4711
    %4771 = vmatpush.bf16.msra.mxu0 %v4703
    %4772 = vmatpush.bf16.msra.mxu0 %v4695
    %4773 = vmatpush.bf16.msra.mxu0 %v4687
    %4774 = vmatmul.bf16.gmra.mxu0 %v4751
    %v4775 = vpop.f32.mrf.mxu0
    %v4776 = vadd.f32 0.0, %v4775
    %v4777 = vpop.f32.mrf.mxu0
    %4778 = vdwg.mxu0
    %4779 = vmatpush.bf16.msra.mxu0 0
    %4780 = vmatpush.bf16.msra.mxu0 0
    %4781 = vmatpush.bf16.msra.mxu0 0
    %4782 = vmatpush.bf16.msra.mxu0 0
    %4783 = vmatpush.bf16.msra.mxu0 %v4712
    %4784 = vmatpush.bf16.msra.mxu0 %v4704
    %4785 = vmatpush.bf16.msra.mxu0 %v4696
    %4786 = vmatpush.bf16.msra.mxu0 %v4688
    %4787 = vmatmul.bf16.gmra.mxu0 %v4751
    %v4788 = vpop.f32.mrf.mxu0
    %v4789 = vadd.f32 0.0, %v4788
    %v4790 = vpop.f32.mrf.mxu0
    %4791 = vdwg.mxu0
    %4792 = vmatpush.bf16.msra.mxu0 0
    %4793 = vmatpush.bf16.msra.mxu0 0
    %4794 = vmatpush.bf16.msra.mxu0 0
    %4795 = vmatpush.bf16.msra.mxu0 0
    %4796 = vmatpush.bf16.msra.mxu0 %v4713
    %4797 = vmatpush.bf16.msra.mxu0 %v4705
    %4798 = vmatpush.bf16.msra.mxu0 %v4697
    %4799 = vmatpush.bf16.msra.mxu0 %v4689
    %4800 = vmatmul.bf16.gmra.mxu0 %v4751
    %v4801 = vpop.f32.mrf.mxu0
    %v4802 = vadd.f32 0.0, %v4801
    %v4803 = vpop.f32.mrf.mxu0
    %4804 = vdwg.mxu0
    %4805 = vmatpush.bf16.msra.mxu0 0
    %4806 = vmatpush.bf16.msra.mxu0 0
    %4807 = vmatpush.bf16.msra.mxu0 0
    %4808 = vmatpush.bf16.msra.mxu0 0
    %4809 = vmatpush.bf16.msra.mxu0 %v4714
    %4810 = vmatpush.bf16.msra.mxu0 %v4706
    %4811 = vmatpush.bf16.msra.mxu0 %v4698
    %4812 = vmatpush.bf16.msra.mxu0 %v4690
    %4813 = vmatmul.bf16.gmra.mxu0 %v4751
    %v4814 = vpop.f32.mrf.mxu0
    %v4815 = vadd.f32 0.0, %v4814
    %v4816 = vpop.f32.mrf.mxu0
    %4817 = vdwg.mxu0
    %4818 = vmatpush.bf16.msra.mxu0 0
    %4819 = vmatpush.bf16.msra.mxu0 0
    %4820 = vmatpush.bf16.msra.mxu0 0
    %4821 = vmatpush.bf16.msra.mxu0 0
    %4822 = vmatpush.bf16.msra.mxu0 %v4715
    %4823 = vmatpush.bf16.msra.mxu0 %v4707
    %4824 = vmatpush.bf16.msra.mxu0 %v4699
    %4825 = vmatpush.bf16.msra.mxu0 %v4691
    %4826 = vmatmul.bf16.gmra.mxu0 %v4751
    %v4827 = vpop.f32.mrf.mxu0
    %v4828 = vadd.f32 0.0, %v4827
    %v4829 = vpop.f32.mrf.mxu0
    %4830 = vdwg.mxu0
    %4831 = vmatpush.bf16.msra.mxu0 0
    %4832 = vmatpush.bf16.msra.mxu0 0
    %4833 = vmatpush.bf16.msra.mxu0 0
    %4834 = vmatpush.bf16.msra.mxu0 0
    %4835 = vmatpush.bf16.msra.mxu0 %v4716
    %4836 = vmatpush.bf16.msra.mxu0 %v4708
    %4837 = vmatpush.bf16.msra.mxu0 %v4700
    %4838 = vmatpush.bf16.msra.mxu0 %v4692
    %4839 = vmatmul.bf16.gmra.mxu0 %v4751
    %v4840 = vpop.f32.mrf.mxu0
    %v4841 = vadd.f32 0.0, %v4840
    %v4842 = vpop.f32.mrf.mxu0
    %4843 = vdwg.mxu0
    %4844 = vmatpush.bf16.msra.mxu0 0
    %4845 = vmatpush.bf16.msra.mxu0 0
    %4846 = vmatpush.bf16.msra.mxu0 0
    %4847 = vmatpush.bf16.msra.mxu0 0
    %4848 = vmatpush.bf16.msra.mxu0 %v4717
    %4849 = vmatpush.bf16.msra.mxu0 %v4709
    %4850 = vmatpush.bf16.msra.mxu0 %v4701
    %4851 = vmatpush.bf16.msra.mxu0 %v4693
    %4852 = vmatmul.bf16.gmra.mxu0 %v4751
    %v4853 = vpop.f32.mrf.mxu0
    %v4854 = vadd.f32 0.0, %v4853
    %v4855 = vpop.f32.mrf.mxu0
    %4856 = vdwg.mxu0
    %v4857 = vadd.f32 %v4550, %v4763
    %v4858 = vadd.f32 %v4551, %v4776
    %v4859 = vadd.f32 %v4552, %v4789
    %v4860 = vadd.f32 %v4553, %v4802
    %v4861 = vadd.f32 %v4554, %v4815
    %v4862 = vadd.f32 %v4555, %v4828
    %v4863 = vadd.f32 %v4556, %v4841
    %v4864 = vadd.f32 %v4557, %v4854
    %v4865 = vld [vmem:[#allocation3 + $0x500] sm:$0xff]
    %v4866 = vld [vmem:[#allocation3 + $0x508] sm:$0xff]
    %v4867 = vld [vmem:[#allocation3 + $0x510] sm:$0xff]
    %v4868 = vld [vmem:[#allocation3 + $0x518] sm:$0xff]
    %v4869 = vld [vmem:[#allocation3 + $0x520] sm:$0xff]
    %v4870 = vld [vmem:[#allocation3 + $0x528] sm:$0xff]
    %v4871 = vld [vmem:[#allocation3 + $0x530] sm:$0xff]
    %v4872 = vld [vmem:[#allocation3 + $0x538] sm:$0xff]
    %v4873 = vld [vmem:[#allocation3 + $0x540] sm:$0xff]
    %v4874 = vld [vmem:[#allocation3 + $0x548] sm:$0xff]
    %v4875 = vld [vmem:[#allocation3 + $0x550] sm:$0xff]
    %v4876 = vld [vmem:[#allocation3 + $0x558] sm:$0xff]
    %v4877 = vld [vmem:[#allocation3 + $0x560] sm:$0xff]
    %v4878 = vld [vmem:[#allocation3 + $0x568] sm:$0xff]
    %v4879 = vld [vmem:[#allocation3 + $0x570] sm:$0xff]
    %v4880 = vld [vmem:[#allocation3 + $0x578] sm:$0xff]
    %v4881 = vld [vmem:[#allocation3 + $0x580] sm:$0xff]
    %v4882 = vld [vmem:[#allocation3 + $0x588] sm:$0xff]
    %v4883 = vld [vmem:[#allocation3 + $0x590] sm:$0xff]
    %v4884 = vld [vmem:[#allocation3 + $0x598] sm:$0xff]
    %v4885 = vld [vmem:[#allocation3 + $0x5a0] sm:$0xff]
    %v4886 = vld [vmem:[#allocation3 + $0x5a8] sm:$0xff]
    %v4887 = vld [vmem:[#allocation3 + $0x5b0] sm:$0xff]
    %v4888 = vld [vmem:[#allocation3 + $0x5b8] sm:$0xff]
    %v4889 = vld [vmem:[#allocation3 + $0x5c0] sm:$0xff]
    %v4890 = vld [vmem:[#allocation3 + $0x5c8] sm:$0xff]
    %v4891 = vld [vmem:[#allocation3 + $0x5d0] sm:$0xff]
    %v4892 = vld [vmem:[#allocation3 + $0x5d8] sm:$0xff]
    %v4893 = vld [vmem:[#allocation3 + $0x5e0] sm:$0xff]
    %v4894 = vld [vmem:[#allocation3 + $0x5e8] sm:$0xff]
    %v4895 = vld [vmem:[#allocation3 + $0x5f0] sm:$0xff]
    %v4896 = vld [vmem:[#allocation3 + $0x5f8] sm:$0xff]
    %v4898 = vunpack.c.l.b16 %v1239
    %v4899 = vpack.c.b16 %v4898, %v4898
    %v4900 = vrot.slane %v4899, 1
    %v4933 = vunpack.c.l.b16 %v4865
    %v4934 = vunpack.c.h.b16 %v4865
    %v4935 = vunpack.c.l.b16 %v4866
    %v4936 = vunpack.c.h.b16 %v4866
    %v4937 = vunpack.c.l.b16 %v4867
    %v4938 = vunpack.c.h.b16 %v4867
    %v4939 = vunpack.c.l.b16 %v4868
    %v4940 = vunpack.c.h.b16 %v4868
    %v4941 = vunpack.c.l.b16 %v4869
    %v4942 = vunpack.c.h.b16 %v4869
    %v4943 = vunpack.c.l.b16 %v4870
    %v4944 = vunpack.c.h.b16 %v4870
    %v4945 = vunpack.c.l.b16 %v4871
    %v4946 = vunpack.c.h.b16 %v4871
    %v4947 = vunpack.c.l.b16 %v4872
    %v4948 = vunpack.c.h.b16 %v4872
    %v4949 = vunpack.c.l.b16 %v4873
    %v4950 = vunpack.c.h.b16 %v4873
    %v4951 = vunpack.c.l.b16 %v4874
    %v4952 = vunpack.c.h.b16 %v4874
    %v4953 = vunpack.c.l.b16 %v4875
    %v4954 = vunpack.c.h.b16 %v4875
    %v4955 = vunpack.c.l.b16 %v4876
    %v4956 = vunpack.c.h.b16 %v4876
    %v4957 = vunpack.c.l.b16 %v4877
    %v4958 = vunpack.c.h.b16 %v4877
    %v4959 = vunpack.c.l.b16 %v4878
    %v4960 = vunpack.c.h.b16 %v4878
    %v4961 = vunpack.c.l.b16 %v4879
    %v4962 = vunpack.c.h.b16 %v4879
    %v4963 = vunpack.c.l.b16 %v4880
    %v4964 = vunpack.c.h.b16 %v4880
    %v4965 = vunpack.c.l.b16 %v4881
    %v4966 = vunpack.c.h.b16 %v4881
    %v4967 = vunpack.c.l.b16 %v4882
    %v4968 = vunpack.c.h.b16 %v4882
    %v4969 = vunpack.c.l.b16 %v4883
    %v4970 = vunpack.c.h.b16 %v4883
    %v4971 = vunpack.c.l.b16 %v4884
    %v4972 = vunpack.c.h.b16 %v4884
    %v4973 = vunpack.c.l.b16 %v4885
    %v4974 = vunpack.c.h.b16 %v4885
    %v4975 = vunpack.c.l.b16 %v4886
    %v4976 = vunpack.c.h.b16 %v4886
    %v4977 = vunpack.c.l.b16 %v4887
    %v4978 = vunpack.c.h.b16 %v4887
    %v4979 = vunpack.c.l.b16 %v4888
    %v4980 = vunpack.c.h.b16 %v4888
    %v4981 = vunpack.c.l.b16 %v4889
    %v4982 = vunpack.c.h.b16 %v4889
    %v4983 = vunpack.c.l.b16 %v4890
    %v4984 = vunpack.c.h.b16 %v4890
    %v4985 = vunpack.c.l.b16 %v4891
    %v4986 = vunpack.c.h.b16 %v4891
    %v4987 = vunpack.c.l.b16 %v4892
    %v4988 = vunpack.c.h.b16 %v4892
    %v4989 = vunpack.c.l.b16 %v4893
    %v4990 = vunpack.c.h.b16 %v4893
    %v4991 = vunpack.c.l.b16 %v4894
    %v4992 = vunpack.c.h.b16 %v4894
    %v4993 = vunpack.c.l.b16 %v4895
    %v4994 = vunpack.c.h.b16 %v4895
    %v4995 = vunpack.c.l.b16 %v4896
    %v4996 = vunpack.c.h.b16 %v4896
    %v4997 = vpack.c.b16 %v4941, %v4933
    %v4998 = vpack.c.b16 %v4942, %v4934
    %v4999 = vpack.c.b16 %v4943, %v4935
    %v5000 = vpack.c.b16 %v4944, %v4936
    %v5001 = vpack.c.b16 %v4945, %v4937
    %v5002 = vpack.c.b16 %v4946, %v4938
    %v5003 = vpack.c.b16 %v4947, %v4939
    %v5004 = vpack.c.b16 %v4948, %v4940
    %v5005 = vpack.c.b16 %v4957, %v4949
    %v5006 = vpack.c.b16 %v4958, %v4950
    %v5007 = vpack.c.b16 %v4959, %v4951
    %v5008 = vpack.c.b16 %v4960, %v4952
    %v5009 = vpack.c.b16 %v4961, %v4953
    %v5010 = vpack.c.b16 %v4962, %v4954
    %v5011 = vpack.c.b16 %v4963, %v4955
    %v5012 = vpack.c.b16 %v4964, %v4956
    %v5013 = vpack.c.b16 %v4973, %v4965
    %v5014 = vpack.c.b16 %v4974, %v4966
    %v5015 = vpack.c.b16 %v4975, %v4967
    %v5016 = vpack.c.b16 %v4976, %v4968
    %v5017 = vpack.c.b16 %v4977, %v4969
    %v5018 = vpack.c.b16 %v4978, %v4970
    %v5019 = vpack.c.b16 %v4979, %v4971
    %v5020 = vpack.c.b16 %v4980, %v4972
    %v5021 = vpack.c.b16 %v4989, %v4981
    %v5022 = vpack.c.b16 %v4990, %v4982
    %v5023 = vpack.c.b16 %v4991, %v4983
    %v5024 = vpack.c.b16 %v4992, %v4984
    %v5025 = vpack.c.b16 %v4993, %v4985
    %v5026 = vpack.c.b16 %v4994, %v4986
    %v5027 = vpack.c.b16 %v4995, %v4987
    %v5028 = vpack.c.b16 %v4996, %v4988
    %v5062 = vsel %vm337, %v4900, 0
    %5064 = vmatpush.bf16.msra.mxu0 0
    %5065 = vmatpush.bf16.msra.mxu0 0
    %5066 = vmatpush.bf16.msra.mxu0 0
    %5067 = vmatpush.bf16.msra.mxu0 0
    %5068 = vmatpush.bf16.msra.mxu0 %v5021
    %5069 = vmatpush.bf16.msra.mxu0 %v5013
    %5070 = vmatpush.bf16.msra.mxu0 %v5005
    %5071 = vmatpush.bf16.msra.mxu0 %v4997
    %5072 = vmatmul.bf16.gmra.mxu0 %v5062
    %v5073 = vpop.f32.mrf.mxu0
    %v5074 = vadd.f32 0.0, %v5073
    %v5075 = vpop.f32.mrf.mxu0
    %5076 = vdwg.mxu0
    %5077 = vmatpush.bf16.msra.mxu0 0
    %5078 = vmatpush.bf16.msra.mxu0 0
    %5079 = vmatpush.bf16.msra.mxu0 0
    %5080 = vmatpush.bf16.msra.mxu0 0
    %5081 = vmatpush.bf16.msra.mxu0 %v5022
    %5082 = vmatpush.bf16.msra.mxu0 %v5014
    %5083 = vmatpush.bf16.msra.mxu0 %v5006
    %5084 = vmatpush.bf16.msra.mxu0 %v4998
    %5085 = vmatmul.bf16.gmra.mxu0 %v5062
    %v5086 = vpop.f32.mrf.mxu0
    %v5087 = vadd.f32 0.0, %v5086
    %v5088 = vpop.f32.mrf.mxu0
    %5089 = vdwg.mxu0
    %5090 = vmatpush.bf16.msra.mxu0 0
    %5091 = vmatpush.bf16.msra.mxu0 0
    %5092 = vmatpush.bf16.msra.mxu0 0
    %5093 = vmatpush.bf16.msra.mxu0 0
    %5094 = vmatpush.bf16.msra.mxu0 %v5023
    %5095 = vmatpush.bf16.msra.mxu0 %v5015
    %5096 = vmatpush.bf16.msra.mxu0 %v5007
    %5097 = vmatpush.bf16.msra.mxu0 %v4999
    %5098 = vmatmul.bf16.gmra.mxu0 %v5062
    %v5099 = vpop.f32.mrf.mxu0
    %v5100 = vadd.f32 0.0, %v5099
    %v5101 = vpop.f32.mrf.mxu0
    %5102 = vdwg.mxu0
    %5103 = vmatpush.bf16.msra.mxu0 0
    %5104 = vmatpush.bf16.msra.mxu0 0
    %5105 = vmatpush.bf16.msra.mxu0 0
    %5106 = vmatpush.bf16.msra.mxu0 0
    %5107 = vmatpush.bf16.msra.mxu0 %v5024
    %5108 = vmatpush.bf16.msra.mxu0 %v5016
    %5109 = vmatpush.bf16.msra.mxu0 %v5008
    %5110 = vmatpush.bf16.msra.mxu0 %v5000
    %5111 = vmatmul.bf16.gmra.mxu0 %v5062
    %v5112 = vpop.f32.mrf.mxu0
    %v5113 = vadd.f32 0.0, %v5112
    %v5114 = vpop.f32.mrf.mxu0
    %5115 = vdwg.mxu0
    %5116 = vmatpush.bf16.msra.mxu0 0
    %5117 = vmatpush.bf16.msra.mxu0 0
    %5118 = vmatpush.bf16.msra.mxu0 0
    %5119 = vmatpush.bf16.msra.mxu0 0
    %5120 = vmatpush.bf16.msra.mxu0 %v5025
    %5121 = vmatpush.bf16.msra.mxu0 %v5017
    %5122 = vmatpush.bf16.msra.mxu0 %v5009
    %5123 = vmatpush.bf16.msra.mxu0 %v5001
    %5124 = vmatmul.bf16.gmra.mxu0 %v5062
    %v5125 = vpop.f32.mrf.mxu0
    %v5126 = vadd.f32 0.0, %v5125
    %v5127 = vpop.f32.mrf.mxu0
    %5128 = vdwg.mxu0
    %5129 = vmatpush.bf16.msra.mxu0 0
    %5130 = vmatpush.bf16.msra.mxu0 0
    %5131 = vmatpush.bf16.msra.mxu0 0
    %5132 = vmatpush.bf16.msra.mxu0 0
    %5133 = vmatpush.bf16.msra.mxu0 %v5026
    %5134 = vmatpush.bf16.msra.mxu0 %v5018
    %5135 = vmatpush.bf16.msra.mxu0 %v5010
    %5136 = vmatpush.bf16.msra.mxu0 %v5002
    %5137 = vmatmul.bf16.gmra.mxu0 %v5062
    %v5138 = vpop.f32.mrf.mxu0
    %v5139 = vadd.f32 0.0, %v5138
    %v5140 = vpop.f32.mrf.mxu0
    %5141 = vdwg.mxu0
    %5142 = vmatpush.bf16.msra.mxu0 0
    %5143 = vmatpush.bf16.msra.mxu0 0
    %5144 = vmatpush.bf16.msra.mxu0 0
    %5145 = vmatpush.bf16.msra.mxu0 0
    %5146 = vmatpush.bf16.msra.mxu0 %v5027
    %5147 = vmatpush.bf16.msra.mxu0 %v5019
    %5148 = vmatpush.bf16.msra.mxu0 %v5011
    %5149 = vmatpush.bf16.msra.mxu0 %v5003
    %5150 = vmatmul.bf16.gmra.mxu0 %v5062
    %v5151 = vpop.f32.mrf.mxu0
    %v5152 = vadd.f32 0.0, %v5151
    %v5153 = vpop.f32.mrf.mxu0
    %5154 = vdwg.mxu0
    %5155 = vmatpush.bf16.msra.mxu0 0
    %5156 = vmatpush.bf16.msra.mxu0 0
    %5157 = vmatpush.bf16.msra.mxu0 0
    %5158 = vmatpush.bf16.msra.mxu0 0
    %5159 = vmatpush.bf16.msra.mxu0 %v5028
    %5160 = vmatpush.bf16.msra.mxu0 %v5020
    %5161 = vmatpush.bf16.msra.mxu0 %v5012
    %5162 = vmatpush.bf16.msra.mxu0 %v5004
    %5163 = vmatmul.bf16.gmra.mxu0 %v5062
    %v5164 = vpop.f32.mrf.mxu0
    %v5165 = vadd.f32 0.0, %v5164
    %v5166 = vpop.f32.mrf.mxu0
    %5167 = vdwg.mxu0
    %v5168 = vadd.f32 %v4857, %v5074
    %v5169 = vadd.f32 %v4858, %v5087
    %v5170 = vadd.f32 %v4859, %v5100
    %v5171 = vadd.f32 %v4860, %v5113
    %v5172 = vadd.f32 %v4861, %v5126
    %v5173 = vadd.f32 %v4862, %v5139
    %v5174 = vadd.f32 %v4863, %v5152
    %v5175 = vadd.f32 %v4864, %v5165
    %v5176 = vld [vmem:[#allocation3 + $0x600] sm:$0xff]
    %v5177 = vld [vmem:[#allocation3 + $0x608] sm:$0xff]
    %v5178 = vld [vmem:[#allocation3 + $0x610] sm:$0xff]
    %v5179 = vld [vmem:[#allocation3 + $0x618] sm:$0xff]
    %v5180 = vld [vmem:[#allocation3 + $0x620] sm:$0xff]
    %v5181 = vld [vmem:[#allocation3 + $0x628] sm:$0xff]
    %v5182 = vld [vmem:[#allocation3 + $0x630] sm:$0xff]
    %v5183 = vld [vmem:[#allocation3 + $0x638] sm:$0xff]
    %v5184 = vld [vmem:[#allocation3 + $0x640] sm:$0xff]
    %v5185 = vld [vmem:[#allocation3 + $0x648] sm:$0xff]
    %v5186 = vld [vmem:[#allocation3 + $0x650] sm:$0xff]
    %v5187 = vld [vmem:[#allocation3 + $0x658] sm:$0xff]
    %v5188 = vld [vmem:[#allocation3 + $0x660] sm:$0xff]
    %v5189 = vld [vmem:[#allocation3 + $0x668] sm:$0xff]
    %v5190 = vld [vmem:[#allocation3 + $0x670] sm:$0xff]
    %v5191 = vld [vmem:[#allocation3 + $0x678] sm:$0xff]
    %v5192 = vld [vmem:[#allocation3 + $0x680] sm:$0xff]
    %v5193 = vld [vmem:[#allocation3 + $0x688] sm:$0xff]
    %v5194 = vld [vmem:[#allocation3 + $0x690] sm:$0xff]
    %v5195 = vld [vmem:[#allocation3 + $0x698] sm:$0xff]
    %v5196 = vld [vmem:[#allocation3 + $0x6a0] sm:$0xff]
    %v5197 = vld [vmem:[#allocation3 + $0x6a8] sm:$0xff]
    %v5198 = vld [vmem:[#allocation3 + $0x6b0] sm:$0xff]
    %v5199 = vld [vmem:[#allocation3 + $0x6b8] sm:$0xff]
    %v5200 = vld [vmem:[#allocation3 + $0x6c0] sm:$0xff]
    %v5201 = vld [vmem:[#allocation3 + $0x6c8] sm:$0xff]
    %v5202 = vld [vmem:[#allocation3 + $0x6d0] sm:$0xff]
    %v5203 = vld [vmem:[#allocation3 + $0x6d8] sm:$0xff]
    %v5204 = vld [vmem:[#allocation3 + $0x6e0] sm:$0xff]
    %v5205 = vld [vmem:[#allocation3 + $0x6e8] sm:$0xff]
    %v5206 = vld [vmem:[#allocation3 + $0x6f0] sm:$0xff]
    %v5207 = vld [vmem:[#allocation3 + $0x6f8] sm:$0xff]
    %v5208 = vrot.slane %v4899, 2
    %v5241 = vunpack.c.l.b16 %v5176
    %v5242 = vunpack.c.h.b16 %v5176
    %v5243 = vunpack.c.l.b16 %v5177
    %v5244 = vunpack.c.h.b16 %v5177
    %v5245 = vunpack.c.l.b16 %v5178
    %v5246 = vunpack.c.h.b16 %v5178
    %v5247 = vunpack.c.l.b16 %v5179
    %v5248 = vunpack.c.h.b16 %v5179
    %v5249 = vunpack.c.l.b16 %v5180
    %v5250 = vunpack.c.h.b16 %v5180
    %v5251 = vunpack.c.l.b16 %v5181
    %v5252 = vunpack.c.h.b16 %v5181
    %v5253 = vunpack.c.l.b16 %v5182
    %v5254 = vunpack.c.h.b16 %v5182
    %v5255 = vunpack.c.l.b16 %v5183
    %v5256 = vunpack.c.h.b16 %v5183
    %v5257 = vunpack.c.l.b16 %v5184
    %v5258 = vunpack.c.h.b16 %v5184
    %v5259 = vunpack.c.l.b16 %v5185
    %v5260 = vunpack.c.h.b16 %v5185
    %v5261 = vunpack.c.l.b16 %v5186
    %v5262 = vunpack.c.h.b16 %v5186
    %v5263 = vunpack.c.l.b16 %v5187
    %v5264 = vunpack.c.h.b16 %v5187
    %v5265 = vunpack.c.l.b16 %v5188
    %v5266 = vunpack.c.h.b16 %v5188
    %v5267 = vunpack.c.l.b16 %v5189
    %v5268 = vunpack.c.h.b16 %v5189
    %v5269 = vunpack.c.l.b16 %v5190
    %v5270 = vunpack.c.h.b16 %v5190
    %v5271 = vunpack.c.l.b16 %v5191
    %v5272 = vunpack.c.h.b16 %v5191
    %v5273 = vunpack.c.l.b16 %v5192
    %v5274 = vunpack.c.h.b16 %v5192
    %v5275 = vunpack.c.l.b16 %v5193
    %v5276 = vunpack.c.h.b16 %v5193
    %v5277 = vunpack.c.l.b16 %v5194
    %v5278 = vunpack.c.h.b16 %v5194
    %v5279 = vunpack.c.l.b16 %v5195
    %v5280 = vunpack.c.h.b16 %v5195
    %v5281 = vunpack.c.l.b16 %v5196
    %v5282 = vunpack.c.h.b16 %v5196
    %v5283 = vunpack.c.l.b16 %v5197
    %v5284 = vunpack.c.h.b16 %v5197
    %v5285 = vunpack.c.l.b16 %v5198
    %v5286 = vunpack.c.h.b16 %v5198
    %v5287 = vunpack.c.l.b16 %v5199
    %v5288 = vunpack.c.h.b16 %v5199
    %v5289 = vunpack.c.l.b16 %v5200
    %v5290 = vunpack.c.h.b16 %v5200
    %v5291 = vunpack.c.l.b16 %v5201
    %v5292 = vunpack.c.h.b16 %v5201
    %v5293 = vunpack.c.l.b16 %v5202
    %v5294 = vunpack.c.h.b16 %v5202
    %v5295 = vunpack.c.l.b16 %v5203
    %v5296 = vunpack.c.h.b16 %v5203
    %v5297 = vunpack.c.l.b16 %v5204
    %v5298 = vunpack.c.h.b16 %v5204
    %v5299 = vunpack.c.l.b16 %v5205
    %v5300 = vunpack.c.h.b16 %v5205
    %v5301 = vunpack.c.l.b16 %v5206
    %v5302 = vunpack.c.h.b16 %v5206
    %v5303 = vunpack.c.l.b16 %v5207
    %v5304 = vunpack.c.h.b16 %v5207
    %v5305 = vpack.c.b16 %v5249, %v5241
    %v5306 = vpack.c.b16 %v5250, %v5242
    %v5307 = vpack.c.b16 %v5251, %v5243
    %v5308 = vpack.c.b16 %v5252, %v5244
    %v5309 = vpack.c.b16 %v5253, %v5245
    %v5310 = vpack.c.b16 %v5254, %v5246
    %v5311 = vpack.c.b16 %v5255, %v5247
    %v5312 = vpack.c.b16 %v5256, %v5248
    %v5313 = vpack.c.b16 %v5265, %v5257
    %v5314 = vpack.c.b16 %v5266, %v5258
    %v5315 = vpack.c.b16 %v5267, %v5259
    %v5316 = vpack.c.b16 %v5268, %v5260
    %v5317 = vpack.c.b16 %v5269, %v5261
    %v5318 = vpack.c.b16 %v5270, %v5262
    %v5319 = vpack.c.b16 %v5271, %v5263
    %v5320 = vpack.c.b16 %v5272, %v5264
    %v5321 = vpack.c.b16 %v5281, %v5273
    %v5322 = vpack.c.b16 %v5282, %v5274
    %v5323 = vpack.c.b16 %v5283, %v5275
    %v5324 = vpack.c.b16 %v5284, %v5276
    %v5325 = vpack.c.b16 %v5285, %v5277
    %v5326 = vpack.c.b16 %v5286, %v5278
    %v5327 = vpack.c.b16 %v5287, %v5279
    %v5328 = vpack.c.b16 %v5288, %v5280
    %v5329 = vpack.c.b16 %v5297, %v5289
    %v5330 = vpack.c.b16 %v5298, %v5290
    %v5331 = vpack.c.b16 %v5299, %v5291
    %v5332 = vpack.c.b16 %v5300, %v5292
    %v5333 = vpack.c.b16 %v5301, %v5293
    %v5334 = vpack.c.b16 %v5302, %v5294
    %v5335 = vpack.c.b16 %v5303, %v5295
    %v5336 = vpack.c.b16 %v5304, %v5296
    %v5370 = vsel %vm337, %v5208, 0
    %5372 = vmatpush.bf16.msra.mxu0 0
    %5373 = vmatpush.bf16.msra.mxu0 0
    %5374 = vmatpush.bf16.msra.mxu0 0
    %5375 = vmatpush.bf16.msra.mxu0 0
    %5376 = vmatpush.bf16.msra.mxu0 %v5329
    %5377 = vmatpush.bf16.msra.mxu0 %v5321
    %5378 = vmatpush.bf16.msra.mxu0 %v5313
    %5379 = vmatpush.bf16.msra.mxu0 %v5305
    %5380 = vmatmul.bf16.gmra.mxu0 %v5370
    %v5381 = vpop.f32.mrf.mxu0
    %v5382 = vadd.f32 0.0, %v5381
    %v5383 = vpop.f32.mrf.mxu0
    %5384 = vdwg.mxu0
    %5385 = vmatpush.bf16.msra.mxu0 0
    %5386 = vmatpush.bf16.msra.mxu0 0
    %5387 = vmatpush.bf16.msra.mxu0 0
    %5388 = vmatpush.bf16.msra.mxu0 0
    %5389 = vmatpush.bf16.msra.mxu0 %v5330
    %5390 = vmatpush.bf16.msra.mxu0 %v5322
    %5391 = vmatpush.bf16.msra.mxu0 %v5314
    %5392 = vmatpush.bf16.msra.mxu0 %v5306
    %5393 = vmatmul.bf16.gmra.mxu0 %v5370
    %v5394 = vpop.f32.mrf.mxu0
    %v5395 = vadd.f32 0.0, %v5394
    %v5396 = vpop.f32.mrf.mxu0
    %5397 = vdwg.mxu0
    %5398 = vmatpush.bf16.msra.mxu0 0
    %5399 = vmatpush.bf16.msra.mxu0 0
    %5400 = vmatpush.bf16.msra.mxu0 0
    %5401 = vmatpush.bf16.msra.mxu0 0
    %5402 = vmatpush.bf16.msra.mxu0 %v5331
    %5403 = vmatpush.bf16.msra.mxu0 %v5323
    %5404 = vmatpush.bf16.msra.mxu0 %v5315
    %5405 = vmatpush.bf16.msra.mxu0 %v5307
    %5406 = vmatmul.bf16.gmra.mxu0 %v5370
    %v5407 = vpop.f32.mrf.mxu0
    %v5408 = vadd.f32 0.0, %v5407
    %v5409 = vpop.f32.mrf.mxu0
    %5410 = vdwg.mxu0
    %5411 = vmatpush.bf16.msra.mxu0 0
    %5412 = vmatpush.bf16.msra.mxu0 0
    %5413 = vmatpush.bf16.msra.mxu0 0
    %5414 = vmatpush.bf16.msra.mxu0 0
    %5415 = vmatpush.bf16.msra.mxu0 %v5332
    %5416 = vmatpush.bf16.msra.mxu0 %v5324
    %5417 = vmatpush.bf16.msra.mxu0 %v5316
    %5418 = vmatpush.bf16.msra.mxu0 %v5308
    %5419 = vmatmul.bf16.gmra.mxu0 %v5370
    %v5420 = vpop.f32.mrf.mxu0
    %v5421 = vadd.f32 0.0, %v5420
    %v5422 = vpop.f32.mrf.mxu0
    %5423 = vdwg.mxu0
    %5424 = vmatpush.bf16.msra.mxu0 0
    %5425 = vmatpush.bf16.msra.mxu0 0
    %5426 = vmatpush.bf16.msra.mxu0 0
    %5427 = vmatpush.bf16.msra.mxu0 0
    %5428 = vmatpush.bf16.msra.mxu0 %v5333
    %5429 = vmatpush.bf16.msra.mxu0 %v5325
    %5430 = vmatpush.bf16.msra.mxu0 %v5317
    %5431 = vmatpush.bf16.msra.mxu0 %v5309
    %5432 = vmatmul.bf16.gmra.mxu0 %v5370
    %v5433 = vpop.f32.mrf.mxu0
    %v5434 = vadd.f32 0.0, %v5433
    %v5435 = vpop.f32.mrf.mxu0
    %5436 = vdwg.mxu0
    %5437 = vmatpush.bf16.msra.mxu0 0
    %5438 = vmatpush.bf16.msra.mxu0 0
    %5439 = vmatpush.bf16.msra.mxu0 0
    %5440 = vmatpush.bf16.msra.mxu0 0
    %5441 = vmatpush.bf16.msra.mxu0 %v5334
    %5442 = vmatpush.bf16.msra.mxu0 %v5326
    %5443 = vmatpush.bf16.msra.mxu0 %v5318
    %5444 = vmatpush.bf16.msra.mxu0 %v5310
    %5445 = vmatmul.bf16.gmra.mxu0 %v5370
    %v5446 = vpop.f32.mrf.mxu0
    %v5447 = vadd.f32 0.0, %v5446
    %v5448 = vpop.f32.mrf.mxu0
    %5449 = vdwg.mxu0
    %5450 = vmatpush.bf16.msra.mxu0 0
    %5451 = vmatpush.bf16.msra.mxu0 0
    %5452 = vmatpush.bf16.msra.mxu0 0
    %5453 = vmatpush.bf16.msra.mxu0 0
    %5454 = vmatpush.bf16.msra.mxu0 %v5335
    %5455 = vmatpush.bf16.msra.mxu0 %v5327
    %5456 = vmatpush.bf16.msra.mxu0 %v5319
    %5457 = vmatpush.bf16.msra.mxu0 %v5311
    %5458 = vmatmul.bf16.gmra.mxu0 %v5370
    %v5459 = vpop.f32.mrf.mxu0
    %v5460 = vadd.f32 0.0, %v5459
    %v5461 = vpop.f32.mrf.mxu0
    %5462 = vdwg.mxu0
    %5463 = vmatpush.bf16.msra.mxu0 0
    %5464 = vmatpush.bf16.msra.mxu0 0
    %5465 = vmatpush.bf16.msra.mxu0 0
    %5466 = vmatpush.bf16.msra.mxu0 0
    %5467 = vmatpush.bf16.msra.mxu0 %v5336
    %5468 = vmatpush.bf16.msra.mxu0 %v5328
    %5469 = vmatpush.bf16.msra.mxu0 %v5320
    %5470 = vmatpush.bf16.msra.mxu0 %v5312
    %5471 = vmatmul.bf16.gmra.mxu0 %v5370
    %v5472 = vpop.f32.mrf.mxu0
    %v5473 = vadd.f32 0.0, %v5472
    %v5474 = vpop.f32.mrf.mxu0
    %5475 = vdwg.mxu0
    %v5476 = vadd.f32 %v5168, %v5382
    %v5477 = vadd.f32 %v5169, %v5395
    %v5478 = vadd.f32 %v5170, %v5408
    %v5479 = vadd.f32 %v5171, %v5421
    %v5480 = vadd.f32 %v5172, %v5434
    %v5481 = vadd.f32 %v5173, %v5447
    %v5482 = vadd.f32 %v5174, %v5460
    %v5483 = vadd.f32 %v5175, %v5473
    %v5484 = vld [vmem:[#allocation3 + $0x700] sm:$0xff]
    %v5485 = vld [vmem:[#allocation3 + $0x708] sm:$0xff]
    %v5486 = vld [vmem:[#allocation3 + $0x710] sm:$0xff]
    %v5487 = vld [vmem:[#allocation3 + $0x718] sm:$0xff]
    %v5488 = vld [vmem:[#allocation3 + $0x720] sm:$0xff]
    %v5489 = vld [vmem:[#allocation3 + $0x728] sm:$0xff]
    %v5490 = vld [vmem:[#allocation3 + $0x730] sm:$0xff]
    %v5491 = vld [vmem:[#allocation3 + $0x738] sm:$0xff]
    %v5492 = vld [vmem:[#allocation3 + $0x740] sm:$0xff]
    %v5493 = vld [vmem:[#allocation3 + $0x748] sm:$0xff]
    %v5494 = vld [vmem:[#allocation3 + $0x750] sm:$0xff]
    %v5495 = vld [vmem:[#allocation3 + $0x758] sm:$0xff]
    %v5496 = vld [vmem:[#allocation3 + $0x760] sm:$0xff]
    %v5497 = vld [vmem:[#allocation3 + $0x768] sm:$0xff]
    %v5498 = vld [vmem:[#allocation3 + $0x770] sm:$0xff]
    %v5499 = vld [vmem:[#allocation3 + $0x778] sm:$0xff]
    %v5500 = vld [vmem:[#allocation3 + $0x780] sm:$0xff]
    %v5501 = vld [vmem:[#allocation3 + $0x788] sm:$0xff]
    %v5502 = vld [vmem:[#allocation3 + $0x790] sm:$0xff]
    %v5503 = vld [vmem:[#allocation3 + $0x798] sm:$0xff]
    %v5504 = vld [vmem:[#allocation3 + $0x7a0] sm:$0xff]
    %v5505 = vld [vmem:[#allocation3 + $0x7a8] sm:$0xff]
    %v5506 = vld [vmem:[#allocation3 + $0x7b0] sm:$0xff]
    %v5507 = vld [vmem:[#allocation3 + $0x7b8] sm:$0xff]
    %v5508 = vld [vmem:[#allocation3 + $0x7c0] sm:$0xff]
    %v5509 = vld [vmem:[#allocation3 + $0x7c8] sm:$0xff]
    %v5510 = vld [vmem:[#allocation3 + $0x7d0] sm:$0xff]
    %v5511 = vld [vmem:[#allocation3 + $0x7d8] sm:$0xff]
    %v5512 = vld [vmem:[#allocation3 + $0x7e0] sm:$0xff]
    %v5513 = vld [vmem:[#allocation3 + $0x7e8] sm:$0xff]
    %v5514 = vld [vmem:[#allocation3 + $0x7f0] sm:$0xff]
    %v5515 = vld [vmem:[#allocation3 + $0x7f8] sm:$0xff]
    %v5516 = vrot.slane %v4899, 3
    %v5549 = vunpack.c.l.b16 %v5484
    %v5550 = vunpack.c.h.b16 %v5484
    %v5551 = vunpack.c.l.b16 %v5485
    %v5552 = vunpack.c.h.b16 %v5485
    %v5553 = vunpack.c.l.b16 %v5486
    %v5554 = vunpack.c.h.b16 %v5486
    %v5555 = vunpack.c.l.b16 %v5487
    %v5556 = vunpack.c.h.b16 %v5487
    %v5557 = vunpack.c.l.b16 %v5488
    %v5558 = vunpack.c.h.b16 %v5488
    %v5559 = vunpack.c.l.b16 %v5489
    %v5560 = vunpack.c.h.b16 %v5489
    %v5561 = vunpack.c.l.b16 %v5490
    %v5562 = vunpack.c.h.b16 %v5490
    %v5563 = vunpack.c.l.b16 %v5491
    %v5564 = vunpack.c.h.b16 %v5491
    %v5565 = vunpack.c.l.b16 %v5492
    %v5566 = vunpack.c.h.b16 %v5492
    %v5567 = vunpack.c.l.b16 %v5493
    %v5568 = vunpack.c.h.b16 %v5493
    %v5569 = vunpack.c.l.b16 %v5494
    %v5570 = vunpack.c.h.b16 %v5494
    %v5571 = vunpack.c.l.b16 %v5495
    %v5572 = vunpack.c.h.b16 %v5495
    %v5573 = vunpack.c.l.b16 %v5496
    %v5574 = vunpack.c.h.b16 %v5496
    %v5575 = vunpack.c.l.b16 %v5497
    %v5576 = vunpack.c.h.b16 %v5497
    %v5577 = vunpack.c.l.b16 %v5498
    %v5578 = vunpack.c.h.b16 %v5498
    %v5579 = vunpack.c.l.b16 %v5499
    %v5580 = vunpack.c.h.b16 %v5499
    %v5581 = vunpack.c.l.b16 %v5500
    %v5582 = vunpack.c.h.b16 %v5500
    %v5583 = vunpack.c.l.b16 %v5501
    %v5584 = vunpack.c.h.b16 %v5501
    %v5585 = vunpack.c.l.b16 %v5502
    %v5586 = vunpack.c.h.b16 %v5502
    %v5587 = vunpack.c.l.b16 %v5503
    %v5588 = vunpack.c.h.b16 %v5503
    %v5589 = vunpack.c.l.b16 %v5504
    %v5590 = vunpack.c.h.b16 %v5504
    %v5591 = vunpack.c.l.b16 %v5505
    %v5592 = vunpack.c.h.b16 %v5505
    %v5593 = vunpack.c.l.b16 %v5506
    %v5594 = vunpack.c.h.b16 %v5506
    %v5595 = vunpack.c.l.b16 %v5507
    %v5596 = vunpack.c.h.b16 %v5507
    %v5597 = vunpack.c.l.b16 %v5508
    %v5598 = vunpack.c.h.b16 %v5508
    %v5599 = vunpack.c.l.b16 %v5509
    %v5600 = vunpack.c.h.b16 %v5509
    %v5601 = vunpack.c.l.b16 %v5510
    %v5602 = vunpack.c.h.b16 %v5510
    %v5603 = vunpack.c.l.b16 %v5511
    %v5604 = vunpack.c.h.b16 %v5511
    %v5605 = vunpack.c.l.b16 %v5512
    %v5606 = vunpack.c.h.b16 %v5512
    %v5607 = vunpack.c.l.b16 %v5513
    %v5608 = vunpack.c.h.b16 %v5513
    %v5609 = vunpack.c.l.b16 %v5514
    %v5610 = vunpack.c.h.b16 %v5514
    %v5611 = vunpack.c.l.b16 %v5515
    %v5612 = vunpack.c.h.b16 %v5515
    %v5613 = vpack.c.b16 %v5557, %v5549
    %v5614 = vpack.c.b16 %v5558, %v5550
    %v5615 = vpack.c.b16 %v5559, %v5551
    %v5616 = vpack.c.b16 %v5560, %v5552
    %v5617 = vpack.c.b16 %v5561, %v5553
    %v5618 = vpack.c.b16 %v5562, %v5554
    %v5619 = vpack.c.b16 %v5563, %v5555
    %v5620 = vpack.c.b16 %v5564, %v5556
    %v5621 = vpack.c.b16 %v5573, %v5565
    %v5622 = vpack.c.b16 %v5574, %v5566
    %v5623 = vpack.c.b16 %v5575, %v5567
    %v5624 = vpack.c.b16 %v5576, %v5568
    %v5625 = vpack.c.b16 %v5577, %v5569
    %v5626 = vpack.c.b16 %v5578, %v5570
    %v5627 = vpack.c.b16 %v5579, %v5571
    %v5628 = vpack.c.b16 %v5580, %v5572
    %v5629 = vpack.c.b16 %v5589, %v5581
    %v5630 = vpack.c.b16 %v5590, %v5582
    %v5631 = vpack.c.b16 %v5591, %v5583
    %v5632 = vpack.c.b16 %v5592, %v5584
    %v5633 = vpack.c.b16 %v5593, %v5585
    %v5634 = vpack.c.b16 %v5594, %v5586
    %v5635 = vpack.c.b16 %v5595, %v5587
    %v5636 = vpack.c.b16 %v5596, %v5588
    %v5637 = vpack.c.b16 %v5605, %v5597
    %v5638 = vpack.c.b16 %v5606, %v5598
    %v5639 = vpack.c.b16 %v5607, %v5599
    %v5640 = vpack.c.b16 %v5608, %v5600
    %v5641 = vpack.c.b16 %v5609, %v5601
    %v5642 = vpack.c.b16 %v5610, %v5602
    %v5643 = vpack.c.b16 %v5611, %v5603
    %v5644 = vpack.c.b16 %v5612, %v5604
    %v5678 = vsel %vm337, %v5516, 0
    %5680 = vmatpush.bf16.msra.mxu0 0
    %5681 = vmatpush.bf16.msra.mxu0 0
    %5682 = vmatpush.bf16.msra.mxu0 0
    %5683 = vmatpush.bf16.msra.mxu0 0
    %5684 = vmatpush.bf16.msra.mxu0 %v5637
    %5685 = vmatpush.bf16.msra.mxu0 %v5629
    %5686 = vmatpush.bf16.msra.mxu0 %v5621
    %5687 = vmatpush.bf16.msra.mxu0 %v5613
    %5688 = vmatmul.bf16.gmra.mxu0 %v5678
    %v5689 = vpop.f32.mrf.mxu0
    %v5690 = vadd.f32 0.0, %v5689
    %v5691 = vpop.f32.mrf.mxu0
    %5692 = vdwg.mxu0
    %5693 = vmatpush.bf16.msra.mxu0 0
    %5694 = vmatpush.bf16.msra.mxu0 0
    %5695 = vmatpush.bf16.msra.mxu0 0
    %5696 = vmatpush.bf16.msra.mxu0 0
    %5697 = vmatpush.bf16.msra.mxu0 %v5638
    %5698 = vmatpush.bf16.msra.mxu0 %v5630
    %5699 = vmatpush.bf16.msra.mxu0 %v5622
    %5700 = vmatpush.bf16.msra.mxu0 %v5614
    %5701 = vmatmul.bf16.gmra.mxu0 %v5678
    %v5702 = vpop.f32.mrf.mxu0
    %v5703 = vadd.f32 0.0, %v5702
    %v5704 = vpop.f32.mrf.mxu0
    %5705 = vdwg.mxu0
    %5706 = vmatpush.bf16.msra.mxu0 0
    %5707 = vmatpush.bf16.msra.mxu0 0
    %5708 = vmatpush.bf16.msra.mxu0 0
    %5709 = vmatpush.bf16.msra.mxu0 0
    %5710 = vmatpush.bf16.msra.mxu0 %v5639
    %5711 = vmatpush.bf16.msra.mxu0 %v5631
    %5712 = vmatpush.bf16.msra.mxu0 %v5623
    %5713 = vmatpush.bf16.msra.mxu0 %v5615
    %5714 = vmatmul.bf16.gmra.mxu0 %v5678
    %v5715 = vpop.f32.mrf.mxu0
    %v5716 = vadd.f32 0.0, %v5715
    %v5717 = vpop.f32.mrf.mxu0
    %5718 = vdwg.mxu0
    %5719 = vmatpush.bf16.msra.mxu0 0
    %5720 = vmatpush.bf16.msra.mxu0 0
    %5721 = vmatpush.bf16.msra.mxu0 0
    %5722 = vmatpush.bf16.msra.mxu0 0
    %5723 = vmatpush.bf16.msra.mxu0 %v5640
    %5724 = vmatpush.bf16.msra.mxu0 %v5632
    %5725 = vmatpush.bf16.msra.mxu0 %v5624
    %5726 = vmatpush.bf16.msra.mxu0 %v5616
    %5727 = vmatmul.bf16.gmra.mxu0 %v5678
    %v5728 = vpop.f32.mrf.mxu0
    %v5729 = vadd.f32 0.0, %v5728
    %v5730 = vpop.f32.mrf.mxu0
    %5731 = vdwg.mxu0
    %5732 = vmatpush.bf16.msra.mxu0 0
    %5733 = vmatpush.bf16.msra.mxu0 0
    %5734 = vmatpush.bf16.msra.mxu0 0
    %5735 = vmatpush.bf16.msra.mxu0 0
    %5736 = vmatpush.bf16.msra.mxu0 %v5641
    %5737 = vmatpush.bf16.msra.mxu0 %v5633
    %5738 = vmatpush.bf16.msra.mxu0 %v5625
    %5739 = vmatpush.bf16.msra.mxu0 %v5617
    %5740 = vmatmul.bf16.gmra.mxu0 %v5678
    %v5741 = vpop.f32.mrf.mxu0
    %v5742 = vadd.f32 0.0, %v5741
    %v5743 = vpop.f32.mrf.mxu0
    %5744 = vdwg.mxu0
    %5745 = vmatpush.bf16.msra.mxu0 0
    %5746 = vmatpush.bf16.msra.mxu0 0
    %5747 = vmatpush.bf16.msra.mxu0 0
    %5748 = vmatpush.bf16.msra.mxu0 0
    %5749 = vmatpush.bf16.msra.mxu0 %v5642
    %5750 = vmatpush.bf16.msra.mxu0 %v5634
    %5751 = vmatpush.bf16.msra.mxu0 %v5626
    %5752 = vmatpush.bf16.msra.mxu0 %v5618
    %5753 = vmatmul.bf16.gmra.mxu0 %v5678
    %v5754 = vpop.f32.mrf.mxu0
    %v5755 = vadd.f32 0.0, %v5754
    %v5756 = vpop.f32.mrf.mxu0
    %5757 = vdwg.mxu0
    %5758 = vmatpush.bf16.msra.mxu0 0
    %5759 = vmatpush.bf16.msra.mxu0 0
    %5760 = vmatpush.bf16.msra.mxu0 0
    %5761 = vmatpush.bf16.msra.mxu0 0
    %5762 = vmatpush.bf16.msra.mxu0 %v5643
    %5763 = vmatpush.bf16.msra.mxu0 %v5635
    %5764 = vmatpush.bf16.msra.mxu0 %v5627
    %5765 = vmatpush.bf16.msra.mxu0 %v5619
    %5766 = vmatmul.bf16.gmra.mxu0 %v5678
    %v5767 = vpop.f32.mrf.mxu0
    %v5768 = vadd.f32 0.0, %v5767
    %v5769 = vpop.f32.mrf.mxu0
    %5770 = vdwg.mxu0
    %5771 = vmatpush.bf16.msra.mxu0 0
    %5772 = vmatpush.bf16.msra.mxu0 0
    %5773 = vmatpush.bf16.msra.mxu0 0
    %5774 = vmatpush.bf16.msra.mxu0 0
    %5775 = vmatpush.bf16.msra.mxu0 %v5644
    %5776 = vmatpush.bf16.msra.mxu0 %v5636
    %5777 = vmatpush.bf16.msra.mxu0 %v5628
    %5778 = vmatpush.bf16.msra.mxu0 %v5620
    %5779 = vmatmul.bf16.gmra.mxu0 %v5678
    %v5780 = vpop.f32.mrf.mxu0
    %v5781 = vadd.f32 0.0, %v5780
    %v5782 = vpop.f32.mrf.mxu0
    %5783 = vdwg.mxu0
    %v5784 = vadd.f32 %v5476, %v5690
    %v5785 = vadd.f32 %v5477, %v5703
    %v5786 = vadd.f32 %v5478, %v5716
    %v5787 = vadd.f32 %v5479, %v5729
    %v5788 = vadd.f32 %v5480, %v5742
    %v5789 = vadd.f32 %v5481, %v5755
    %v5790 = vadd.f32 %v5482, %v5768
    %v5791 = vadd.f32 %v5483, %v5781
    %vm5792 = vcmp.ge.f32.partialorder %v5784, 0.0
    %vm5793 = vcmp.ge.f32.partialorder %v5785, 0.0
    %vm5794 = vcmp.ge.f32.partialorder %v5786, 0.0
    %vm5795 = vcmp.ge.f32.partialorder %v5787, 0.0
    %vm5796 = vcmp.ge.f32.partialorder %v5788, 0.0
    %vm5797 = vcmp.ge.f32.partialorder %v5789, 0.0
    %vm5798 = vcmp.ge.f32.partialorder %v5790, 0.0
    %vm5799 = vcmp.ge.f32.partialorder %v5791, 0.0
    %v5800 = vmul.f32 %v5784, 0.1
    %v5801 = vmul.f32 %v5785, 0.1
    %v5802 = vmul.f32 %v5786, 0.1
    %v5803 = vmul.f32 %v5787, 0.1
    %v5804 = vmul.f32 %v5788, 0.1
    %v5805 = vmul.f32 %v5789, 0.1
    %v5806 = vmul.f32 %v5790, 0.1
    %v5807 = vmul.f32 %v5791, 0.1
    %v5808 = vsel %vm5792, %v5784, %v5800
    %v5809 = vsel %vm5793, %v5785, %v5801
    %v5810 = vsel %vm5794, %v5786, %v5802
    %v5811 = vsel %vm5795, %v5787, %v5803
    %v5812 = vsel %vm5796, %v5788, %v5804
    %v5813 = vsel %vm5797, %v5789, %v5805
    %v5814 = vsel %vm5798, %v5790, %v5806
    %v5815 = vsel %vm5799, %v5791, %v5807
    %v5824 = vrot.slane %v5809, 6
    %v5825 = vrot.slane %v5810, 4
    %v5826 = vrot.slane %v5811, 2
    %v5827 = vrot.slane %v5813, 6
    %v5828 = vrot.slane %v5814, 4
    %v5829 = vrot.slane %v5815, 2
    %vm5830 = vcmask 1041408
    %v5831 = vsel %vm5830, %v5808, %v5824
    %vm5832 = vcmask 1045508
    %v5833 = vsel %vm5832, %v5825, %v5826
    %vm5834 = vcmask 1043456
    %v5835 = vsel %vm5834, %v5831, %v5833
    %v5836 = vsel %vm5830, %v5812, %v5827
    %v5837 = vsel %vm5832, %v5828, %v5829
    %v5838 = vsel %vm5834, %v5836, %v5837
    %5841 = vst [vmem:[#allocation16] sm:$0xff] %v5835
    %5842 = vst [vmem:[#allocation16 + $0x8] sm:$0xff] %v5838
    %v5843 = vld [vmem:[#allocation15] sm:$0xff]
    %v5845 = vperm.slane %v5843, 0
    %v5846 = vperm.slane %v5843, 1
    %v5847 = vperm.slane %v5843, 2
    %v5848 = vperm.slane %v5843, 3
    %v5849 = vperm.slane %v5843, 4
    %v5850 = vperm.slane %v5843, 5
    %v5851 = vperm.slane %v5843, 6
    %v5852 = vperm.slane %v5843, 7
    %v5861 = vmul.f32 %v5808, %v5845
    %v5862 = vmul.f32 %v5809, %v5846
    %v5863 = vmul.f32 %v5810, %v5847
    %v5864 = vmul.f32 %v5811, %v5848
    %v5865 = vmul.f32 %v5812, %v5849
    %v5866 = vmul.f32 %v5813, %v5850
    %v5867 = vmul.f32 %v5814, %v5851
    %v5868 = vmul.f32 %v5815, %v5852
    %v5869 = vsel %vm5830, %v5861, 0.0
    %v5870 = vsel %vm5830, %v5862, 0.0
    %v5871 = vadd.f32 %v5869, %v5870
    %v5872 = vsel %vm5830, %v5863, 0.0
    %v5873 = vadd.f32 %v5871, %v5872
    %v5874 = vsel %vm5830, %v5864, 0.0
    %v5875 = vadd.f32 %v5873, %v5874
    %v5876 = vsel %vm5830, %v5865, 0.0
    %v5877 = vadd.f32 %v5875, %v5876
    %v5878 = vsel %vm5830, %v5866, 0.0
    %v5879 = vadd.f32 %v5877, %v5878
    %v5880 = vsel %vm5830, %v5867, 0.0
    %v5881 = vadd.f32 %v5879, %v5880
    %v5882 = vsel %vm5830, %v5868, 0.0
    %v5883 = vadd.f32 %v5881, %v5882
    %5884 = vadd.xlane.f32.xlu0 %v5883
    %v5885 = vpop.xlane.xlu0 %5884
    %v5886 = vld [vmem:[#allocation6] sm:$0x1]
    %v5888 = vperm.slane %v5886, 0
    %v5890 = vadd.f32 %v5885, %v5888
    %vm5891 = vcmask 1024
    %5892 = vst.msk [vmem:[%s13] sm:$0x3] %vm5891, %v5890
    // Predicated region
    $region74: #{netd_forward.1} parent=1 // pred_check
      _
    $region75: #{netd_forward.1} parent=1 // pred_check_branch
      %5894 = sbr.rel (0) target = $region77
    $region76: #{netd_forward.1} parent=1 // pred_region
      _
    $region77: #{netd_forward.1} parent=1 // pred_fallthru
      _
    // Predicated region
    $region78: #{netd_forward.1} parent=1 // pred_check
      _
    $region79: #{netd_forward.1} parent=1 // pred_check_branch
      %5896 = sbr.rel (0) target = $region81
    $region80: #{netd_forward.1} parent=1 // pred_region
      %5898 = vsyncadd [#allocation9], 0
      %s5900 = sshll.u32 [#allocation16], 4
      %s5901 = int_to_ptr.vmem [resolvable:$true] %s5900
      %s5902 = sshll.u32 %s14, 4
      %s5903 = int_to_ptr.hbm [resolvable:$true] %s5902
      %5905 = dma.vmem_to_hbm [thread:$0]  %s5901, 256, %s5903, [#allocation9]
    $region81: #{netd_forward.1} parent=1 // pred_fallthru
      _
    // Predicated region
    $region82: #{netd_forward.1} parent=1 // pred_check
      _
    $region83: #{netd_forward.1} parent=1 // pred_check_branch
      %5907 = sbr.rel (0) target = $region85
    $region84: #{netd_forward.1} parent=1 // pred_region
      _
    $region85: #{netd_forward.1} parent=1 // pred_fallthru
      _
    // Predicated region
    $region86: #{netd_forward.1} parent=1 // pred_check
      _
    $region87: #{netd_forward.1} parent=1 // pred_check_branch
      %5909 = sbr.rel (0) target = $region89
    $region88: #{netd_forward.1} parent=1 // pred_region
      %5911 = dma.done [#allocation9], 256
    $region89: #{netd_forward.1} parent=1 // pred_fallthru
      _
    %5912 = vsyncpa [#allocation8], 1
    %5913 = vsyncpa [#allocation11], 1
    %5914 = vsyncpa [#allocation14], 1
    %5915 = vsyncpa [#allocation9], 1
  %5916 = vsyncmov [#allocation5]
  %s5917 = vpop.sfrf %5916
  %p5918 = scmp.eq.s32.totalorder %s5917, 0
  %p5919 = pneg %p5918
  %5921 = shalt.err (%p5919)
  %s5922 = scalar_lea.sflag [#allocation5], 1
  %5923 = vsyncmov %s5922
  %s5924 = vpop.sfrf %5923
  %p5925 = scmp.eq.s32.totalorder %s5924, 0
  %p5926 = pneg %p5925
  %5928 = shalt.err (%p5926)

</llo_original>
